<compile_context>
chip_gen: v5e
topology: v5e:2x2
jax: 0.10.0
libtpu: 0.0.40
codegen_flags: <defaults>
</compile_context>

<pallas_src>
import jax
import jax.numpy as jnp
from jax.experimental import pallas as pl
from jax.experimental.pallas import tpu as pltpu

BN_EPS = 1e-5  # PyTorch nn.BatchNorm2d default


def _round_up(x, m):
    return ((x + m - 1) // m) * m


def _pick_tile(n, tm):
    """Choose the sample-block (lane) size and padded sample count.

    Guarantees the block's lane extent is either the full padded extent
    (single block) or a multiple of 128, and prefers >= 2 grid blocks so the
    v7x megacore can shard the "parallel" axis.
    """
    LANE = 128
    if n <= 2 * LANE:
        t = _round_up(n, 8)          # one full-extent block (block dim == array dim)
        return t, t
    cap = max(LANE, (min(tm, _round_up(n, LANE)) // LANE) * LANE)
    while _round_up(n, cap) // cap < 2 and cap > LANE:
        cap = max(LANE, ((cap // 2) // LANE) * LANE)
    return cap, _round_up(n, cap)


def _encoder_vision_kernel(x_ref, w1_ref, b1_ref, w2_ref, b2_ref, w3_ref, b3_ref,
                           out_ref, h2_ref):
    """One grid step processes a block of TM samples (feature-major layout).

    x_ref : (P, C_in, TM) bf16  activations, samples on the lane axis
    w1_ref: (C1, C_in)    bf16  conv1 weight with BN1 folded in
    b1_ref: (C1, 1)       f32   conv1+BN1 folded bias
    w2_ref: (C2, C1)      bf16  conv2 weight with BN2 folded in
    b2_ref: (C2, 1)       f32   conv2+BN2 folded bias
    w3_ref: (demb, P*C2)  bf16  Linear weight regrouped to [p-major, c] K order
    b3_ref: (demb, 1)     f32   Linear bias
    out_ref:(demb, TM)    f32
    h2_ref: (P*C2, TM)    bf16  VMEM scratch holding all per-position h2 blocks
    """
    P = x_ref.shape[0]
    C2 = w2_ref.shape[0]

    w1 = w1_ref[...]
    w2 = w2_ref[...]
    b1 = b1_ref[...]          # (C1, 1) -> VPU broadcast over lanes
    b2 = b2_ref[...]

    # Static unroll over spatial positions (P is small, e.g. 16): conv1+conv2
    # per position, dense store of h2 into the wide-K scratch.
    for p in range(P):
        xp = x_ref[p]                                                        # (C_in, TM)
        h1 = jnp.maximum(
            jnp.dot(w1, xp, preferred_element_type=jnp.float32) + b1, 0.0)   # (C1, TM)
        h2 = jnp.maximum(
            jnp.dot(w2, h1.astype(w2.dtype),
                    preferred_element_type=jnp.float32) + b2, 0.0)           # (C2, TM)
        h2_ref[p * C2:(p + 1) * C2, :] = h2.astype(h2_ref.dtype)

    # Final Linear as one wide-K matmul: (demb, P*C2) @ (P*C2, TM).
    out_ref[...] = (jnp.dot(w3_ref[...], h2_ref[...],
                            preferred_element_type=jnp.float32)
                    + b3_ref[...]).astype(out_ref.dtype)


def encoder_vision_forward(vis_feats,
                           conv1_w, conv1_b, bn1_gamma, bn1_beta, bn1_mean, bn1_var,
                           conv2_w, conv2_b, bn2_gamma, bn2_beta, bn2_mean, bn2_var,
                           lin_w, lin_b,
                           *, tm=1024, compute_dtype=jnp.bfloat16):
    """vis_feats: [B, T, C_in, H, W] float32 -> [B, T, demb] float32."""
    B, T, C_in, H, W = vis_feats.shape
    P = H * W
    N = B * T
    C1 = conv1_w.shape[0]
    C2 = conv2_w.shape[0]
    demb = lin_w.shape[0]
    assert lin_w.shape[1] == C2 * P

    f32 = jnp.float32

    # Fold eval-mode BatchNorm into the 1x1 convs (per-out-channel scale+shift).
    s1 = bn1_gamma / jnp.sqrt(bn1_var + BN_EPS)
    w1 = (conv1_w[:, :, 0, 0].astype(f32) * s1[:, None]).astype(compute_dtype)  # (C1, C_in)
    b1 = ((conv1_b - bn1_mean) * s1 + bn1_beta).astype(f32).reshape(C1, 1)
    s2 = bn2_gamma / jnp.sqrt(bn2_var + BN_EPS)
    w2 = (conv2_w[:, :, 0, 0].astype(f32) * s2[:, None]).astype(compute_dtype)  # (C2, C1)
    b2 = ((conv2_b - bn2_mean) * s2 + bn2_beta).astype(f32).reshape(C2, 1)

    # PyTorch flatten of (N, C2, H, W) is index c*P + p.  The kernel's scratch
    # is laid out [p*C2 + c], so regroup the Linear weight accordingly:
    #   w3[d, p*C2 + c] = lin_w[d, c*P + p]
    w3 = jnp.transpose(lin_w.reshape(demb, C2, P), (0, 2, 1)).reshape(demb, P * C2)
    w3 = w3.astype(compute_dtype)
    b3 = lin_b.astype(f32).reshape(demb, 1)

    # Sample-block (lane) size and padded sample count.
    tm_eff, Np = _pick_tile(N, tm)

    # Regroup input feature-major with samples on lanes: (N,C_in,H,W)->(P,C_in,N).
    x = jnp.transpose(vis_feats.reshape(N, C_in, P).astype(f32), (2, 1, 0))
    if Np != N:
        x = jnp.pad(x, ((0, 0), (0, 0), (0, Np - N)))
    x = x.astype(compute_dtype)

    grid_spec = pltpu.PrefetchScalarGridSpec(
        num_scalar_prefetch=0,
        grid=(Np // tm_eff,),
        in_specs=[
            pl.BlockSpec((P, C_in, tm_eff), lambda i: (0, 0, i)),   # activations (tiled)
            pl.BlockSpec((C1, C_in), lambda i: (0, 0)),             # w1 (resident)
            pl.BlockSpec((C1, 1), lambda i: (0, 0)),                # b1 (resident)
            pl.BlockSpec((C2, C1), lambda i: (0, 0)),               # w2 (resident)
            pl.BlockSpec((C2, 1), lambda i: (0, 0)),                # b2 (resident)
            pl.BlockSpec((demb, P * C2), lambda i: (0, 0)),         # w3 (resident)
            pl.BlockSpec((demb, 1), lambda i: (0, 0)),              # b3 (resident)
        ],
        out_specs=pl.BlockSpec((demb, tm_eff), lambda i: (0, i)),
        scratch_shapes=[pltpu.VMEM((P * C2, tm_eff), compute_dtype)],
    )

    out = pl.pallas_call(
        _encoder_vision_kernel,
        out_shape=jax.ShapeDtypeStruct((demb, Np), jnp.float32),
        grid_spec=grid_spec,
        compiler_params=pltpu.CompilerParams(
            dimension_semantics=("parallel",),   # sample blocks independent (v7x 2 TCs)
        ),
    )(x, w1, b1, w2, b2, w3, b3)

    # (demb, Np) -> (B, T, demb); the transpose is tiny (demb x N).
    return out[:, :N].T.reshape(B, T, demb)


def _reference_forward(vis_feats,
                       conv1_w, conv1_b, bn1_gamma, bn1_beta, bn1_mean, bn1_var,
                       conv2_w, conv2_b, bn2_gamma, bn2_beta, bn2_mean, bn2_var,
                       lin_w, lin_b):
    """Pure-JAX f32 reference matching PyTorch eval-mode semantics."""
    B, T, C_in, H, W = vis_feats.shape
    x = vis_feats.reshape(B * T, C_in, H, W).astype(jnp.float32)

    def conv_bn_relu(x, wc, bc, g, be, m, v):
        y = jnp.einsum('nchw,oc->nohw', x, wc[:, :, 0, 0]) + bc[None, :, None, None]
        y = (y - m[None, :, None, None]) * (g / jnp.sqrt(v + BN_EPS))[None, :, None, None] \
            + be[None, :, None, None]
        return jnp.maximum(y, 0.0)

    y = conv_bn_relu(x, conv1_w, conv1_b, bn1_gamma, bn1_beta, bn1_mean, bn1_var)
    y = conv_bn_relu(y, conv2_w, conv2_b, bn2_gamma, bn2_beta, bn2_mean, bn2_var)
    flat = y.reshape(B * T, -1)                 # PyTorch flatten: (c, h, w) order
    out = flat @ lin_w.T + lin_b                # Dropout eval-mode = identity
    return out.reshape(B, T, -1)


if __name__ == "__main__":
    key = jax.random.PRNGKey(0)
    B, T = 2, 3
    C_in, H, W = 16, 4, 4          # args.visual_tensor_shape = (16, 4, 4)
    C1, C2 = 256, 64               # module-fixed channels=[256, 64], 1x1 kernels
    demb = 32
    P = H * W

    keys = jax.random.split(key, 16)
    vis_feats = jax.random.normal(keys[0], (B, T, C_in, H, W), dtype=jnp.float32)

    conv1_w = 0.1 * jax.random.normal(keys[1], (C1, C_in, 1, 1), dtype=jnp.float32)
    conv1_b = 0.1 * jax.random.normal(keys[2], (C1,), dtype=jnp.float32)
    bn1_gamma = jax.random.uniform(keys[3], (C1,), jnp.float32, 0.5, 1.5)
    bn1_beta = 0.1 * jax.random.normal(keys[4], (C1,), dtype=jnp.float32)
    bn1_mean = 0.1 * jax.random.normal(keys[5], (C1,), dtype=jnp.float32)
    bn1_var = jax.random.uniform(keys[6], (C1,), jnp.float32, 0.5, 1.5)

    conv2_w = 0.1 * jax.random.normal(keys[7], (C2, C1, 1, 1), dtype=jnp.float32)
    conv2_b = 0.1 * jax.random.normal(keys[8], (C2,), dtype=jnp.float32)
    bn2_gamma = jax.random.uniform(keys[9], (C2,), jnp.float32, 0.5, 1.5)
    bn2_beta = 0.1 * jax.random.normal(keys[10], (C2,), dtype=jnp.float32)
    bn2_mean = 0.1 * jax.random.normal(keys[11], (C2,), dtype=jnp.float32)
    bn2_var = jax.random.uniform(keys[12], (C2,), jnp.float32, 0.5, 1.5)

    lin_w = 0.05 * jax.random.normal(keys[13], (demb, C2 * P), dtype=jnp.float32)
    lin_b = 0.1 * jax.random.normal(keys[14], (demb,), dtype=jnp.float32)

    args = (conv1_w, conv1_b, bn1_gamma, bn1_beta, bn1_mean, bn1_var,
            conv2_w, conv2_b, bn2_gamma, bn2_beta, bn2_mean, bn2_var,
            lin_w, lin_b)

    out = encoder_vision_forward(vis_feats, *args, tm=1024)
    out = jax.block_until_ready(out)

    ref = _reference_forward(vis_feats, *args)
    assert out.shape == (B, T, demb)
    # bf16 matmul operands (f32 accumulation) vs pure-f32 reference.
    assert jnp.allclose(out, ref, atol=3e-2, rtol=3e-2), \
        f"mismatch vs reference (max abs diff {float(jnp.max(jnp.abs(out - ref))):.4g})"

    print("KERNEL_OK")
</pallas_src>

<mosaic_0001>
module attributes {stable_mosaic.version = 11 : i64} {
  func.func @_encoder_vision_kernel(%arg0: i32, %arg1: memref<16x16x8xbf16, #tpu.memory_space<vmem>>, %arg2: memref<256x16xbf16, #tpu.memory_space<vmem>>, %arg3: memref<256x1xf32, #tpu.memory_space<vmem>>, %arg4: memref<64x256xbf16, #tpu.memory_space<vmem>>, %arg5: memref<64x1xf32, #tpu.memory_space<vmem>>, %arg6: memref<32x1024xbf16, #tpu.memory_space<vmem>>, %arg7: memref<32x1xf32, #tpu.memory_space<vmem>>, %arg8: memref<32x8xf32, #tpu.memory_space<vmem>>, %arg9: memref<1024x8xbf16, #tpu.memory_space<vmem>>) attributes {dimension_semantics = [#tpu.dimension_semantics<parallel>], iteration_bounds = array<i64: 1>, scalar_prefetch = 0 : i64, scratch_operands = 1 : i64, tpu.core_type = #tpu.core_type<tc>, window_params = [{transform_indices = @transform_0, window_bounds = array<i64: 16, 16, 8>}, {pipeline_mode = #tpu.pipeline_mode<synchronous>, transform_indices = @transform_1, window_bounds = array<i64: 256, 16>}, {pipeline_mode = #tpu.pipeline_mode<synchronous>, transform_indices = @transform_2, window_bounds = array<i64: 256, 1>}, {pipeline_mode = #tpu.pipeline_mode<synchronous>, transform_indices = @transform_3, window_bounds = array<i64: 64, 256>}, {pipeline_mode = #tpu.pipeline_mode<synchronous>, transform_indices = @transform_4, window_bounds = array<i64: 64, 1>}, {pipeline_mode = #tpu.pipeline_mode<synchronous>, transform_indices = @transform_5, window_bounds = array<i64: 32, 1024>}, {pipeline_mode = #tpu.pipeline_mode<synchronous>, transform_indices = @transform_6, window_bounds = array<i64: 32, 1>}, {transform_indices = @transform_7, window_bounds = array<i64: 32, 8>}]} {
    %c0 = arith.constant 0 : index
    %c0_0 = arith.constant 0 : index
    %0 = vector.load %arg2[%c0, %c0_0] : memref<256x16xbf16, #tpu.memory_space<vmem>>, vector<256x16xbf16>
    %c0_1 = arith.constant 0 : index
    %c0_2 = arith.constant 0 : index
    %1 = vector.load %arg4[%c0_1, %c0_2] : memref<64x256xbf16, #tpu.memory_space<vmem>>, vector<64x256xbf16>
    %c0_3 = arith.constant 0 : index
    %c0_4 = arith.constant 0 : index
    %2 = vector.load %arg3[%c0_3, %c0_4] : memref<256x1xf32, #tpu.memory_space<vmem>>, vector<256x1xf32>
    %c0_5 = arith.constant 0 : index
    %c0_6 = arith.constant 0 : index
    %3 = vector.load %arg5[%c0_5, %c0_6] : memref<64x1xf32, #tpu.memory_space<vmem>>, vector<64x1xf32>
    %c0_7 = arith.constant 0 : index
    %c0_8 = arith.constant 0 : index
    %c0_9 = arith.constant 0 : index
    %4 = vector.load %arg1[%c0_7, %c0_8, %c0_9] : memref<16x16x8xbf16, #tpu.memory_space<vmem>>, vector<1x16x8xbf16>
    %5 = vector.shape_cast %4 : vector<1x16x8xbf16> to vector<16x8xbf16>
    %cst = arith.constant dense<0.000000e+00> : vector<256x8xf32>
    %6 = tpu.matmul %0, %5, %cst {dimension_numbers = #tpu.dot_dimension_numbers<[1], [0], [0], [1], [0, 0, 1, 1], [], []>} : vector<256x16xbf16>, vector<16x8xbf16>, vector<256x8xf32> -> vector<256x8xf32>
    %7 = vector.broadcast %2 : vector<256x1xf32> to vector<256x8xf32>
    %8 = arith.addf %6, %7 : vector<256x8xf32>
    %cst_10 = arith.constant 0.000000e+00 : f32
    %9 = vector.broadcast %cst_10 : f32 to vector<256x8xf32>
    %10 = arith.maximumf %8, %9 : vector<256x8xf32>
    %11 = arith.truncf %10 : vector<256x8xf32> to vector<256x8xbf16>
    %cst_11 = arith.constant dense<0.000000e+00> : vector<64x8xf32>
    %12 = tpu.matmul %1, %11, %cst_11 {dimension_numbers = #tpu.dot_dimension_numbers<[1], [0], [0], [1], [0, 0, 1, 1], [], []>} : vector<64x256xbf16>, vector<256x8xbf16>, vector<64x8xf32> -> vector<64x8xf32>
    %13 = vector.broadcast %3 : vector<64x1xf32> to vector<64x8xf32>
    %14 = arith.addf %12, %13 : vector<64x8xf32>
    %cst_12 = arith.constant 0.000000e+00 : f32
    %15 = vector.broadcast %cst_12 : f32 to vector<64x8xf32>
    %16 = arith.maximumf %14, %15 : vector<64x8xf32>
    %17 = arith.truncf %16 : vector<64x8xf32> to vector<64x8xbf16>
    %c0_13 = arith.constant 0 : index
    %c0_14 = arith.constant 0 : index
    %18 = vector.load %arg9[%c0_13, %c0_14] : memref<1024x8xbf16, #tpu.memory_space<vmem>>, vector<64x8xbf16>
    tpu.vector_store %arg9[%c0_13, %c0_14], %17 {strides = array<i32>} : memref<1024x8xbf16, #tpu.memory_space<vmem>>, vector<64x8xbf16>,
    %c1 = arith.constant 1 : index
    %c0_15 = arith.constant 0 : index
    %c0_16 = arith.constant 0 : index
    %19 = vector.load %arg1[%c1, %c0_15, %c0_16] : memref<16x16x8xbf16, #tpu.memory_space<vmem>>, vector<1x16x8xbf16>
    %20 = vector.shape_cast %19 : vector<1x16x8xbf16> to vector<16x8xbf16>
    %cst_17 = arith.constant dense<0.000000e+00> : vector<256x8xf32>
    %21 = tpu.matmul %0, %20, %cst_17 {dimension_numbers = #tpu.dot_dimension_numbers<[1], [0], [0], [1], [0, 0, 1, 1], [], []>} : vector<256x16xbf16>, vector<16x8xbf16>, vector<256x8xf32> -> vector<256x8xf32>
    %22 = vector.broadcast %2 : vector<256x1xf32> to vector<256x8xf32>
    %23 = arith.addf %21, %22 : vector<256x8xf32>
    %cst_18 = arith.constant 0.000000e+00 : f32
    %24 = vector.broadcast %cst_18 : f32 to vector<256x8xf32>
    %25 = arith.maximumf %23, %24 : vector<256x8xf32>
    %26 = arith.truncf %25 : vector<256x8xf32> to vector<256x8xbf16>
    %cst_19 = arith.constant dense<0.000000e+00> : vector<64x8xf32>
    %27 = tpu.matmul %1, %26, %cst_19 {dimension_numbers = #tpu.dot_dimension_numbers<[1], [0], [0], [1], [0, 0, 1, 1], [], []>} : vector<64x256xbf16>, vector<256x8xbf16>, vector<64x8xf32> -> vector<64x8xf32>
    %28 = vector.broadcast %3 : vector<64x1xf32> to vector<64x8xf32>
    %29 = arith.addf %27, %28 : vector<64x8xf32>
    %cst_20 = arith.constant 0.000000e+00 : f32
    %30 = vector.broadcast %cst_20 : f32 to vector<64x8xf32>
    %31 = arith.maximumf %29, %30 : vector<64x8xf32>
    %32 = arith.truncf %31 : vector<64x8xf32> to vector<64x8xbf16>
    %c64 = arith.constant 64 : index
    %c0_21 = arith.constant 0 : index
    %33 = vector.load %arg9[%c64, %c0_21] : memref<1024x8xbf16, #tpu.memory_space<vmem>>, vector<64x8xbf16>
    tpu.vector_store %arg9[%c64, %c0_21], %32 {strides = array<i32>} : memref<1024x8xbf16, #tpu.memory_space<vmem>>, vector<64x8xbf16>,
    %c2 = arith.constant 2 : index
    %c0_22 = arith.constant 0 : index
    %c0_23 = arith.constant 0 : index
    %34 = vector.load %arg1[%c2, %c0_22, %c0_23] : memref<16x16x8xbf16, #tpu.memory_space<vmem>>, vector<1x16x8xbf16>
    %35 = vector.shape_cast %34 : vector<1x16x8xbf16> to vector<16x8xbf16>
    %cst_24 = arith.constant dense<0.000000e+00> : vector<256x8xf32>
    %36 = tpu.matmul %0, %35, %cst_24 {dimension_numbers = #tpu.dot_dimension_numbers<[1], [0], [0], [1], [0, 0, 1, 1], [], []>} : vector<256x16xbf16>, vector<16x8xbf16>, vector<256x8xf32> -> vector<256x8xf32>
    %37 = vector.broadcast %2 : vector<256x1xf32> to vector<256x8xf32>
    %38 = arith.addf %36, %37 : vector<256x8xf32>
    %cst_25 = arith.constant 0.000000e+00 : f32
    %39 = vector.broadcast %cst_25 : f32 to vector<256x8xf32>
    %40 = arith.maximumf %38, %39 : vector<256x8xf32>
    %41 = arith.truncf %40 : vector<256x8xf32> to vector<256x8xbf16>
    %cst_26 = arith.constant dense<0.000000e+00> : vector<64x8xf32>
    %42 = tpu.matmul %1, %41, %cst_26 {dimension_numbers = #tpu.dot_dimension_numbers<[1], [0], [0], [1], [0, 0, 1, 1], [], []>} : vector<64x256xbf16>, vector<256x8xbf16>, vector<64x8xf32> -> vector<64x8xf32>
    %43 = vector.broadcast %3 : vector<64x1xf32> to vector<64x8xf32>
    %44 = arith.addf %42, %43 : vector<64x8xf32>
    %cst_27 = arith.constant 0.000000e+00 : f32
    %45 = vector.broadcast %cst_27 : f32 to vector<64x8xf32>
    %46 = arith.maximumf %44, %45 : vector<64x8xf32>
    %47 = arith.truncf %46 : vector<64x8xf32> to vector<64x8xbf16>
    %c128 = arith.constant 128 : index
    %c0_28 = arith.constant 0 : index
    %48 = vector.load %arg9[%c128, %c0_28] : memref<1024x8xbf16, #tpu.memory_space<vmem>>, vector<64x8xbf16>
    tpu.vector_store %arg9[%c128, %c0_28], %47 {strides = array<i32>} : memref<1024x8xbf16, #tpu.memory_space<vmem>>, vector<64x8xbf16>,
    %c3 = arith.constant 3 : index
    %c0_29 = arith.constant 0 : index
    %c0_30 = arith.constant 0 : index
    %49 = vector.load %arg1[%c3, %c0_29, %c0_30] : memref<16x16x8xbf16, #tpu.memory_space<vmem>>, vector<1x16x8xbf16>
    %50 = vector.shape_cast %49 : vector<1x16x8xbf16> to vector<16x8xbf16>
    %cst_31 = arith.constant dense<0.000000e+00> : vector<256x8xf32>
    %51 = tpu.matmul %0, %50, %cst_31 {dimension_numbers = #tpu.dot_dimension_numbers<[1], [0], [0], [1], [0, 0, 1, 1], [], []>} : vector<256x16xbf16>, vector<16x8xbf16>, vector<256x8xf32> -> vector<256x8xf32>
    %52 = vector.broadcast %2 : vector<256x1xf32> to vector<256x8xf32>
    %53 = arith.addf %51, %52 : vector<256x8xf32>
    %cst_32 = arith.constant 0.000000e+00 : f32
    %54 = vector.broadcast %cst_32 : f32 to vector<256x8xf32>
    %55 = arith.maximumf %53, %54 : vector<256x8xf32>
    %56 = arith.truncf %55 : vector<256x8xf32> to vector<256x8xbf16>
    %cst_33 = arith.constant dense<0.000000e+00> : vector<64x8xf32>
    %57 = tpu.matmul %1, %56, %cst_33 {dimension_numbers = #tpu.dot_dimension_numbers<[1], [0], [0], [1], [0, 0, 1, 1], [], []>} : vector<64x256xbf16>, vector<256x8xbf16>, vector<64x8xf32> -> vector<64x8xf32>
    %58 = vector.broadcast %3 : vector<64x1xf32> to vector<64x8xf32>
    %59 = arith.addf %57, %58 : vector<64x8xf32>
    %cst_34 = arith.constant 0.000000e+00 : f32
    %60 = vector.broadcast %cst_34 : f32 to vector<64x8xf32>
    %61 = arith.maximumf %59, %60 : vector<64x8xf32>
    %62 = arith.truncf %61 : vector<64x8xf32> to vector<64x8xbf16>
    %c192 = arith.constant 192 : index
    %c0_35 = arith.constant 0 : index
    %63 = vector.load %arg9[%c192, %c0_35] : memref<1024x8xbf16, #tpu.memory_space<vmem>>, vector<64x8xbf16>
    tpu.vector_store %arg9[%c192, %c0_35], %62 {strides = array<i32>} : memref<1024x8xbf16, #tpu.memory_space<vmem>>, vector<64x8xbf16>,
    %c4 = arith.constant 4 : index
    %c0_36 = arith.constant 0 : index
    %c0_37 = arith.constant 0 : index
    %64 = vector.load %arg1[%c4, %c0_36, %c0_37] : memref<16x16x8xbf16, #tpu.memory_space<vmem>>, vector<1x16x8xbf16>
    %65 = vector.shape_cast %64 : vector<1x16x8xbf16> to vector<16x8xbf16>
    %cst_38 = arith.constant dense<0.000000e+00> : vector<256x8xf32>
    %66 = tpu.matmul %0, %65, %cst_38 {dimension_numbers = #tpu.dot_dimension_numbers<[1], [0], [0], [1], [0, 0, 1, 1], [], []>} : vector<256x16xbf16>, vector<16x8xbf16>, vector<256x8xf32> -> vector<256x8xf32>
    %67 = vector.broadcast %2 : vector<256x1xf32> to vector<256x8xf32>
    %68 = arith.addf %66, %67 : vector<256x8xf32>
    %cst_39 = arith.constant 0.000000e+00 : f32
    %69 = vector.broadcast %cst_39 : f32 to vector<256x8xf32>
    %70 = arith.maximumf %68, %69 : vector<256x8xf32>
    %71 = arith.truncf %70 : vector<256x8xf32> to vector<256x8xbf16>
    %cst_40 = arith.constant dense<0.000000e+00> : vector<64x8xf32>
    %72 = tpu.matmul %1, %71, %cst_40 {dimension_numbers = #tpu.dot_dimension_numbers<[1], [0], [0], [1], [0, 0, 1, 1], [], []>} : vector<64x256xbf16>, vector<256x8xbf16>, vector<64x8xf32> -> vector<64x8xf32>
    %73 = vector.broadcast %3 : vector<64x1xf32> to vector<64x8xf32>
    %74 = arith.addf %72, %73 : vector<64x8xf32>
    %cst_41 = arith.constant 0.000000e+00 : f32
    %75 = vector.broadcast %cst_41 : f32 to vector<64x8xf32>
    %76 = arith.maximumf %74, %75 : vector<64x8xf32>
    %77 = arith.truncf %76 : vector<64x8xf32> to vector<64x8xbf16>
    %c256 = arith.constant 256 : index
    %c0_42 = arith.constant 0 : index
    %78 = vector.load %arg9[%c256, %c0_42] : memref<1024x8xbf16, #tpu.memory_space<vmem>>, vector<64x8xbf16>
    tpu.vector_store %arg9[%c256, %c0_42], %77 {strides = array<i32>} : memref<1024x8xbf16, #tpu.memory_space<vmem>>, vector<64x8xbf16>,
    %c5 = arith.constant 5 : index
    %c0_43 = arith.constant 0 : index
    %c0_44 = arith.constant 0 : index
    %79 = vector.load %arg1[%c5, %c0_43, %c0_44] : memref<16x16x8xbf16, #tpu.memory_space<vmem>>, vector<1x16x8xbf16>
    %80 = vector.shape_cast %79 : vector<1x16x8xbf16> to vector<16x8xbf16>
    %cst_45 = arith.constant dense<0.000000e+00> : vector<256x8xf32>
    %81 = tpu.matmul %0, %80, %cst_45 {dimension_numbers = #tpu.dot_dimension_numbers<[1], [0], [0], [1], [0, 0, 1, 1], [], []>} : vector<256x16xbf16>, vector<16x8xbf16>, vector<256x8xf32> -> vector<256x8xf32>
    %82 = vector.broadcast %2 : vector<256x1xf32> to vector<256x8xf32>
    %83 = arith.addf %81, %82 : vector<256x8xf32>
    %cst_46 = arith.constant 0.000000e+00 : f32
    %84 = vector.broadcast %cst_46 : f32 to vector<256x8xf32>
    %85 = arith.maximumf %83, %84 : vector<256x8xf32>
    %86 = arith.truncf %85 : vector<256x8xf32> to vector<256x8xbf16>
    %cst_47 = arith.constant dense<0.000000e+00> : vector<64x8xf32>
    %87 = tpu.matmul %1, %86, %cst_47 {dimension_numbers = #tpu.dot_dimension_numbers<[1], [0], [0], [1], [0, 0, 1, 1], [], []>} : vector<64x256xbf16>, vector<256x8xbf16>, vector<64x8xf32> -> vector<64x8xf32>
    %88 = vector.broadcast %3 : vector<64x1xf32> to vector<64x8xf32>
    %89 = arith.addf %87, %88 : vector<64x8xf32>
    %cst_48 = arith.constant 0.000000e+00 : f32
    %90 = vector.broadcast %cst_48 : f32 to vector<64x8xf32>
    %91 = arith.maximumf %89, %90 : vector<64x8xf32>
    %92 = arith.truncf %91 : vector<64x8xf32> to vector<64x8xbf16>
    %c320 = arith.constant 320 : index
    %c0_49 = arith.constant 0 : index
    %93 = vector.load %arg9[%c320, %c0_49] : memref<1024x8xbf16, #tpu.memory_space<vmem>>, vector<64x8xbf16>
    tpu.vector_store %arg9[%c320, %c0_49], %92 {strides = array<i32>} : memref<1024x8xbf16, #tpu.memory_space<vmem>>, vector<64x8xbf16>,
    %c6 = arith.constant 6 : index
    %c0_50 = arith.constant 0 : index
    %c0_51 = arith.constant 0 : index
    %94 = vector.load %arg1[%c6, %c0_50, %c0_51] : memref<16x16x8xbf16, #tpu.memory_space<vmem>>, vector<1x16x8xbf16>
    %95 = vector.shape_cast %94 : vector<1x16x8xbf16> to vector<16x8xbf16>
    %cst_52 = arith.constant dense<0.000000e+00> : vector<256x8xf32>
    %96 = tpu.matmul %0, %95, %cst_52 {dimension_numbers = #tpu.dot_dimension_numbers<[1], [0], [0], [1], [0, 0, 1, 1], [], []>} : vector<256x16xbf16>, vector<16x8xbf16>, vector<256x8xf32> -> vector<256x8xf32>
    %97 = vector.broadcast %2 : vector<256x1xf32> to vector<256x8xf32>
    %98 = arith.addf %96, %97 : vector<256x8xf32>
    %cst_53 = arith.constant 0.000000e+00 : f32
    %99 = vector.broadcast %cst_53 : f32 to vector<256x8xf32>
    %100 = arith.maximumf %98, %99 : vector<256x8xf32>
    %101 = arith.truncf %100 : vector<256x8xf32> to vector<256x8xbf16>
    %cst_54 = arith.constant dense<0.000000e+00> : vector<64x8xf32>
    %102 = tpu.matmul %1, %101, %cst_54 {dimension_numbers = #tpu.dot_dimension_numbers<[1], [0], [0], [1], [0, 0, 1, 1], [], []>} : vector<64x256xbf16>, vector<256x8xbf16>, vector<64x8xf32> -> vector<64x8xf32>
    %103 = vector.broadcast %3 : vector<64x1xf32> to vector<64x8xf32>
    %104 = arith.addf %102, %103 : vector<64x8xf32>
    %cst_55 = arith.constant 0.000000e+00 : f32
    %105 = vector.broadcast %cst_55 : f32 to vector<64x8xf32>
    %106 = arith.maximumf %104, %105 : vector<64x8xf32>
    %107 = arith.truncf %106 : vector<64x8xf32> to vector<64x8xbf16>
    %c384 = arith.constant 384 : index
    %c0_56 = arith.constant 0 : index
    %108 = vector.load %arg9[%c384, %c0_56] : memref<1024x8xbf16, #tpu.memory_space<vmem>>, vector<64x8xbf16>
    tpu.vector_store %arg9[%c384, %c0_56], %107 {strides = array<i32>} : memref<1024x8xbf16, #tpu.memory_space<vmem>>, vector<64x8xbf16>,
    %c7 = arith.constant 7 : index
    %c0_57 = arith.constant 0 : index
    %c0_58 = arith.constant 0 : index
    %109 = vector.load %arg1[%c7, %c0_57, %c0_58] : memref<16x16x8xbf16, #tpu.memory_space<vmem>>, vector<1x16x8xbf16>
    %110 = vector.shape_cast %109 : vector<1x16x8xbf16> to vector<16x8xbf16>
    %cst_59 = arith.constant dense<0.000000e+00> : vector<256x8xf32>
    %111 = tpu.matmul %0, %110, %cst_59 {dimension_numbers = #tpu.dot_dimension_numbers<[1], [0], [0], [1], [0, 0, 1, 1], [], []>} : vector<256x16xbf16>, vector<16x8xbf16>, vector<256x8xf32> -> vector<256x8xf32>
    %112 = vector.broadcast %2 : vector<256x1xf32> to vector<256x8xf32>
    %113 = arith.addf %111, %112 : vector<256x8xf32>
    %cst_60 = arith.constant 0.000000e+00 : f32
    %114 = vector.broadcast %cst_60 : f32 to vector<256x8xf32>
    %115 = arith.maximumf %113, %114 : vector<256x8xf32>
    %116 = arith.truncf %115 : vector<256x8xf32> to vector<256x8xbf16>
    %cst_61 = arith.constant dense<0.000000e+00> : vector<64x8xf32>
    %117 = tpu.matmul %1, %116, %cst_61 {dimension_numbers = #tpu.dot_dimension_numbers<[1], [0], [0], [1], [0, 0, 1, 1], [], []>} : vector<64x256xbf16>, vector<256x8xbf16>, vector<64x8xf32> -> vector<64x8xf32>
    %118 = vector.broadcast %3 : vector<64x1xf32> to vector<64x8xf32>
    %119 = arith.addf %117, %118 : vector<64x8xf32>
    %cst_62 = arith.constant 0.000000e+00 : f32
    %120 = vector.broadcast %cst_62 : f32 to vector<64x8xf32>
    %121 = arith.maximumf %119, %120 : vector<64x8xf32>
    %122 = arith.truncf %121 : vector<64x8xf32> to vector<64x8xbf16>
    %c448 = arith.constant 448 : index
    %c0_63 = arith.constant 0 : index
    %123 = vector.load %arg9[%c448, %c0_63] : memref<1024x8xbf16, #tpu.memory_space<vmem>>, vector<64x8xbf16>
    tpu.vector_store %arg9[%c448, %c0_63], %122 {strides = array<i32>} : memref<1024x8xbf16, #tpu.memory_space<vmem>>, vector<64x8xbf16>,
    %c8 = arith.constant 8 : index
    %c0_64 = arith.constant 0 : index
    %c0_65 = arith.constant 0 : index
    %124 = vector.load %arg1[%c8, %c0_64, %c0_65] : memref<16x16x8xbf16, #tpu.memory_space<vmem>>, vector<1x16x8xbf16>
    %125 = vector.shape_cast %124 : vector<1x16x8xbf16> to vector<16x8xbf16>
    %cst_66 = arith.constant dense<0.000000e+00> : vector<256x8xf32>
    %126 = tpu.matmul %0, %125, %cst_66 {dimension_numbers = #tpu.dot_dimension_numbers<[1], [0], [0], [1], [0, 0, 1, 1], [], []>} : vector<256x16xbf16>, vector<16x8xbf16>, vector<256x8xf32> -> vector<256x8xf32>
    %127 = vector.broadcast %2 : vector<256x1xf32> to vector<256x8xf32>
    %128 = arith.addf %126, %127 : vector<256x8xf32>
    %cst_67 = arith.constant 0.000000e+00 : f32
    %129 = vector.broadcast %cst_67 : f32 to vector<256x8xf32>
    %130 = arith.maximumf %128, %129 : vector<256x8xf32>
    %131 = arith.truncf %130 : vector<256x8xf32> to vector<256x8xbf16>
    %cst_68 = arith.constant dense<0.000000e+00> : vector<64x8xf32>
    %132 = tpu.matmul %1, %131, %cst_68 {dimension_numbers = #tpu.dot_dimension_numbers<[1], [0], [0], [1], [0, 0, 1, 1], [], []>} : vector<64x256xbf16>, vector<256x8xbf16>, vector<64x8xf32> -> vector<64x8xf32>
    %133 = vector.broadcast %3 : vector<64x1xf32> to vector<64x8xf32>
    %134 = arith.addf %132, %133 : vector<64x8xf32>
    %cst_69 = arith.constant 0.000000e+00 : f32
    %135 = vector.broadcast %cst_69 : f32 to vector<64x8xf32>
    %136 = arith.maximumf %134, %135 : vector<64x8xf32>
    %137 = arith.truncf %136 : vector<64x8xf32> to vector<64x8xbf16>
    %c512 = arith.constant 512 : index
    %c0_70 = arith.constant 0 : index
    %138 = vector.load %arg9[%c512, %c0_70] : memref<1024x8xbf16, #tpu.memory_space<vmem>>, vector<64x8xbf16>
    tpu.vector_store %arg9[%c512, %c0_70], %137 {strides = array<i32>} : memref<1024x8xbf16, #tpu.memory_space<vmem>>, vector<64x8xbf16>,
    %c9 = arith.constant 9 : index
    %c0_71 = arith.constant 0 : index
    %c0_72 = arith.constant 0 : index
    %139 = vector.load %arg1[%c9, %c0_71, %c0_72] : memref<16x16x8xbf16, #tpu.memory_space<vmem>>, vector<1x16x8xbf16>
    %140 = vector.shape_cast %139 : vector<1x16x8xbf16> to vector<16x8xbf16>
    %cst_73 = arith.constant dense<0.000000e+00> : vector<256x8xf32>
    %141 = tpu.matmul %0, %140, %cst_73 {dimension_numbers = #tpu.dot_dimension_numbers<[1], [0], [0], [1], [0, 0, 1, 1], [], []>} : vector<256x16xbf16>, vector<16x8xbf16>, vector<256x8xf32> -> vector<256x8xf32>
    %142 = vector.broadcast %2 : vector<256x1xf32> to vector<256x8xf32>
    %143 = arith.addf %141, %142 : vector<256x8xf32>
    %cst_74 = arith.constant 0.000000e+00 : f32
    %144 = vector.broadcast %cst_74 : f32 to vector<256x8xf32>
    %145 = arith.maximumf %143, %144 : vector<256x8xf32>
    %146 = arith.truncf %145 : vector<256x8xf32> to vector<256x8xbf16>
    %cst_75 = arith.constant dense<0.000000e+00> : vector<64x8xf32>
    %147 = tpu.matmul %1, %146, %cst_75 {dimension_numbers = #tpu.dot_dimension_numbers<[1], [0], [0], [1], [0, 0, 1, 1], [], []>} : vector<64x256xbf16>, vector<256x8xbf16>, vector<64x8xf32> -> vector<64x8xf32>
    %148 = vector.broadcast %3 : vector<64x1xf32> to vector<64x8xf32>
    %149 = arith.addf %147, %148 : vector<64x8xf32>
    %cst_76 = arith.constant 0.000000e+00 : f32
    %150 = vector.broadcast %cst_76 : f32 to vector<64x8xf32>
    %151 = arith.maximumf %149, %150 : vector<64x8xf32>
    %152 = arith.truncf %151 : vector<64x8xf32> to vector<64x8xbf16>
    %c576 = arith.constant 576 : index
    %c0_77 = arith.constant 0 : index
    %153 = vector.load %arg9[%c576, %c0_77] : memref<1024x8xbf16, #tpu.memory_space<vmem>>, vector<64x8xbf16>
    tpu.vector_store %arg9[%c576, %c0_77], %152 {strides = array<i32>} : memref<1024x8xbf16, #tpu.memory_space<vmem>>, vector<64x8xbf16>,
    %c10 = arith.constant 10 : index
    %c0_78 = arith.constant 0 : index
    %c0_79 = arith.constant 0 : index
    %154 = vector.load %arg1[%c10, %c0_78, %c0_79] : memref<16x16x8xbf16, #tpu.memory_space<vmem>>, vector<1x16x8xbf16>
    %155 = vector.shape_cast %154 : vector<1x16x8xbf16> to vector<16x8xbf16>
    %cst_80 = arith.constant dense<0.000000e+00> : vector<256x8xf32>
    %156 = tpu.matmul %0, %155, %cst_80 {dimension_numbers = #tpu.dot_dimension_numbers<[1], [0], [0], [1], [0, 0, 1, 1], [], []>} : vector<256x16xbf16>, vector<16x8xbf16>, vector<256x8xf32> -> vector<256x8xf32>
    %157 = vector.broadcast %2 : vector<256x1xf32> to vector<256x8xf32>
    %158 = arith.addf %156, %157 : vector<256x8xf32>
    %cst_81 = arith.constant 0.000000e+00 : f32
    %159 = vector.broadcast %cst_81 : f32 to vector<256x8xf32>
    %160 = arith.maximumf %158, %159 : vector<256x8xf32>
    %161 = arith.truncf %160 : vector<256x8xf32> to vector<256x8xbf16>
    %cst_82 = arith.constant dense<0.000000e+00> : vector<64x8xf32>
    %162 = tpu.matmul %1, %161, %cst_82 {dimension_numbers = #tpu.dot_dimension_numbers<[1], [0], [0], [1], [0, 0, 1, 1], [], []>} : vector<64x256xbf16>, vector<256x8xbf16>, vector<64x8xf32> -> vector<64x8xf32>
    %163 = vector.broadcast %3 : vector<64x1xf32> to vector<64x8xf32>
    %164 = arith.addf %162, %163 : vector<64x8xf32>
    %cst_83 = arith.constant 0.000000e+00 : f32
    %165 = vector.broadcast %cst_83 : f32 to vector<64x8xf32>
    %166 = arith.maximumf %164, %165 : vector<64x8xf32>
    %167 = arith.truncf %166 : vector<64x8xf32> to vector<64x8xbf16>
    %c640 = arith.constant 640 : index
    %c0_84 = arith.constant 0 : index
    %168 = vector.load %arg9[%c640, %c0_84] : memref<1024x8xbf16, #tpu.memory_space<vmem>>, vector<64x8xbf16>
    tpu.vector_store %arg9[%c640, %c0_84], %167 {strides = array<i32>} : memref<1024x8xbf16, #tpu.memory_space<vmem>>, vector<64x8xbf16>,
    %c11 = arith.constant 11 : index
    %c0_85 = arith.constant 0 : index
    %c0_86 = arith.constant 0 : index
    %169 = vector.load %arg1[%c11, %c0_85, %c0_86] : memref<16x16x8xbf16, #tpu.memory_space<vmem>>, vector<1x16x8xbf16>
    %170 = vector.shape_cast %169 : vector<1x16x8xbf16> to vector<16x8xbf16>
    %cst_87 = arith.constant dense<0.000000e+00> : vector<256x8xf32>
    %171 = tpu.matmul %0, %170, %cst_87 {dimension_numbers = #tpu.dot_dimension_numbers<[1], [0], [0], [1], [0, 0, 1, 1], [], []>} : vector<256x16xbf16>, vector<16x8xbf16>, vector<256x8xf32> -> vector<256x8xf32>
    %172 = vector.broadcast %2 : vector<256x1xf32> to vector<256x8xf32>
    %173 = arith.addf %171, %172 : vector<256x8xf32>
    %cst_88 = arith.constant 0.000000e+00 : f32
    %174 = vector.broadcast %cst_88 : f32 to vector<256x8xf32>
    %175 = arith.maximumf %173, %174 : vector<256x8xf32>
    %176 = arith.truncf %175 : vector<256x8xf32> to vector<256x8xbf16>
    %cst_89 = arith.constant dense<0.000000e+00> : vector<64x8xf32>
    %177 = tpu.matmul %1, %176, %cst_89 {dimension_numbers = #tpu.dot_dimension_numbers<[1], [0], [0], [1], [0, 0, 1, 1], [], []>} : vector<64x256xbf16>, vector<256x8xbf16>, vector<64x8xf32> -> vector<64x8xf32>
    %178 = vector.broadcast %3 : vector<64x1xf32> to vector<64x8xf32>
    %179 = arith.addf %177, %178 : vector<64x8xf32>
    %cst_90 = arith.constant 0.000000e+00 : f32
    %180 = vector.broadcast %cst_90 : f32 to vector<64x8xf32>
    %181 = arith.maximumf %179, %180 : vector<64x8xf32>
    %182 = arith.truncf %181 : vector<64x8xf32> to vector<64x8xbf16>
    %c704 = arith.constant 704 : index
    %c0_91 = arith.constant 0 : index
    %183 = vector.load %arg9[%c704, %c0_91] : memref<1024x8xbf16, #tpu.memory_space<vmem>>, vector<64x8xbf16>
    tpu.vector_store %arg9[%c704, %c0_91], %182 {strides = array<i32>} : memref<1024x8xbf16, #tpu.memory_space<vmem>>, vector<64x8xbf16>,
    %c12 = arith.constant 12 : index
    %c0_92 = arith.constant 0 : index
    %c0_93 = arith.constant 0 : index
    %184 = vector.load %arg1[%c12, %c0_92, %c0_93] : memref<16x16x8xbf16, #tpu.memory_space<vmem>>, vector<1x16x8xbf16>
    %185 = vector.shape_cast %184 : vector<1x16x8xbf16> to vector<16x8xbf16>
    %cst_94 = arith.constant dense<0.000000e+00> : vector<256x8xf32>
    %186 = tpu.matmul %0, %185, %cst_94 {dimension_numbers = #tpu.dot_dimension_numbers<[1], [0], [0], [1], [0, 0, 1, 1], [], []>} : vector<256x16xbf16>, vector<16x8xbf16>, vector<256x8xf32> -> vector<256x8xf32>
    %187 = vector.broadcast %2 : vector<256x1xf32> to vector<256x8xf32>
    %188 = arith.addf %186, %187 : vector<256x8xf32>
    %cst_95 = arith.constant 0.000000e+00 : f32
    %189 = vector.broadcast %cst_95 : f32 to vector<256x8xf32>
    %190 = arith.maximumf %188, %189 : vector<256x8xf32>
    %191 = arith.truncf %190 : vector<256x8xf32> to vector<256x8xbf16>
    %cst_96 = arith.constant dense<0.000000e+00> : vector<64x8xf32>
    %192 = tpu.matmul %1, %191, %cst_96 {dimension_numbers = #tpu.dot_dimension_numbers<[1], [0], [0], [1], [0, 0, 1, 1], [], []>} : vector<64x256xbf16>, vector<256x8xbf16>, vector<64x8xf32> -> vector<64x8xf32>
    %193 = vector.broadcast %3 : vector<64x1xf32> to vector<64x8xf32>
    %194 = arith.addf %192, %193 : vector<64x8xf32>
    %cst_97 = arith.constant 0.000000e+00 : f32
    %195 = vector.broadcast %cst_97 : f32 to vector<64x8xf32>
    %196 = arith.maximumf %194, %195 : vector<64x8xf32>
    %197 = arith.truncf %196 : vector<64x8xf32> to vector<64x8xbf16>
    %c768 = arith.constant 768 : index
    %c0_98 = arith.constant 0 : index
    %198 = vector.load %arg9[%c768, %c0_98] : memref<1024x8xbf16, #tpu.memory_space<vmem>>, vector<64x8xbf16>
    tpu.vector_store %arg9[%c768, %c0_98], %197 {strides = array<i32>} : memref<1024x8xbf16, #tpu.memory_space<vmem>>, vector<64x8xbf16>,
    %c13 = arith.constant 13 : index
    %c0_99 = arith.constant 0 : index
    %c0_100 = arith.constant 0 : index
    %199 = vector.load %arg1[%c13, %c0_99, %c0_100] : memref<16x16x8xbf16, #tpu.memory_space<vmem>>, vector<1x16x8xbf16>
    %200 = vector.shape_cast %199 : vector<1x16x8xbf16> to vector<16x8xbf16>
    %cst_101 = arith.constant dense<0.000000e+00> : vector<256x8xf32>
    %201 = tpu.matmul %0, %200, %cst_101 {dimension_numbers = #tpu.dot_dimension_numbers<[1], [0], [0], [1], [0, 0, 1, 1], [], []>} : vector<256x16xbf16>, vector<16x8xbf16>, vector<256x8xf32> -> vector<256x8xf32>
    %202 = vector.broadcast %2 : vector<256x1xf32> to vector<256x8xf32>
    %203 = arith.addf %201, %202 : vector<256x8xf32>
    %cst_102 = arith.constant 0.000000e+00 : f32
    %204 = vector.broadcast %cst_102 : f32 to vector<256x8xf32>
    %205 = arith.maximumf %203, %204 : vector<256x8xf32>
    %206 = arith.truncf %205 : vector<256x8xf32> to vector<256x8xbf16>
    %cst_103 = arith.constant dense<0.000000e+00> : vector<64x8xf32>
    %207 = tpu.matmul %1, %206, %cst_103 {dimension_numbers = #tpu.dot_dimension_numbers<[1], [0], [0], [1], [0, 0, 1, 1], [], []>} : vector<64x256xbf16>, vector<256x8xbf16>, vector<64x8xf32> -> vector<64x8xf32>
    %208 = vector.broadcast %3 : vector<64x1xf32> to vector<64x8xf32>
    %209 = arith.addf %207, %208 : vector<64x8xf32>
    %cst_104 = arith.constant 0.000000e+00 : f32
    %210 = vector.broadcast %cst_104 : f32 to vector<64x8xf32>
    %211 = arith.maximumf %209, %210 : vector<64x8xf32>
    %212 = arith.truncf %211 : vector<64x8xf32> to vector<64x8xbf16>
    %c832 = arith.constant 832 : index
    %c0_105 = arith.constant 0 : index
    %213 = vector.load %arg9[%c832, %c0_105] : memref<1024x8xbf16, #tpu.memory_space<vmem>>, vector<64x8xbf16>
    tpu.vector_store %arg9[%c832, %c0_105], %212 {strides = array<i32>} : memref<1024x8xbf16, #tpu.memory_space<vmem>>, vector<64x8xbf16>,
    %c14 = arith.constant 14 : index
    %c0_106 = arith.constant 0 : index
    %c0_107 = arith.constant 0 : index
    %214 = vector.load %arg1[%c14, %c0_106, %c0_107] : memref<16x16x8xbf16, #tpu.memory_space<vmem>>, vector<1x16x8xbf16>
    %215 = vector.shape_cast %214 : vector<1x16x8xbf16> to vector<16x8xbf16>
    %cst_108 = arith.constant dense<0.000000e+00> : vector<256x8xf32>
    %216 = tpu.matmul %0, %215, %cst_108 {dimension_numbers = #tpu.dot_dimension_numbers<[1], [0], [0], [1], [0, 0, 1, 1], [], []>} : vector<256x16xbf16>, vector<16x8xbf16>, vector<256x8xf32> -> vector<256x8xf32>
    %217 = vector.broadcast %2 : vector<256x1xf32> to vector<256x8xf32>
    %218 = arith.addf %216, %217 : vector<256x8xf32>
    %cst_109 = arith.constant 0.000000e+00 : f32
    %219 = vector.broadcast %cst_109 : f32 to vector<256x8xf32>
    %220 = arith.maximumf %218, %219 : vector<256x8xf32>
    %221 = arith.truncf %220 : vector<256x8xf32> to vector<256x8xbf16>
    %cst_110 = arith.constant dense<0.000000e+00> : vector<64x8xf32>
    %222 = tpu.matmul %1, %221, %cst_110 {dimension_numbers = #tpu.dot_dimension_numbers<[1], [0], [0], [1], [0, 0, 1, 1], [], []>} : vector<64x256xbf16>, vector<256x8xbf16>, vector<64x8xf32> -> vector<64x8xf32>
    %223 = vector.broadcast %3 : vector<64x1xf32> to vector<64x8xf32>
    %224 = arith.addf %222, %223 : vector<64x8xf32>
    %cst_111 = arith.constant 0.000000e+00 : f32
    %225 = vector.broadcast %cst_111 : f32 to vector<64x8xf32>
    %226 = arith.maximumf %224, %225 : vector<64x8xf32>
    %227 = arith.truncf %226 : vector<64x8xf32> to vector<64x8xbf16>
    %c896 = arith.constant 896 : index
    %c0_112 = arith.constant 0 : index
    %228 = vector.load %arg9[%c896, %c0_112] : memref<1024x8xbf16, #tpu.memory_space<vmem>>, vector<64x8xbf16>
    tpu.vector_store %arg9[%c896, %c0_112], %227 {strides = array<i32>} : memref<1024x8xbf16, #tpu.memory_space<vmem>>, vector<64x8xbf16>,
    %c15 = arith.constant 15 : index
    %c0_113 = arith.constant 0 : index
    %c0_114 = arith.constant 0 : index
    %229 = vector.load %arg1[%c15, %c0_113, %c0_114] : memref<16x16x8xbf16, #tpu.memory_space<vmem>>, vector<1x16x8xbf16>
    %230 = vector.shape_cast %229 : vector<1x16x8xbf16> to vector<16x8xbf16>
    %cst_115 = arith.constant dense<0.000000e+00> : vector<256x8xf32>
    %231 = tpu.matmul %0, %230, %cst_115 {dimension_numbers = #tpu.dot_dimension_numbers<[1], [0], [0], [1], [0, 0, 1, 1], [], []>} : vector<256x16xbf16>, vector<16x8xbf16>, vector<256x8xf32> -> vector<256x8xf32>
    %232 = vector.broadcast %2 : vector<256x1xf32> to vector<256x8xf32>
    %233 = arith.addf %231, %232 : vector<256x8xf32>
    %cst_116 = arith.constant 0.000000e+00 : f32
    %234 = vector.broadcast %cst_116 : f32 to vector<256x8xf32>
    %235 = arith.maximumf %233, %234 : vector<256x8xf32>
    %236 = arith.truncf %235 : vector<256x8xf32> to vector<256x8xbf16>
    %cst_117 = arith.constant dense<0.000000e+00> : vector<64x8xf32>
    %237 = tpu.matmul %1, %236, %cst_117 {dimension_numbers = #tpu.dot_dimension_numbers<[1], [0], [0], [1], [0, 0, 1, 1], [], []>} : vector<64x256xbf16>, vector<256x8xbf16>, vector<64x8xf32> -> vector<64x8xf32>
    %238 = vector.broadcast %3 : vector<64x1xf32> to vector<64x8xf32>
    %239 = arith.addf %237, %238 : vector<64x8xf32>
    %cst_118 = arith.constant 0.000000e+00 : f32
    %240 = vector.broadcast %cst_118 : f32 to vector<64x8xf32>
    %241 = arith.maximumf %239, %240 : vector<64x8xf32>
    %242 = arith.truncf %241 : vector<64x8xf32> to vector<64x8xbf16>
    %c960 = arith.constant 960 : index
    %c0_119 = arith.constant 0 : index
    %243 = vector.load %arg9[%c960, %c0_119] : memref<1024x8xbf16, #tpu.memory_space<vmem>>, vector<64x8xbf16>
    tpu.vector_store %arg9[%c960, %c0_119], %242 {strides = array<i32>} : memref<1024x8xbf16, #tpu.memory_space<vmem>>, vector<64x8xbf16>,
    %c0_120 = arith.constant 0 : index
    %c0_121 = arith.constant 0 : index
    %244 = vector.load %arg6[%c0_120, %c0_121] : memref<32x1024xbf16, #tpu.memory_space<vmem>>, vector<32x1024xbf16>
    %c0_122 = arith.constant 0 : index
    %c0_123 = arith.constant 0 : index
    %245 = vector.load %arg9[%c0_122, %c0_123] : memref<1024x8xbf16, #tpu.memory_space<vmem>>, vector<1024x8xbf16>
    %cst_124 = arith.constant dense<0.000000e+00> : vector<32x8xf32>
    %246 = tpu.matmul %244, %245, %cst_124 {dimension_numbers = #tpu.dot_dimension_numbers<[1], [0], [0], [1], [0, 0, 1, 1], [], []>} : vector<32x1024xbf16>, vector<1024x8xbf16>, vector<32x8xf32> -> vector<32x8xf32>
    %c0_125 = arith.constant 0 : index
    %c0_126 = arith.constant 0 : index
    %247 = vector.load %arg7[%c0_125, %c0_126] : memref<32x1xf32, #tpu.memory_space<vmem>>, vector<32x1xf32>
    %248 = vector.broadcast %247 : vector<32x1xf32> to vector<32x8xf32>
    %249 = arith.addf %246, %248 : vector<32x8xf32>
    %c0_127 = arith.constant 0 : index
    %c0_128 = arith.constant 0 : index
    %250 = vector.load %arg8[%c0_127, %c0_128] : memref<32x8xf32, #tpu.memory_space<vmem>>, vector<32x8xf32>
    tpu.vector_store %arg8[%c0_127, %c0_128], %249 {strides = array<i32>} : memref<32x8xf32, #tpu.memory_space<vmem>>, vector<32x8xf32>,
    return
  }
  func.func @transform_0(%arg0: i32) -> (i32, i32, i32) {
    %c0_i32 = arith.constant 0 : i32
    %c0_i32_0 = arith.constant 0 : i32
    %c0_i32_1 = arith.constant 0 : i32
    return %c0_i32, %c0_i32_0, %arg0 : i32, i32, i32
  }
  func.func @transform_1(%arg0: i32) -> (i32, i32) {
    %c0_i32 = arith.constant 0 : i32
    %c0_i32_0 = arith.constant 0 : i32
    %c0_i32_1 = arith.constant 0 : i32
    return %c0_i32, %c0_i32_0 : i32, i32
  }
  func.func @transform_2(%arg0: i32) -> (i32, i32) {
    %c0_i32 = arith.constant 0 : i32
    %c0_i32_0 = arith.constant 0 : i32
    %c0_i32_1 = arith.constant 0 : i32
    return %c0_i32, %c0_i32_0 : i32, i32
  }
  func.func @transform_3(%arg0: i32) -> (i32, i32) {
    %c0_i32 = arith.constant 0 : i32
    %c0_i32_0 = arith.constant 0 : i32
    %c0_i32_1 = arith.constant 0 : i32
    return %c0_i32, %c0_i32_0 : i32, i32
  }
  func.func @transform_4(%arg0: i32) -> (i32, i32) {
    %c0_i32 = arith.constant 0 : i32
    %c0_i32_0 = arith.constant 0 : i32
    %c0_i32_1 = arith.constant 0 : i32
    return %c0_i32, %c0_i32_0 : i32, i32
  }
  func.func @transform_5(%arg0: i32) -> (i32, i32) {
    %c0_i32 = arith.constant 0 : i32
    %c0_i32_0 = arith.constant 0 : i32
    %c0_i32_1 = arith.constant 0 : i32
    return %c0_i32, %c0_i32_0 : i32, i32
  }
  func.func @transform_6(%arg0: i32) -> (i32, i32) {
    %c0_i32 = arith.constant 0 : i32
    %c0_i32_0 = arith.constant 0 : i32
    %c0_i32_1 = arith.constant 0 : i32
    return %c0_i32, %c0_i32_0 : i32, i32
  }
  func.func @transform_7(%arg0: i32) -> (i32, i32) {
    %c0_i32 = arith.constant 0 : i32
    %c0_i32_0 = arith.constant 0 : i32
    return %c0_i32, %arg0 : i32, i32
  }
}

</mosaic_0001>

<llo_original>
// kernel: tpu_custom_call.1
$region0: #{tpu_custom_call.1}
  #allocation0 [shape = 'u32[]', space=smem, size = 0x4, offset = 0x4, fixed_abs, tag = 'smem constant byte address 0x4 - core index']
  #allocation1 [shape = 'u32[72,128]{1,0:T(1,128)}', space=vmem, size = 0x9000, scoped, tag = 'internal scratch']
  #allocation2 [shape = 'bf16[1024,8]{1,0:T(8,128)(2,1)}', space=vmem, size = 0x40000, scoped, tag = 'scratch operand']
  %s0 = inlined_call_operand.vmem [shape: bf16[16,16,8], index: 0, kind: input, shape index: {}]
  %s1 = inlined_call_operand.vmem [shape: bf16[256,16], index: 1, kind: input, shape index: {}]
  %s2 = inlined_call_operand.vmem [shape: f32[256,1], index: 2, kind: input, shape index: {}]
  %s3 = inlined_call_operand.vmem [shape: bf16[64,256], index: 3, kind: input, shape index: {}]
  %s4 = inlined_call_operand.vmem [shape: f32[64,1], index: 4, kind: input, shape index: {}]
  %s5 = inlined_call_operand.vmem [shape: bf16[32,1024], index: 5, kind: input, shape index: {}]
  %s6 = inlined_call_operand.vmem [shape: f32[32,1], index: 6, kind: input, shape index: {}]
  %s7 = inlined_call_operand.vmem [shape: f32[32,8], index: 7, kind: output, shape index: {}]
  %s8 = sld [smem:[#allocation0]]
  $region38: #{tpu_custom_call.1} parent=0
    _
  %s10 = ssub.s32 1, %s8
  %s11 = scalar_select 0, %s10, %s8
  // Predicated region
  $region2: #{tpu_custom_call.1} parent=0 // pred_check
    _
  $region3: #{tpu_custom_call.1} parent=0 // pred_check_branch
    %13 = sbr.rel (0) target = $region5
  $region4: #{tpu_custom_call.1} parent=0 // pred_region
    _
  $region5: #{tpu_custom_call.1} parent=0 // pred_fallthru
    _
  // Predicated region
  $region6: #{tpu_custom_call.1} parent=0 // pred_check
    _
  $region7: #{tpu_custom_call.1} parent=0 // pred_check_branch
    %15 = sbr.rel (0) target = $region9
  $region8: #{tpu_custom_call.1} parent=0 // pred_region
    _
  $region9: #{tpu_custom_call.1} parent=0 // pred_fallthru
    _
  // Predicated region
  $region10: #{tpu_custom_call.1} parent=0 // pred_check
    _
  $region11: #{tpu_custom_call.1} parent=0 // pred_check_branch
    %17 = sbr.rel (0) target = $region13
  $region12: #{tpu_custom_call.1} parent=0 // pred_region
    _
  $region13: #{tpu_custom_call.1} parent=0 // pred_fallthru
    _
  // Predicated region
  $region14: #{tpu_custom_call.1} parent=0 // pred_check
    _
  $region15: #{tpu_custom_call.1} parent=0 // pred_check_branch
    %19 = sbr.rel (0) target = $region17
  $region16: #{tpu_custom_call.1} parent=0 // pred_region
    _
  $region17: #{tpu_custom_call.1} parent=0 // pred_fallthru
    _
  // Predicated region
  $region18: #{tpu_custom_call.1} parent=0 // pred_check
    _
  $region19: #{tpu_custom_call.1} parent=0 // pred_check_branch
    %21 = sbr.rel (0) target = $region21
  $region20: #{tpu_custom_call.1} parent=0 // pred_region
    _
  $region21: #{tpu_custom_call.1} parent=0 // pred_fallthru
    _
  // Predicated region
  $region22: #{tpu_custom_call.1} parent=0 // pred_check
    _
  $region23: #{tpu_custom_call.1} parent=0 // pred_check_branch
    %23 = sbr.rel (0) target = $region25
  $region24: #{tpu_custom_call.1} parent=0 // pred_region
    _
  $region25: #{tpu_custom_call.1} parent=0 // pred_fallthru
    _
  // Predicated region
  $region26: #{tpu_custom_call.1} parent=0 // pred_check
    _
  $region27: #{tpu_custom_call.1} parent=0 // pred_check_branch
    %25 = sbr.rel (0) target = $region29
  $region28: #{tpu_custom_call.1} parent=0 // pred_region
    _
  $region29: #{tpu_custom_call.1} parent=0 // pred_fallthru
    _
  %v27 = vld [vmem:[%s1] sm:$0xf]
  %v28 = vld [vmem:[%s1 + $0x4] sm:$0xf]
  %v29 = vld [vmem:[%s1 + $0x8] sm:$0xf]
  %v30 = vld [vmem:[%s1 + $0xc] sm:$0xf]
  %v31 = vld [vmem:[%s1 + $0x10] sm:$0xf]
  %v32 = vld [vmem:[%s1 + $0x14] sm:$0xf]
  %v33 = vld [vmem:[%s1 + $0x18] sm:$0xf]
  %v34 = vld [vmem:[%s1 + $0x1c] sm:$0xf]
  %v35 = vld [vmem:[%s1 + $0x20] sm:$0xf]
  %v36 = vld [vmem:[%s1 + $0x24] sm:$0xf]
  %v37 = vld [vmem:[%s1 + $0x28] sm:$0xf]
  %v38 = vld [vmem:[%s1 + $0x2c] sm:$0xf]
  %v39 = vld [vmem:[%s1 + $0x30] sm:$0xf]
  %v40 = vld [vmem:[%s1 + $0x34] sm:$0xf]
  %v41 = vld [vmem:[%s1 + $0x38] sm:$0xf]
  %v42 = vld [vmem:[%s1 + $0x3c] sm:$0xf]
  %v43 = vld [vmem:[%s1 + $0x40] sm:$0xf]
  %v44 = vld [vmem:[%s1 + $0x44] sm:$0xf]
  %v45 = vld [vmem:[%s1 + $0x48] sm:$0xf]
  %v46 = vld [vmem:[%s1 + $0x4c] sm:$0xf]
  %v47 = vld [vmem:[%s1 + $0x50] sm:$0xf]
  %v48 = vld [vmem:[%s1 + $0x54] sm:$0xf]
  %v49 = vld [vmem:[%s1 + $0x58] sm:$0xf]
  %v50 = vld [vmem:[%s1 + $0x5c] sm:$0xf]
  %v51 = vld [vmem:[%s1 + $0x60] sm:$0xf]
  %v52 = vld [vmem:[%s1 + $0x64] sm:$0xf]
  %v53 = vld [vmem:[%s1 + $0x68] sm:$0xf]
  %v54 = vld [vmem:[%s1 + $0x6c] sm:$0xf]
  %v55 = vld [vmem:[%s1 + $0x70] sm:$0xf]
  %v56 = vld [vmem:[%s1 + $0x74] sm:$0xf]
  %v57 = vld [vmem:[%s1 + $0x78] sm:$0xf]
  %v58 = vld [vmem:[%s1 + $0x7c] sm:$0xf]
  %v59 = vld [vmem:[%s3] sm:$0xff]
  %v60 = vld [vmem:[%s3 + $0x8] sm:$0xff]
  %v61 = vld [vmem:[%s3 + $0x10] sm:$0xff]
  %v62 = vld [vmem:[%s3 + $0x18] sm:$0xff]
  %v63 = vld [vmem:[%s3 + $0x20] sm:$0xff]
  %v64 = vld [vmem:[%s3 + $0x28] sm:$0xff]
  %v65 = vld [vmem:[%s3 + $0x30] sm:$0xff]
  %v66 = vld [vmem:[%s3 + $0x38] sm:$0xff]
  %v67 = vld [vmem:[%s2] sm:$0xff]
  %v68 = vld [vmem:[%s2 + $0x8] sm:$0xff]
  %v69 = vld [vmem:[%s2 + $0x10] sm:$0xff]
  %v70 = vld [vmem:[%s2 + $0x18] sm:$0xff]
  %v71 = vld [vmem:[%s2 + $0x20] sm:$0xff]
  %v72 = vld [vmem:[%s2 + $0x28] sm:$0xff]
  %v73 = vld [vmem:[%s2 + $0x30] sm:$0xff]
  %v74 = vld [vmem:[%s2 + $0x38] sm:$0xff]
  %v75 = vld [vmem:[%s2 + $0x40] sm:$0xff]
  %v76 = vld [vmem:[%s2 + $0x48] sm:$0xff]
  %v77 = vld [vmem:[%s2 + $0x50] sm:$0xff]
  %v78 = vld [vmem:[%s2 + $0x58] sm:$0xff]
  %v79 = vld [vmem:[%s2 + $0x60] sm:$0xff]
  %v80 = vld [vmem:[%s2 + $0x68] sm:$0xff]
  %v81 = vld [vmem:[%s2 + $0x70] sm:$0xff]
  %v82 = vld [vmem:[%s2 + $0x78] sm:$0xff]
  %v83 = vld [vmem:[%s2 + $0x80] sm:$0xff]
  %v84 = vld [vmem:[%s2 + $0x88] sm:$0xff]
  %v85 = vld [vmem:[%s2 + $0x90] sm:$0xff]
  %v86 = vld [vmem:[%s2 + $0x98] sm:$0xff]
  %v87 = vld [vmem:[%s2 + $0xa0] sm:$0xff]
  %v88 = vld [vmem:[%s2 + $0xa8] sm:$0xff]
  %v89 = vld [vmem:[%s2 + $0xb0] sm:$0xff]
  %v90 = vld [vmem:[%s2 + $0xb8] sm:$0xff]
  %v91 = vld [vmem:[%s2 + $0xc0] sm:$0xff]
  %v92 = vld [vmem:[%s2 + $0xc8] sm:$0xff]
  %v93 = vld [vmem:[%s2 + $0xd0] sm:$0xff]
  %v94 = vld [vmem:[%s2 + $0xd8] sm:$0xff]
  %v95 = vld [vmem:[%s2 + $0xe0] sm:$0xff]
  %v96 = vld [vmem:[%s2 + $0xe8] sm:$0xff]
  %v97 = vld [vmem:[%s2 + $0xf0] sm:$0xff]
  %v98 = vld [vmem:[%s2 + $0xf8] sm:$0xff]
  %v99 = vld [vmem:[%s4] sm:$0xff]
  %v100 = vld [vmem:[%s4 + $0x8] sm:$0xff]
  %v101 = vld [vmem:[%s4 + $0x10] sm:$0xff]
  %v102 = vld [vmem:[%s4 + $0x18] sm:$0xff]
  %v103 = vld [vmem:[%s4 + $0x20] sm:$0xff]
  %v104 = vld [vmem:[%s4 + $0x28] sm:$0xff]
  %v105 = vld [vmem:[%s4 + $0x30] sm:$0xff]
  %v106 = vld [vmem:[%s4 + $0x38] sm:$0xff]
  %v107 = vld [vmem:[%s0] sm:$0xf]
  %v108 = vld [vmem:[%s0 + $0x4] sm:$0xf]
  %110 = vset.pattern.permute.xlu0 0
  %111 = vperm.xlu0 %110, %v67
  %v112 = vpop.permute.xlu0 %111
  %115 = vset.pattern.permute.xlu0 0
  %116 = vperm.xlu0 %115, %v68
  %v117 = vpop.permute.xlu0 %116
  %120 = vset.pattern.permute.xlu0 0
  %121 = vperm.xlu0 %120, %v69
  %v122 = vpop.permute.xlu0 %121
  %125 = vset.pattern.permute.xlu0 0
  %126 = vperm.xlu0 %125, %v70
  %v127 = vpop.permute.xlu0 %126
  %130 = vset.pattern.permute.xlu0 0
  %131 = vperm.xlu0 %130, %v71
  %v132 = vpop.permute.xlu0 %131
  %135 = vset.pattern.permute.xlu0 0
  %136 = vperm.xlu0 %135, %v72
  %v137 = vpop.permute.xlu0 %136
  %140 = vset.pattern.permute.xlu0 0
  %141 = vperm.xlu0 %140, %v73
  %v142 = vpop.permute.xlu0 %141
  %145 = vset.pattern.permute.xlu0 0
  %146 = vperm.xlu0 %145, %v74
  %v147 = vpop.permute.xlu0 %146
  %150 = vset.pattern.permute.xlu0 0
  %151 = vperm.xlu0 %150, %v75
  %v152 = vpop.permute.xlu0 %151
  %155 = vset.pattern.permute.xlu0 0
  %156 = vperm.xlu0 %155, %v76
  %v157 = vpop.permute.xlu0 %156
  %160 = vset.pattern.permute.xlu0 0
  %161 = vperm.xlu0 %160, %v77
  %v162 = vpop.permute.xlu0 %161
  %165 = vset.pattern.permute.xlu0 0
  %166 = vperm.xlu0 %165, %v78
  %v167 = vpop.permute.xlu0 %166
  %170 = vset.pattern.permute.xlu0 0
  %171 = vperm.xlu0 %170, %v79
  %v172 = vpop.permute.xlu0 %171
  %175 = vset.pattern.permute.xlu0 0
  %176 = vperm.xlu0 %175, %v80
  %v177 = vpop.permute.xlu0 %176
  %180 = vset.pattern.permute.xlu0 0
  %181 = vperm.xlu0 %180, %v81
  %v182 = vpop.permute.xlu0 %181
  %185 = vset.pattern.permute.xlu0 0
  %186 = vperm.xlu0 %185, %v82
  %v187 = vpop.permute.xlu0 %186
  %190 = vset.pattern.permute.xlu0 0
  %191 = vperm.xlu0 %190, %v83
  %v192 = vpop.permute.xlu0 %191
  %195 = vset.pattern.permute.xlu0 0
  %196 = vperm.xlu0 %195, %v84
  %v197 = vpop.permute.xlu0 %196
  %200 = vset.pattern.permute.xlu0 0
  %201 = vperm.xlu0 %200, %v85
  %v202 = vpop.permute.xlu0 %201
  %205 = vset.pattern.permute.xlu0 0
  %206 = vperm.xlu0 %205, %v86
  %v207 = vpop.permute.xlu0 %206
  %210 = vset.pattern.permute.xlu0 0
  %211 = vperm.xlu0 %210, %v87
  %v212 = vpop.permute.xlu0 %211
  %215 = vset.pattern.permute.xlu0 0
  %216 = vperm.xlu0 %215, %v88
  %v217 = vpop.permute.xlu0 %216
  %220 = vset.pattern.permute.xlu0 0
  %221 = vperm.xlu0 %220, %v89
  %v222 = vpop.permute.xlu0 %221
  %225 = vset.pattern.permute.xlu0 0
  %226 = vperm.xlu0 %225, %v90
  %v227 = vpop.permute.xlu0 %226
  %230 = vset.pattern.permute.xlu0 0
  %231 = vperm.xlu0 %230, %v91
  %v232 = vpop.permute.xlu0 %231
  %235 = vset.pattern.permute.xlu0 0
  %236 = vperm.xlu0 %235, %v92
  %v237 = vpop.permute.xlu0 %236
  %240 = vset.pattern.permute.xlu0 0
  %241 = vperm.xlu0 %240, %v93
  %v242 = vpop.permute.xlu0 %241
  %245 = vset.pattern.permute.xlu0 0
  %246 = vperm.xlu0 %245, %v94
  %v247 = vpop.permute.xlu0 %246
  %250 = vset.pattern.permute.xlu0 0
  %251 = vperm.xlu0 %250, %v95
  %v252 = vpop.permute.xlu0 %251
  %255 = vset.pattern.permute.xlu0 0
  %256 = vperm.xlu0 %255, %v96
  %v257 = vpop.permute.xlu0 %256
  %260 = vset.pattern.permute.xlu0 0
  %261 = vperm.xlu0 %260, %v97
  %v262 = vpop.permute.xlu0 %261
  %265 = vset.pattern.permute.xlu0 0
  %266 = vperm.xlu0 %265, %v98
  %v267 = vpop.permute.xlu0 %266
  %v301 = vunpack.c.l.b16 %v27
  %v302 = vunpack.c.l.b16 %v28
  %v303 = vunpack.c.l.b16 %v29
  %v304 = vunpack.c.l.b16 %v30
  %v305 = vunpack.c.l.b16 %v31
  %v306 = vunpack.c.l.b16 %v32
  %v307 = vunpack.c.l.b16 %v33
  %v308 = vunpack.c.l.b16 %v34
  %v309 = vunpack.c.l.b16 %v35
  %v310 = vunpack.c.l.b16 %v36
  %v311 = vunpack.c.l.b16 %v37
  %v312 = vunpack.c.l.b16 %v38
  %v313 = vunpack.c.l.b16 %v39
  %v314 = vunpack.c.l.b16 %v40
  %v315 = vunpack.c.l.b16 %v41
  %v316 = vunpack.c.l.b16 %v42
  %v317 = vunpack.c.l.b16 %v43
  %v318 = vunpack.c.l.b16 %v44
  %v319 = vunpack.c.l.b16 %v45
  %v320 = vunpack.c.l.b16 %v46
  %v321 = vunpack.c.l.b16 %v47
  %v322 = vunpack.c.l.b16 %v48
  %v323 = vunpack.c.l.b16 %v49
  %v324 = vunpack.c.l.b16 %v50
  %v325 = vunpack.c.l.b16 %v51
  %v326 = vunpack.c.l.b16 %v52
  %v327 = vunpack.c.l.b16 %v53
  %v328 = vunpack.c.l.b16 %v54
  %v329 = vunpack.c.l.b16 %v55
  %v330 = vunpack.c.l.b16 %v56
  %v331 = vunpack.c.l.b16 %v57
  %v332 = vunpack.c.l.b16 %v58
  %v333 = vpack.c.b16 %v302, %v301
  %v334 = vpack.c.b16 %v304, %v303
  %v335 = vpack.c.b16 %v306, %v305
  %v336 = vpack.c.b16 %v308, %v307
  %v337 = vpack.c.b16 %v310, %v309
  %v338 = vpack.c.b16 %v312, %v311
  %v339 = vpack.c.b16 %v314, %v313
  %v340 = vpack.c.b16 %v316, %v315
  %v341 = vpack.c.b16 %v318, %v317
  %v342 = vpack.c.b16 %v320, %v319
  %v343 = vpack.c.b16 %v322, %v321
  %v344 = vpack.c.b16 %v324, %v323
  %v345 = vpack.c.b16 %v326, %v325
  %v346 = vpack.c.b16 %v328, %v327
  %v347 = vpack.c.b16 %v330, %v329
  %v348 = vpack.c.b16 %v332, %v331
  %v351 = vunpack.c.l.b16 %v107
  %v352 = vunpack.c.l.b16 %v108
  %v353 = vpack.c.b16 %v352, %v351
  %vm355 = vcmask 130048
  %v357 = vsel %vm355, %v333, 0
  %v360 = vsel %vm355, %v334, 0
  %v363 = vsel %vm355, %v335, 0
  %v366 = vsel %vm355, %v336, 0
  %v369 = vsel %vm355, %v337, 0
  %v372 = vsel %vm355, %v338, 0
  %v375 = vsel %vm355, %v339, 0
  %v378 = vsel %vm355, %v340, 0
  %v381 = vsel %vm355, %v341, 0
  %v384 = vsel %vm355, %v342, 0
  %v387 = vsel %vm355, %v343, 0
  %v390 = vsel %vm355, %v344, 0
  %v393 = vsel %vm355, %v345, 0
  %v396 = vsel %vm355, %v346, 0
  %v399 = vsel %vm355, %v347, 0
  %v402 = vsel %vm355, %v348, 0
  %404 = vmatpush.bf16.msra.mxu0 0
  %405 = vmatpush.bf16.msra.mxu0 0
  %406 = vmatpush.bf16.msra.mxu0 0
  %407 = vmatpush.bf16.msra.mxu0 0
  %408 = vmatpush.bf16.msra.mxu0 0
  %409 = vmatpush.bf16.msra.mxu0 0
  %410 = vmatpush.bf16.msra.mxu0 0
  %411 = vmatpush.bf16.msra.mxu0 %v353
  %412 = vmatmul.bf16.gmra.mxu0 %v357
  %v413 = vpop.f32.mrf.mxu0
  %v414 = vadd.f32 %v112, %v413
  %v415 = vpop.f32.mrf.mxu0
  %v416 = vadd.f32 %v117, %v415
  %417 = vmatmul.bf16.gmra.mxu0 %v360
  %v418 = vpop.f32.mrf.mxu0
  %v419 = vadd.f32 %v122, %v418
  %v420 = vpop.f32.mrf.mxu0
  %v421 = vadd.f32 %v127, %v420
  %422 = vmatmul.bf16.gmra.mxu0 %v363
  %v423 = vpop.f32.mrf.mxu0
  %v424 = vadd.f32 %v132, %v423
  %v425 = vpop.f32.mrf.mxu0
  %v426 = vadd.f32 %v137, %v425
  %427 = vmatmul.bf16.gmra.mxu0 %v366
  %v428 = vpop.f32.mrf.mxu0
  %v429 = vadd.f32 %v142, %v428
  %v430 = vpop.f32.mrf.mxu0
  %v431 = vadd.f32 %v147, %v430
  %432 = vmatmul.bf16.gmra.mxu0 %v369
  %v433 = vpop.f32.mrf.mxu0
  %v434 = vadd.f32 %v152, %v433
  %v435 = vpop.f32.mrf.mxu0
  %v436 = vadd.f32 %v157, %v435
  %437 = vmatmul.bf16.gmra.mxu0 %v372
  %v438 = vpop.f32.mrf.mxu0
  %v439 = vadd.f32 %v162, %v438
  %v440 = vpop.f32.mrf.mxu0
  %v441 = vadd.f32 %v167, %v440
  %442 = vmatmul.bf16.gmra.mxu0 %v375
  %v443 = vpop.f32.mrf.mxu0
  %v444 = vadd.f32 %v172, %v443
  %v445 = vpop.f32.mrf.mxu0
  %v446 = vadd.f32 %v177, %v445
  %447 = vmatmul.bf16.gmra.mxu0 %v378
  %v448 = vpop.f32.mrf.mxu0
  %v449 = vadd.f32 %v182, %v448
  %v450 = vpop.f32.mrf.mxu0
  %v451 = vadd.f32 %v187, %v450
  %452 = vmatmul.bf16.gmra.mxu0 %v381
  %v453 = vpop.f32.mrf.mxu0
  %v454 = vadd.f32 %v192, %v453
  %v455 = vpop.f32.mrf.mxu0
  %v456 = vadd.f32 %v197, %v455
  %457 = vmatmul.bf16.gmra.mxu0 %v384
  %v458 = vpop.f32.mrf.mxu0
  %v459 = vadd.f32 %v202, %v458
  %v460 = vpop.f32.mrf.mxu0
  %v461 = vadd.f32 %v207, %v460
  %462 = vmatmul.bf16.gmra.mxu0 %v387
  %v463 = vpop.f32.mrf.mxu0
  %v464 = vadd.f32 %v212, %v463
  %v465 = vpop.f32.mrf.mxu0
  %v466 = vadd.f32 %v217, %v465
  %467 = vmatmul.bf16.gmra.mxu0 %v390
  %v468 = vpop.f32.mrf.mxu0
  %v469 = vadd.f32 %v222, %v468
  %v470 = vpop.f32.mrf.mxu0
  %v471 = vadd.f32 %v227, %v470
  %472 = vmatmul.bf16.gmra.mxu0 %v393
  %v473 = vpop.f32.mrf.mxu0
  %v474 = vadd.f32 %v232, %v473
  %v475 = vpop.f32.mrf.mxu0
  %v476 = vadd.f32 %v237, %v475
  %477 = vmatmul.bf16.gmra.mxu0 %v396
  %v478 = vpop.f32.mrf.mxu0
  %v479 = vadd.f32 %v242, %v478
  %v480 = vpop.f32.mrf.mxu0
  %v481 = vadd.f32 %v247, %v480
  %482 = vmatmul.bf16.gmra.mxu0 %v399
  %v483 = vpop.f32.mrf.mxu0
  %v484 = vadd.f32 %v252, %v483
  %v485 = vpop.f32.mrf.mxu0
  %v486 = vadd.f32 %v257, %v485
  %487 = vmatmul.bf16.gmra.mxu0 %v402
  %v488 = vpop.f32.mrf.mxu0
  %v489 = vadd.f32 %v262, %v488
  %v490 = vpop.f32.mrf.mxu0
  %v491 = vadd.f32 %v267, %v490
  %492 = vdwg.mxu0
  %v493 = vmax.f32 %v414, 0.0
  %v494 = vmax.f32 %v416, 0.0
  %v495 = vmax.f32 %v419, 0.0
  %v496 = vmax.f32 %v421, 0.0
  %v497 = vmax.f32 %v424, 0.0
  %v498 = vmax.f32 %v426, 0.0
  %v499 = vmax.f32 %v429, 0.0
  %v500 = vmax.f32 %v431, 0.0
  %v501 = vmax.f32 %v434, 0.0
  %v502 = vmax.f32 %v436, 0.0
  %v503 = vmax.f32 %v439, 0.0
  %v504 = vmax.f32 %v441, 0.0
  %v505 = vmax.f32 %v444, 0.0
  %v506 = vmax.f32 %v446, 0.0
  %v507 = vmax.f32 %v449, 0.0
  %v508 = vmax.f32 %v451, 0.0
  %v509 = vmax.f32 %v454, 0.0
  %v510 = vmax.f32 %v456, 0.0
  %v511 = vmax.f32 %v459, 0.0
  %v512 = vmax.f32 %v461, 0.0
  %v513 = vmax.f32 %v464, 0.0
  %v514 = vmax.f32 %v466, 0.0
  %v515 = vmax.f32 %v469, 0.0
  %v516 = vmax.f32 %v471, 0.0
  %v517 = vmax.f32 %v474, 0.0
  %v518 = vmax.f32 %v476, 0.0
  %v519 = vmax.f32 %v479, 0.0
  %v520 = vmax.f32 %v481, 0.0
  %v521 = vmax.f32 %v484, 0.0
  %v522 = vmax.f32 %v486, 0.0
  %v523 = vmax.f32 %v489, 0.0
  %v524 = vmax.f32 %v491, 0.0
  %v525 = vpack.c.bf16 %v494, %v493
  %v526 = vpack.c.bf16 %v496, %v495
  %v527 = vpack.c.bf16 %v498, %v497
  %v528 = vpack.c.bf16 %v500, %v499
  %v529 = vpack.c.bf16 %v502, %v501
  %v530 = vpack.c.bf16 %v504, %v503
  %v531 = vpack.c.bf16 %v506, %v505
  %v532 = vpack.c.bf16 %v508, %v507
  %v533 = vpack.c.bf16 %v510, %v509
  %v534 = vpack.c.bf16 %v512, %v511
  %v535 = vpack.c.bf16 %v514, %v513
  %v536 = vpack.c.bf16 %v516, %v515
  %v537 = vpack.c.bf16 %v518, %v517
  %v538 = vpack.c.bf16 %v520, %v519
  %v539 = vpack.c.bf16 %v522, %v521
  %v540 = vpack.c.bf16 %v524, %v523
  %542 = vset.pattern.permute.xlu0 0
  %543 = vperm.xlu0 %542, %v99
  %v544 = vpop.permute.xlu0 %543
  %547 = vset.pattern.permute.xlu0 0
  %548 = vperm.xlu0 %547, %v100
  %v549 = vpop.permute.xlu0 %548
  %552 = vset.pattern.permute.xlu0 0
  %553 = vperm.xlu0 %552, %v101
  %v554 = vpop.permute.xlu0 %553
  %557 = vset.pattern.permute.xlu0 0
  %558 = vperm.xlu0 %557, %v102
  %v559 = vpop.permute.xlu0 %558
  %562 = vset.pattern.permute.xlu0 0
  %563 = vperm.xlu0 %562, %v103
  %v564 = vpop.permute.xlu0 %563
  %567 = vset.pattern.permute.xlu0 0
  %568 = vperm.xlu0 %567, %v104
  %v569 = vpop.permute.xlu0 %568
  %572 = vset.pattern.permute.xlu0 0
  %573 = vperm.xlu0 %572, %v105
  %v574 = vpop.permute.xlu0 %573
  %577 = vset.pattern.permute.xlu0 0
  %578 = vperm.xlu0 %577, %v106
  %v579 = vpop.permute.xlu0 %578
  %v589 = vunpack.c.l.b16 %v59
  %v590 = vunpack.c.h.b16 %v59
  %v591 = vunpack.c.l.b16 %v60
  %v592 = vunpack.c.h.b16 %v60
  %v593 = vunpack.c.l.b16 %v61
  %v594 = vunpack.c.h.b16 %v61
  %v595 = vunpack.c.l.b16 %v62
  %v596 = vunpack.c.h.b16 %v62
  %v597 = vunpack.c.l.b16 %v63
  %v598 = vunpack.c.h.b16 %v63
  %v599 = vunpack.c.l.b16 %v64
  %v600 = vunpack.c.h.b16 %v64
  %v601 = vunpack.c.l.b16 %v65
  %v602 = vunpack.c.h.b16 %v65
  %v603 = vunpack.c.l.b16 %v66
  %v604 = vunpack.c.h.b16 %v66
  %v605 = vpack.c.b16 %v591, %v589
  %v606 = vpack.c.b16 %v592, %v590
  %v607 = vpack.c.b16 %v595, %v593
  %v608 = vpack.c.b16 %v596, %v594
  %v609 = vpack.c.b16 %v599, %v597
  %v610 = vpack.c.b16 %v600, %v598
  %v611 = vpack.c.b16 %v603, %v601
  %v612 = vpack.c.b16 %v604, %v602
  %621 = vmatpush.bf16.msra.mxu0 %v532
  %622 = vmatpush.bf16.msra.mxu0 %v531
  %623 = vmatpush.bf16.msra.mxu0 %v530
  %624 = vmatpush.bf16.msra.mxu0 %v529
  %625 = vmatpush.bf16.msra.mxu0 %v528
  %626 = vmatpush.bf16.msra.mxu0 %v527
  %627 = vmatpush.bf16.msra.mxu0 %v526
  %628 = vmatpush.bf16.msra.mxu0 %v525
  %629 = vmatmul.bf16.gmra.mxu0 %v605
  %v630 = vpop.f32.mrf.mxu0
  %v631 = vadd.f32 %v544, %v630
  %v632 = vpop.f32.mrf.mxu0
  %v633 = vadd.f32 %v549, %v632
  %634 = vmatmul.bf16.gmra.mxu0 %v607
  %v635 = vpop.f32.mrf.mxu0
  %v636 = vadd.f32 %v554, %v635
  %v637 = vpop.f32.mrf.mxu0
  %v638 = vadd.f32 %v559, %v637
  %639 = vmatmul.bf16.gmra.mxu0 %v609
  %v640 = vpop.f32.mrf.mxu0
  %v641 = vadd.f32 %v564, %v640
  %v642 = vpop.f32.mrf.mxu0
  %v643 = vadd.f32 %v569, %v642
  %644 = vmatmul.bf16.gmra.mxu0 %v611
  %v645 = vpop.f32.mrf.mxu0
  %v646 = vadd.f32 %v574, %v645
  %v647 = vpop.f32.mrf.mxu0
  %v648 = vadd.f32 %v579, %v647
  %649 = vdwg.mxu0
  %650 = vmatpush.bf16.msra.mxu0 %v540
  %651 = vmatpush.bf16.msra.mxu0 %v539
  %652 = vmatpush.bf16.msra.mxu0 %v538
  %653 = vmatpush.bf16.msra.mxu0 %v537
  %654 = vmatpush.bf16.msra.mxu0 %v536
  %655 = vmatpush.bf16.msra.mxu0 %v535
  %656 = vmatpush.bf16.msra.mxu0 %v534
  %657 = vmatpush.bf16.msra.mxu0 %v533
  %658 = vmatmul.bf16.gmra.mxu0 %v606
  %v659 = vpop.f32.mrf.mxu0
  %v660 = vadd.f32 %v631, %v659
  %v661 = vpop.f32.mrf.mxu0
  %v662 = vadd.f32 %v633, %v661
  %663 = vmatmul.bf16.gmra.mxu0 %v608
  %v664 = vpop.f32.mrf.mxu0
  %v665 = vadd.f32 %v636, %v664
  %v666 = vpop.f32.mrf.mxu0
  %v667 = vadd.f32 %v638, %v666
  %668 = vmatmul.bf16.gmra.mxu0 %v610
  %v669 = vpop.f32.mrf.mxu0
  %v670 = vadd.f32 %v641, %v669
  %v671 = vpop.f32.mrf.mxu0
  %v672 = vadd.f32 %v643, %v671
  %673 = vmatmul.bf16.gmra.mxu0 %v612
  %v674 = vpop.f32.mrf.mxu0
  %v675 = vadd.f32 %v646, %v674
  %v676 = vpop.f32.mrf.mxu0
  %v677 = vadd.f32 %v648, %v676
  %678 = vdwg.mxu0
  %v679 = vmax.f32 %v660, 0.0
  %v680 = vmax.f32 %v662, 0.0
  %v681 = vmax.f32 %v665, 0.0
  %v682 = vmax.f32 %v667, 0.0
  %v683 = vmax.f32 %v670, 0.0
  %v684 = vmax.f32 %v672, 0.0
  %v685 = vmax.f32 %v675, 0.0
  %v686 = vmax.f32 %v677, 0.0
  %v687 = vpack.c.bf16 %v679, %v679
  %v688 = vpack.c.bf16 %v680, %v680
  %v689 = vpack.c.bf16 %v681, %v681
  %v690 = vpack.c.bf16 %v682, %v682
  %v691 = vpack.c.bf16 %v683, %v683
  %v692 = vpack.c.bf16 %v684, %v684
  %v693 = vpack.c.bf16 %v685, %v685
  %v694 = vpack.c.bf16 %v686, %v686
  %vm695 = vcmask 60416
  %696 = vst.msk [vmem:[#allocation2] sm:$0xf] %vm695, %v687
  %697 = vst.msk [vmem:[#allocation2 + $0x4] sm:$0xf] %vm695, %v688
  %698 = vst.msk [vmem:[#allocation2 + $0x8] sm:$0xf] %vm695, %v689
  %699 = vst.msk [vmem:[#allocation2 + $0xc] sm:$0xf] %vm695, %v690
  %700 = vst.msk [vmem:[#allocation2 + $0x10] sm:$0xf] %vm695, %v691
  %701 = vst.msk [vmem:[#allocation2 + $0x14] sm:$0xf] %vm695, %v692
  %702 = vst.msk [vmem:[#allocation2 + $0x18] sm:$0xf] %vm695, %v693
  %703 = vst.msk [vmem:[#allocation2 + $0x1c] sm:$0xf] %vm695, %v694
  %s704 = scalar_lea.vmem %s0, 8
  %v705 = vld [vmem:[%s704] sm:$0xf]
  %v706 = vld [vmem:[%s704 + $0x4] sm:$0xf]
  %v709 = vunpack.c.l.b16 %v705
  %v710 = vunpack.c.l.b16 %v706
  %v711 = vpack.c.b16 %v710, %v709
  %713 = vmatpush.bf16.msra.mxu0 0
  %714 = vmatpush.bf16.msra.mxu0 0
  %715 = vmatpush.bf16.msra.mxu0 0
  %716 = vmatpush.bf16.msra.mxu0 0
  %717 = vmatpush.bf16.msra.mxu0 0
  %718 = vmatpush.bf16.msra.mxu0 0
  %719 = vmatpush.bf16.msra.mxu0 0
  %720 = vmatpush.bf16.msra.mxu0 %v711
  %721 = vmatmul.bf16.gmra.mxu0 %v357
  %v722 = vpop.f32.mrf.mxu0
  %v723 = vadd.f32 %v112, %v722
  %v724 = vpop.f32.mrf.mxu0
  %v725 = vadd.f32 %v117, %v724
  %726 = vmatmul.bf16.gmra.mxu0 %v360
  %v727 = vpop.f32.mrf.mxu0
  %v728 = vadd.f32 %v122, %v727
  %v729 = vpop.f32.mrf.mxu0
  %v730 = vadd.f32 %v127, %v729
  %731 = vmatmul.bf16.gmra.mxu0 %v363
  %v732 = vpop.f32.mrf.mxu0
  %v733 = vadd.f32 %v132, %v732
  %v734 = vpop.f32.mrf.mxu0
  %v735 = vadd.f32 %v137, %v734
  %736 = vmatmul.bf16.gmra.mxu0 %v366
  %v737 = vpop.f32.mrf.mxu0
  %v738 = vadd.f32 %v142, %v737
  %v739 = vpop.f32.mrf.mxu0
  %v740 = vadd.f32 %v147, %v739
  %741 = vmatmul.bf16.gmra.mxu0 %v369
  %v742 = vpop.f32.mrf.mxu0
  %v743 = vadd.f32 %v152, %v742
  %v744 = vpop.f32.mrf.mxu0
  %v745 = vadd.f32 %v157, %v744
  %746 = vmatmul.bf16.gmra.mxu0 %v372
  %v747 = vpop.f32.mrf.mxu0
  %v748 = vadd.f32 %v162, %v747
  %v749 = vpop.f32.mrf.mxu0
  %v750 = vadd.f32 %v167, %v749
  %751 = vmatmul.bf16.gmra.mxu0 %v375
  %v752 = vpop.f32.mrf.mxu0
  %v753 = vadd.f32 %v172, %v752
  %v754 = vpop.f32.mrf.mxu0
  %v755 = vadd.f32 %v177, %v754
  %756 = vmatmul.bf16.gmra.mxu0 %v378
  %v757 = vpop.f32.mrf.mxu0
  %v758 = vadd.f32 %v182, %v757
  %v759 = vpop.f32.mrf.mxu0
  %v760 = vadd.f32 %v187, %v759
  %761 = vmatmul.bf16.gmra.mxu0 %v381
  %v762 = vpop.f32.mrf.mxu0
  %v763 = vadd.f32 %v192, %v762
  %v764 = vpop.f32.mrf.mxu0
  %v765 = vadd.f32 %v197, %v764
  %766 = vmatmul.bf16.gmra.mxu0 %v384
  %v767 = vpop.f32.mrf.mxu0
  %v768 = vadd.f32 %v202, %v767
  %v769 = vpop.f32.mrf.mxu0
  %v770 = vadd.f32 %v207, %v769
  %771 = vmatmul.bf16.gmra.mxu0 %v387
  %v772 = vpop.f32.mrf.mxu0
  %v773 = vadd.f32 %v212, %v772
  %v774 = vpop.f32.mrf.mxu0
  %v775 = vadd.f32 %v217, %v774
  %776 = vmatmul.bf16.gmra.mxu0 %v390
  %v777 = vpop.f32.mrf.mxu0
  %v778 = vadd.f32 %v222, %v777
  %v779 = vpop.f32.mrf.mxu0
  %v780 = vadd.f32 %v227, %v779
  %781 = vmatmul.bf16.gmra.mxu0 %v393
  %v782 = vpop.f32.mrf.mxu0
  %v783 = vadd.f32 %v232, %v782
  %v784 = vpop.f32.mrf.mxu0
  %v785 = vadd.f32 %v237, %v784
  %786 = vmatmul.bf16.gmra.mxu0 %v396
  %v787 = vpop.f32.mrf.mxu0
  %v788 = vadd.f32 %v242, %v787
  %v789 = vpop.f32.mrf.mxu0
  %v790 = vadd.f32 %v247, %v789
  %791 = vmatmul.bf16.gmra.mxu0 %v399
  %v792 = vpop.f32.mrf.mxu0
  %v793 = vadd.f32 %v252, %v792
  %v794 = vpop.f32.mrf.mxu0
  %v795 = vadd.f32 %v257, %v794
  %796 = vmatmul.bf16.gmra.mxu0 %v402
  %v797 = vpop.f32.mrf.mxu0
  %v798 = vadd.f32 %v262, %v797
  %v799 = vpop.f32.mrf.mxu0
  %v800 = vadd.f32 %v267, %v799
  %801 = vdwg.mxu0
  %v802 = vmax.f32 %v723, 0.0
  %v803 = vmax.f32 %v725, 0.0
  %v804 = vmax.f32 %v728, 0.0
  %v805 = vmax.f32 %v730, 0.0
  %v806 = vmax.f32 %v733, 0.0
  %v807 = vmax.f32 %v735, 0.0
  %v808 = vmax.f32 %v738, 0.0
  %v809 = vmax.f32 %v740, 0.0
  %v810 = vmax.f32 %v743, 0.0
  %v811 = vmax.f32 %v745, 0.0
  %v812 = vmax.f32 %v748, 0.0
  %v813 = vmax.f32 %v750, 0.0
  %v814 = vmax.f32 %v753, 0.0
  %v815 = vmax.f32 %v755, 0.0
  %v816 = vmax.f32 %v758, 0.0
  %v817 = vmax.f32 %v760, 0.0
  %v818 = vmax.f32 %v763, 0.0
  %v819 = vmax.f32 %v765, 0.0
  %v820 = vmax.f32 %v768, 0.0
  %v821 = vmax.f32 %v770, 0.0
  %v822 = vmax.f32 %v773, 0.0
  %v823 = vmax.f32 %v775, 0.0
  %v824 = vmax.f32 %v778, 0.0
  %v825 = vmax.f32 %v780, 0.0
  %v826 = vmax.f32 %v783, 0.0
  %v827 = vmax.f32 %v785, 0.0
  %v828 = vmax.f32 %v788, 0.0
  %v829 = vmax.f32 %v790, 0.0
  %v830 = vmax.f32 %v793, 0.0
  %v831 = vmax.f32 %v795, 0.0
  %v832 = vmax.f32 %v798, 0.0
  %v833 = vmax.f32 %v800, 0.0
  %v834 = vpack.c.bf16 %v803, %v802
  %v835 = vpack.c.bf16 %v805, %v804
  %v836 = vpack.c.bf16 %v807, %v806
  %v837 = vpack.c.bf16 %v809, %v808
  %v838 = vpack.c.bf16 %v811, %v810
  %v839 = vpack.c.bf16 %v813, %v812
  %v840 = vpack.c.bf16 %v815, %v814
  %v841 = vpack.c.bf16 %v817, %v816
  %v842 = vpack.c.bf16 %v819, %v818
  %v843 = vpack.c.bf16 %v821, %v820
  %v844 = vpack.c.bf16 %v823, %v822
  %v845 = vpack.c.bf16 %v825, %v824
  %v846 = vpack.c.bf16 %v827, %v826
  %v847 = vpack.c.bf16 %v829, %v828
  %v848 = vpack.c.bf16 %v831, %v830
  %v849 = vpack.c.bf16 %v833, %v832
  %850 = vmatpush.bf16.msra.mxu0 %v841
  %851 = vmatpush.bf16.msra.mxu0 %v840
  %852 = vmatpush.bf16.msra.mxu0 %v839
  %853 = vmatpush.bf16.msra.mxu0 %v838
  %854 = vmatpush.bf16.msra.mxu0 %v837
  %855 = vmatpush.bf16.msra.mxu0 %v836
  %856 = vmatpush.bf16.msra.mxu0 %v835
  %857 = vmatpush.bf16.msra.mxu0 %v834
  %858 = vmatmul.bf16.gmra.mxu0 %v605
  %v859 = vpop.f32.mrf.mxu0
  %v860 = vadd.f32 %v544, %v859
  %v861 = vpop.f32.mrf.mxu0
  %v862 = vadd.f32 %v549, %v861
  %863 = vmatmul.bf16.gmra.mxu0 %v607
  %v864 = vpop.f32.mrf.mxu0
  %v865 = vadd.f32 %v554, %v864
  %v866 = vpop.f32.mrf.mxu0
  %v867 = vadd.f32 %v559, %v866
  %868 = vmatmul.bf16.gmra.mxu0 %v609
  %v869 = vpop.f32.mrf.mxu0
  %v870 = vadd.f32 %v564, %v869
  %v871 = vpop.f32.mrf.mxu0
  %v872 = vadd.f32 %v569, %v871
  %873 = vmatmul.bf16.gmra.mxu0 %v611
  %v874 = vpop.f32.mrf.mxu0
  %v875 = vadd.f32 %v574, %v874
  %v876 = vpop.f32.mrf.mxu0
  %v877 = vadd.f32 %v579, %v876
  %878 = vdwg.mxu0
  %879 = vmatpush.bf16.msra.mxu0 %v849
  %880 = vmatpush.bf16.msra.mxu0 %v848
  %881 = vmatpush.bf16.msra.mxu0 %v847
  %882 = vmatpush.bf16.msra.mxu0 %v846
  %883 = vmatpush.bf16.msra.mxu0 %v845
  %884 = vmatpush.bf16.msra.mxu0 %v844
  %885 = vmatpush.bf16.msra.mxu0 %v843
  %886 = vmatpush.bf16.msra.mxu0 %v842
  %887 = vmatmul.bf16.gmra.mxu0 %v606
  %v888 = vpop.f32.mrf.mxu0
  %v889 = vadd.f32 %v860, %v888
  %v890 = vpop.f32.mrf.mxu0
  %v891 = vadd.f32 %v862, %v890
  %892 = vmatmul.bf16.gmra.mxu0 %v608
  %v893 = vpop.f32.mrf.mxu0
  %v894 = vadd.f32 %v865, %v893
  %v895 = vpop.f32.mrf.mxu0
  %v896 = vadd.f32 %v867, %v895
  %897 = vmatmul.bf16.gmra.mxu0 %v610
  %v898 = vpop.f32.mrf.mxu0
  %v899 = vadd.f32 %v870, %v898
  %v900 = vpop.f32.mrf.mxu0
  %v901 = vadd.f32 %v872, %v900
  %902 = vmatmul.bf16.gmra.mxu0 %v612
  %v903 = vpop.f32.mrf.mxu0
  %v904 = vadd.f32 %v875, %v903
  %v905 = vpop.f32.mrf.mxu0
  %v906 = vadd.f32 %v877, %v905
  %907 = vdwg.mxu0
  %v908 = vmax.f32 %v889, 0.0
  %v909 = vmax.f32 %v891, 0.0
  %v910 = vmax.f32 %v894, 0.0
  %v911 = vmax.f32 %v896, 0.0
  %v912 = vmax.f32 %v899, 0.0
  %v913 = vmax.f32 %v901, 0.0
  %v914 = vmax.f32 %v904, 0.0
  %v915 = vmax.f32 %v906, 0.0
  %v916 = vpack.c.bf16 %v908, %v908
  %v917 = vpack.c.bf16 %v909, %v909
  %v918 = vpack.c.bf16 %v910, %v910
  %v919 = vpack.c.bf16 %v911, %v911
  %v920 = vpack.c.bf16 %v912, %v912
  %v921 = vpack.c.bf16 %v913, %v913
  %v922 = vpack.c.bf16 %v914, %v914
  %v923 = vpack.c.bf16 %v915, %v915
  %924 = vst.msk [vmem:[#allocation2 + $0x20] sm:$0xf] %vm695, %v916
  %925 = vst.msk [vmem:[#allocation2 + $0x24] sm:$0xf] %vm695, %v917
  %926 = vst.msk [vmem:[#allocation2 + $0x28] sm:$0xf] %vm695, %v918
  %927 = vst.msk [vmem:[#allocation2 + $0x2c] sm:$0xf] %vm695, %v919
  %928 = vst.msk [vmem:[#allocation2 + $0x30] sm:$0xf] %vm695, %v920
  %929 = vst.msk [vmem:[#allocation2 + $0x34] sm:$0xf] %vm695, %v921
  %930 = vst.msk [vmem:[#allocation2 + $0x38] sm:$0xf] %vm695, %v922
  %931 = vst.msk [vmem:[#allocation2 + $0x3c] sm:$0xf] %vm695, %v923
  %s932 = scalar_lea.vmem %s0, 16
  %v933 = vld [vmem:[%s932] sm:$0xf]
  %v934 = vld [vmem:[%s932 + $0x4] sm:$0xf]
  %v937 = vunpack.c.l.b16 %v933
  %v938 = vunpack.c.l.b16 %v934
  %v939 = vpack.c.b16 %v938, %v937
  %941 = vmatpush.bf16.msra.mxu0 0
  %942 = vmatpush.bf16.msra.mxu0 0
  %943 = vmatpush.bf16.msra.mxu0 0
  %944 = vmatpush.bf16.msra.mxu0 0
  %945 = vmatpush.bf16.msra.mxu0 0
  %946 = vmatpush.bf16.msra.mxu0 0
  %947 = vmatpush.bf16.msra.mxu0 0
  %948 = vmatpush.bf16.msra.mxu0 %v939
  %949 = vmatmul.bf16.gmra.mxu0 %v357
  %v950 = vpop.f32.mrf.mxu0
  %v951 = vadd.f32 %v112, %v950
  %v952 = vpop.f32.mrf.mxu0
  %v953 = vadd.f32 %v117, %v952
  %954 = vmatmul.bf16.gmra.mxu0 %v360
  %v955 = vpop.f32.mrf.mxu0
  %v956 = vadd.f32 %v122, %v955
  %v957 = vpop.f32.mrf.mxu0
  %v958 = vadd.f32 %v127, %v957
  %959 = vmatmul.bf16.gmra.mxu0 %v363
  %v960 = vpop.f32.mrf.mxu0
  %v961 = vadd.f32 %v132, %v960
  %v962 = vpop.f32.mrf.mxu0
  %v963 = vadd.f32 %v137, %v962
  %964 = vmatmul.bf16.gmra.mxu0 %v366
  %v965 = vpop.f32.mrf.mxu0
  %v966 = vadd.f32 %v142, %v965
  %v967 = vpop.f32.mrf.mxu0
  %v968 = vadd.f32 %v147, %v967
  %969 = vmatmul.bf16.gmra.mxu0 %v369
  %v970 = vpop.f32.mrf.mxu0
  %v971 = vadd.f32 %v152, %v970
  %v972 = vpop.f32.mrf.mxu0
  %v973 = vadd.f32 %v157, %v972
  %974 = vmatmul.bf16.gmra.mxu0 %v372
  %v975 = vpop.f32.mrf.mxu0
  %v976 = vadd.f32 %v162, %v975
  %v977 = vpop.f32.mrf.mxu0
  %v978 = vadd.f32 %v167, %v977
  %979 = vmatmul.bf16.gmra.mxu0 %v375
  %v980 = vpop.f32.mrf.mxu0
  %v981 = vadd.f32 %v172, %v980
  %v982 = vpop.f32.mrf.mxu0
  %v983 = vadd.f32 %v177, %v982
  %984 = vmatmul.bf16.gmra.mxu0 %v378
  %v985 = vpop.f32.mrf.mxu0
  %v986 = vadd.f32 %v182, %v985
  %v987 = vpop.f32.mrf.mxu0
  %v988 = vadd.f32 %v187, %v987
  %989 = vmatmul.bf16.gmra.mxu0 %v381
  %v990 = vpop.f32.mrf.mxu0
  %v991 = vadd.f32 %v192, %v990
  %v992 = vpop.f32.mrf.mxu0
  %v993 = vadd.f32 %v197, %v992
  %994 = vmatmul.bf16.gmra.mxu0 %v384
  %v995 = vpop.f32.mrf.mxu0
  %v996 = vadd.f32 %v202, %v995
  %v997 = vpop.f32.mrf.mxu0
  %v998 = vadd.f32 %v207, %v997
  %999 = vmatmul.bf16.gmra.mxu0 %v387
  %v1000 = vpop.f32.mrf.mxu0
  %v1001 = vadd.f32 %v212, %v1000
  %v1002 = vpop.f32.mrf.mxu0
  %v1003 = vadd.f32 %v217, %v1002
  %1004 = vmatmul.bf16.gmra.mxu0 %v390
  %v1005 = vpop.f32.mrf.mxu0
  %v1006 = vadd.f32 %v222, %v1005
  %v1007 = vpop.f32.mrf.mxu0
  %v1008 = vadd.f32 %v227, %v1007
  %1009 = vmatmul.bf16.gmra.mxu0 %v393
  %v1010 = vpop.f32.mrf.mxu0
  %v1011 = vadd.f32 %v232, %v1010
  %v1012 = vpop.f32.mrf.mxu0
  %v1013 = vadd.f32 %v237, %v1012
  %1014 = vmatmul.bf16.gmra.mxu0 %v396
  %v1015 = vpop.f32.mrf.mxu0
  %v1016 = vadd.f32 %v242, %v1015
  %v1017 = vpop.f32.mrf.mxu0
  %v1018 = vadd.f32 %v247, %v1017
  %1019 = vmatmul.bf16.gmra.mxu0 %v399
  %v1020 = vpop.f32.mrf.mxu0
  %v1021 = vadd.f32 %v252, %v1020
  %v1022 = vpop.f32.mrf.mxu0
  %v1023 = vadd.f32 %v257, %v1022
  %1024 = vmatmul.bf16.gmra.mxu0 %v402
  %v1025 = vpop.f32.mrf.mxu0
  %v1026 = vadd.f32 %v262, %v1025
  %v1027 = vpop.f32.mrf.mxu0
  %v1028 = vadd.f32 %v267, %v1027
  %1029 = vdwg.mxu0
  %v1030 = vmax.f32 %v951, 0.0
  %v1031 = vmax.f32 %v953, 0.0
  %v1032 = vmax.f32 %v956, 0.0
  %v1033 = vmax.f32 %v958, 0.0
  %v1034 = vmax.f32 %v961, 0.0
  %v1035 = vmax.f32 %v963, 0.0
  %v1036 = vmax.f32 %v966, 0.0
  %v1037 = vmax.f32 %v968, 0.0
  %v1038 = vmax.f32 %v971, 0.0
  %v1039 = vmax.f32 %v973, 0.0
  %v1040 = vmax.f32 %v976, 0.0
  %v1041 = vmax.f32 %v978, 0.0
  %v1042 = vmax.f32 %v981, 0.0
  %v1043 = vmax.f32 %v983, 0.0
  %v1044 = vmax.f32 %v986, 0.0
  %v1045 = vmax.f32 %v988, 0.0
  %v1046 = vmax.f32 %v991, 0.0
  %v1047 = vmax.f32 %v993, 0.0
  %v1048 = vmax.f32 %v996, 0.0
  %v1049 = vmax.f32 %v998, 0.0
  %v1050 = vmax.f32 %v1001, 0.0
  %v1051 = vmax.f32 %v1003, 0.0
  %v1052 = vmax.f32 %v1006, 0.0
  %v1053 = vmax.f32 %v1008, 0.0
  %v1054 = vmax.f32 %v1011, 0.0
  %v1055 = vmax.f32 %v1013, 0.0
  %v1056 = vmax.f32 %v1016, 0.0
  %v1057 = vmax.f32 %v1018, 0.0
  %v1058 = vmax.f32 %v1021, 0.0
  %v1059 = vmax.f32 %v1023, 0.0
  %v1060 = vmax.f32 %v1026, 0.0
  %v1061 = vmax.f32 %v1028, 0.0
  %v1062 = vpack.c.bf16 %v1031, %v1030
  %v1063 = vpack.c.bf16 %v1033, %v1032
  %v1064 = vpack.c.bf16 %v1035, %v1034
  %v1065 = vpack.c.bf16 %v1037, %v1036
  %v1066 = vpack.c.bf16 %v1039, %v1038
  %v1067 = vpack.c.bf16 %v1041, %v1040
  %v1068 = vpack.c.bf16 %v1043, %v1042
  %v1069 = vpack.c.bf16 %v1045, %v1044
  %v1070 = vpack.c.bf16 %v1047, %v1046
  %v1071 = vpack.c.bf16 %v1049, %v1048
  %v1072 = vpack.c.bf16 %v1051, %v1050
  %v1073 = vpack.c.bf16 %v1053, %v1052
  %v1074 = vpack.c.bf16 %v1055, %v1054
  %v1075 = vpack.c.bf16 %v1057, %v1056
  %v1076 = vpack.c.bf16 %v1059, %v1058
  %v1077 = vpack.c.bf16 %v1061, %v1060
  %1078 = vmatpush.bf16.msra.mxu0 %v1069
  %1079 = vmatpush.bf16.msra.mxu0 %v1068
  %1080 = vmatpush.bf16.msra.mxu0 %v1067
  %1081 = vmatpush.bf16.msra.mxu0 %v1066
  %1082 = vmatpush.bf16.msra.mxu0 %v1065
  %1083 = vmatpush.bf16.msra.mxu0 %v1064
  %1084 = vmatpush.bf16.msra.mxu0 %v1063
  %1085 = vmatpush.bf16.msra.mxu0 %v1062
  %1086 = vmatmul.bf16.gmra.mxu0 %v605
  %v1087 = vpop.f32.mrf.mxu0
  %v1088 = vadd.f32 %v544, %v1087
  %v1089 = vpop.f32.mrf.mxu0
  %v1090 = vadd.f32 %v549, %v1089
  %1091 = vmatmul.bf16.gmra.mxu0 %v607
  %v1092 = vpop.f32.mrf.mxu0
  %v1093 = vadd.f32 %v554, %v1092
  %v1094 = vpop.f32.mrf.mxu0
  %v1095 = vadd.f32 %v559, %v1094
  %1096 = vmatmul.bf16.gmra.mxu0 %v609
  %v1097 = vpop.f32.mrf.mxu0
  %v1098 = vadd.f32 %v564, %v1097
  %v1099 = vpop.f32.mrf.mxu0
  %v1100 = vadd.f32 %v569, %v1099
  %1101 = vmatmul.bf16.gmra.mxu0 %v611
  %v1102 = vpop.f32.mrf.mxu0
  %v1103 = vadd.f32 %v574, %v1102
  %v1104 = vpop.f32.mrf.mxu0
  %v1105 = vadd.f32 %v579, %v1104
  %1106 = vdwg.mxu0
  %1107 = vmatpush.bf16.msra.mxu0 %v1077
  %1108 = vmatpush.bf16.msra.mxu0 %v1076
  %1109 = vmatpush.bf16.msra.mxu0 %v1075
  %1110 = vmatpush.bf16.msra.mxu0 %v1074
  %1111 = vmatpush.bf16.msra.mxu0 %v1073
  %1112 = vmatpush.bf16.msra.mxu0 %v1072
  %1113 = vmatpush.bf16.msra.mxu0 %v1071
  %1114 = vmatpush.bf16.msra.mxu0 %v1070
  %1115 = vmatmul.bf16.gmra.mxu0 %v606
  %v1116 = vpop.f32.mrf.mxu0
  %v1117 = vadd.f32 %v1088, %v1116
  %v1118 = vpop.f32.mrf.mxu0
  %v1119 = vadd.f32 %v1090, %v1118
  %1120 = vmatmul.bf16.gmra.mxu0 %v608
  %v1121 = vpop.f32.mrf.mxu0
  %v1122 = vadd.f32 %v1093, %v1121
  %v1123 = vpop.f32.mrf.mxu0
  %v1124 = vadd.f32 %v1095, %v1123
  %1125 = vmatmul.bf16.gmra.mxu0 %v610
  %v1126 = vpop.f32.mrf.mxu0
  %v1127 = vadd.f32 %v1098, %v1126
  %v1128 = vpop.f32.mrf.mxu0
  %v1129 = vadd.f32 %v1100, %v1128
  %1130 = vmatmul.bf16.gmra.mxu0 %v612
  %v1131 = vpop.f32.mrf.mxu0
  %v1132 = vadd.f32 %v1103, %v1131
  %v1133 = vpop.f32.mrf.mxu0
  %v1134 = vadd.f32 %v1105, %v1133
  %1135 = vdwg.mxu0
  %v1136 = vmax.f32 %v1117, 0.0
  %v1137 = vmax.f32 %v1119, 0.0
  %v1138 = vmax.f32 %v1122, 0.0
  %v1139 = vmax.f32 %v1124, 0.0
  %v1140 = vmax.f32 %v1127, 0.0
  %v1141 = vmax.f32 %v1129, 0.0
  %v1142 = vmax.f32 %v1132, 0.0
  %v1143 = vmax.f32 %v1134, 0.0
  %v1144 = vpack.c.bf16 %v1136, %v1136
  %v1145 = vpack.c.bf16 %v1137, %v1137
  %v1146 = vpack.c.bf16 %v1138, %v1138
  %v1147 = vpack.c.bf16 %v1139, %v1139
  %v1148 = vpack.c.bf16 %v1140, %v1140
  %v1149 = vpack.c.bf16 %v1141, %v1141
  %v1150 = vpack.c.bf16 %v1142, %v1142
  %v1151 = vpack.c.bf16 %v1143, %v1143
  %1152 = vst.msk [vmem:[#allocation2 + $0x40] sm:$0xf] %vm695, %v1144
  %1153 = vst.msk [vmem:[#allocation2 + $0x44] sm:$0xf] %vm695, %v1145
  %1154 = vst.msk [vmem:[#allocation2 + $0x48] sm:$0xf] %vm695, %v1146
  %1155 = vst.msk [vmem:[#allocation2 + $0x4c] sm:$0xf] %vm695, %v1147
  %1156 = vst.msk [vmem:[#allocation2 + $0x50] sm:$0xf] %vm695, %v1148
  %1157 = vst.msk [vmem:[#allocation2 + $0x54] sm:$0xf] %vm695, %v1149
  %1158 = vst.msk [vmem:[#allocation2 + $0x58] sm:$0xf] %vm695, %v1150
  %1159 = vst.msk [vmem:[#allocation2 + $0x5c] sm:$0xf] %vm695, %v1151
  %s1160 = scalar_lea.vmem %s0, 24
  %v1161 = vld [vmem:[%s1160] sm:$0xf]
  %v1162 = vld [vmem:[%s1160 + $0x4] sm:$0xf]
  %v1165 = vunpack.c.l.b16 %v1161
  %v1166 = vunpack.c.l.b16 %v1162
  %v1167 = vpack.c.b16 %v1166, %v1165
  %1169 = vmatpush.bf16.msra.mxu0 0
  %1170 = vmatpush.bf16.msra.mxu0 0
  %1171 = vmatpush.bf16.msra.mxu0 0
  %1172 = vmatpush.bf16.msra.mxu0 0
  %1173 = vmatpush.bf16.msra.mxu0 0
  %1174 = vmatpush.bf16.msra.mxu0 0
  %1175 = vmatpush.bf16.msra.mxu0 0
  %1176 = vmatpush.bf16.msra.mxu0 %v1167
  %1177 = vmatmul.bf16.gmra.mxu0 %v357
  %v1178 = vpop.f32.mrf.mxu0
  %v1179 = vadd.f32 %v112, %v1178
  %v1180 = vpop.f32.mrf.mxu0
  %v1181 = vadd.f32 %v117, %v1180
  %1182 = vmatmul.bf16.gmra.mxu0 %v360
  %v1183 = vpop.f32.mrf.mxu0
  %v1184 = vadd.f32 %v122, %v1183
  %v1185 = vpop.f32.mrf.mxu0
  %v1186 = vadd.f32 %v127, %v1185
  %1187 = vmatmul.bf16.gmra.mxu0 %v363
  %v1188 = vpop.f32.mrf.mxu0
  %v1189 = vadd.f32 %v132, %v1188
  %v1190 = vpop.f32.mrf.mxu0
  %v1191 = vadd.f32 %v137, %v1190
  %1192 = vmatmul.bf16.gmra.mxu0 %v366
  %v1193 = vpop.f32.mrf.mxu0
  %v1194 = vadd.f32 %v142, %v1193
  %v1195 = vpop.f32.mrf.mxu0
  %v1196 = vadd.f32 %v147, %v1195
  %1197 = vmatmul.bf16.gmra.mxu0 %v369
  %v1198 = vpop.f32.mrf.mxu0
  %v1199 = vadd.f32 %v152, %v1198
  %v1200 = vpop.f32.mrf.mxu0
  %v1201 = vadd.f32 %v157, %v1200
  %1202 = vmatmul.bf16.gmra.mxu0 %v372
  %v1203 = vpop.f32.mrf.mxu0
  %v1204 = vadd.f32 %v162, %v1203
  %v1205 = vpop.f32.mrf.mxu0
  %v1206 = vadd.f32 %v167, %v1205
  %1207 = vmatmul.bf16.gmra.mxu0 %v375
  %v1208 = vpop.f32.mrf.mxu0
  %v1209 = vadd.f32 %v172, %v1208
  %v1210 = vpop.f32.mrf.mxu0
  %v1211 = vadd.f32 %v177, %v1210
  %1212 = vmatmul.bf16.gmra.mxu0 %v378
  %v1213 = vpop.f32.mrf.mxu0
  %v1214 = vadd.f32 %v182, %v1213
  %v1215 = vpop.f32.mrf.mxu0
  %v1216 = vadd.f32 %v187, %v1215
  %1217 = vmatmul.bf16.gmra.mxu0 %v381
  %v1218 = vpop.f32.mrf.mxu0
  %v1219 = vadd.f32 %v192, %v1218
  %v1220 = vpop.f32.mrf.mxu0
  %v1221 = vadd.f32 %v197, %v1220
  %1222 = vmatmul.bf16.gmra.mxu0 %v384
  %v1223 = vpop.f32.mrf.mxu0
  %v1224 = vadd.f32 %v202, %v1223
  %v1225 = vpop.f32.mrf.mxu0
  %v1226 = vadd.f32 %v207, %v1225
  %1227 = vmatmul.bf16.gmra.mxu0 %v387
  %v1228 = vpop.f32.mrf.mxu0
  %v1229 = vadd.f32 %v212, %v1228
  %v1230 = vpop.f32.mrf.mxu0
  %v1231 = vadd.f32 %v217, %v1230
  %1232 = vmatmul.bf16.gmra.mxu0 %v390
  %v1233 = vpop.f32.mrf.mxu0
  %v1234 = vadd.f32 %v222, %v1233
  %v1235 = vpop.f32.mrf.mxu0
  %v1236 = vadd.f32 %v227, %v1235
  %1237 = vmatmul.bf16.gmra.mxu0 %v393
  %v1238 = vpop.f32.mrf.mxu0
  %v1239 = vadd.f32 %v232, %v1238
  %v1240 = vpop.f32.mrf.mxu0
  %v1241 = vadd.f32 %v237, %v1240
  %1242 = vmatmul.bf16.gmra.mxu0 %v396
  %v1243 = vpop.f32.mrf.mxu0
  %v1244 = vadd.f32 %v242, %v1243
  %v1245 = vpop.f32.mrf.mxu0
  %v1246 = vadd.f32 %v247, %v1245
  %1247 = vmatmul.bf16.gmra.mxu0 %v399
  %v1248 = vpop.f32.mrf.mxu0
  %v1249 = vadd.f32 %v252, %v1248
  %v1250 = vpop.f32.mrf.mxu0
  %v1251 = vadd.f32 %v257, %v1250
  %1252 = vmatmul.bf16.gmra.mxu0 %v402
  %v1253 = vpop.f32.mrf.mxu0
  %v1254 = vadd.f32 %v262, %v1253
  %v1255 = vpop.f32.mrf.mxu0
  %v1256 = vadd.f32 %v267, %v1255
  %1257 = vdwg.mxu0
  %v1258 = vmax.f32 %v1179, 0.0
  %v1259 = vmax.f32 %v1181, 0.0
  %v1260 = vmax.f32 %v1184, 0.0
  %v1261 = vmax.f32 %v1186, 0.0
  %v1262 = vmax.f32 %v1189, 0.0
  %v1263 = vmax.f32 %v1191, 0.0
  %v1264 = vmax.f32 %v1194, 0.0
  %v1265 = vmax.f32 %v1196, 0.0
  %v1266 = vmax.f32 %v1199, 0.0
  %v1267 = vmax.f32 %v1201, 0.0
  %v1268 = vmax.f32 %v1204, 0.0
  %v1269 = vmax.f32 %v1206, 0.0
  %v1270 = vmax.f32 %v1209, 0.0
  %v1271 = vmax.f32 %v1211, 0.0
  %v1272 = vmax.f32 %v1214, 0.0
  %v1273 = vmax.f32 %v1216, 0.0
  %v1274 = vmax.f32 %v1219, 0.0
  %v1275 = vmax.f32 %v1221, 0.0
  %v1276 = vmax.f32 %v1224, 0.0
  %v1277 = vmax.f32 %v1226, 0.0
  %v1278 = vmax.f32 %v1229, 0.0
  %v1279 = vmax.f32 %v1231, 0.0
  %v1280 = vmax.f32 %v1234, 0.0
  %v1281 = vmax.f32 %v1236, 0.0
  %v1282 = vmax.f32 %v1239, 0.0
  %v1283 = vmax.f32 %v1241, 0.0
  %v1284 = vmax.f32 %v1244, 0.0
  %v1285 = vmax.f32 %v1246, 0.0
  %v1286 = vmax.f32 %v1249, 0.0
  %v1287 = vmax.f32 %v1251, 0.0
  %v1288 = vmax.f32 %v1254, 0.0
  %v1289 = vmax.f32 %v1256, 0.0
  %v1290 = vpack.c.bf16 %v1259, %v1258
  %v1291 = vpack.c.bf16 %v1261, %v1260
  %v1292 = vpack.c.bf16 %v1263, %v1262
  %v1293 = vpack.c.bf16 %v1265, %v1264
  %v1294 = vpack.c.bf16 %v1267, %v1266
  %v1295 = vpack.c.bf16 %v1269, %v1268
  %v1296 = vpack.c.bf16 %v1271, %v1270
  %v1297 = vpack.c.bf16 %v1273, %v1272
  %v1298 = vpack.c.bf16 %v1275, %v1274
  %v1299 = vpack.c.bf16 %v1277, %v1276
  %v1300 = vpack.c.bf16 %v1279, %v1278
  %v1301 = vpack.c.bf16 %v1281, %v1280
  %v1302 = vpack.c.bf16 %v1283, %v1282
  %v1303 = vpack.c.bf16 %v1285, %v1284
  %v1304 = vpack.c.bf16 %v1287, %v1286
  %v1305 = vpack.c.bf16 %v1289, %v1288
  %1306 = vmatpush.bf16.msra.mxu0 %v1297
  %1307 = vmatpush.bf16.msra.mxu0 %v1296
  %1308 = vmatpush.bf16.msra.mxu0 %v1295
  %1309 = vmatpush.bf16.msra.mxu0 %v1294
  %1310 = vmatpush.bf16.msra.mxu0 %v1293
  %1311 = vmatpush.bf16.msra.mxu0 %v1292
  %1312 = vmatpush.bf16.msra.mxu0 %v1291
  %1313 = vmatpush.bf16.msra.mxu0 %v1290
  %1314 = vmatmul.bf16.gmra.mxu0 %v605
  %v1315 = vpop.f32.mrf.mxu0
  %v1316 = vadd.f32 %v544, %v1315
  %v1317 = vpop.f32.mrf.mxu0
  %v1318 = vadd.f32 %v549, %v1317
  %1319 = vmatmul.bf16.gmra.mxu0 %v607
  %v1320 = vpop.f32.mrf.mxu0
  %v1321 = vadd.f32 %v554, %v1320
  %v1322 = vpop.f32.mrf.mxu0
  %v1323 = vadd.f32 %v559, %v1322
  %1324 = vmatmul.bf16.gmra.mxu0 %v609
  %v1325 = vpop.f32.mrf.mxu0
  %v1326 = vadd.f32 %v564, %v1325
  %v1327 = vpop.f32.mrf.mxu0
  %v1328 = vadd.f32 %v569, %v1327
  %1329 = vmatmul.bf16.gmra.mxu0 %v611
  %v1330 = vpop.f32.mrf.mxu0
  %v1331 = vadd.f32 %v574, %v1330
  %v1332 = vpop.f32.mrf.mxu0
  %v1333 = vadd.f32 %v579, %v1332
  %1334 = vdwg.mxu0
  %1335 = vmatpush.bf16.msra.mxu0 %v1305
  %1336 = vmatpush.bf16.msra.mxu0 %v1304
  %1337 = vmatpush.bf16.msra.mxu0 %v1303
  %1338 = vmatpush.bf16.msra.mxu0 %v1302
  %1339 = vmatpush.bf16.msra.mxu0 %v1301
  %1340 = vmatpush.bf16.msra.mxu0 %v1300
  %1341 = vmatpush.bf16.msra.mxu0 %v1299
  %1342 = vmatpush.bf16.msra.mxu0 %v1298
  %1343 = vmatmul.bf16.gmra.mxu0 %v606
  %v1344 = vpop.f32.mrf.mxu0
  %v1345 = vadd.f32 %v1316, %v1344
  %v1346 = vpop.f32.mrf.mxu0
  %v1347 = vadd.f32 %v1318, %v1346
  %1348 = vmatmul.bf16.gmra.mxu0 %v608
  %v1349 = vpop.f32.mrf.mxu0
  %v1350 = vadd.f32 %v1321, %v1349
  %v1351 = vpop.f32.mrf.mxu0
  %v1352 = vadd.f32 %v1323, %v1351
  %1353 = vmatmul.bf16.gmra.mxu0 %v610
  %v1354 = vpop.f32.mrf.mxu0
  %v1355 = vadd.f32 %v1326, %v1354
  %v1356 = vpop.f32.mrf.mxu0
  %v1357 = vadd.f32 %v1328, %v1356
  %1358 = vmatmul.bf16.gmra.mxu0 %v612
  %v1359 = vpop.f32.mrf.mxu0
  %v1360 = vadd.f32 %v1331, %v1359
  %v1361 = vpop.f32.mrf.mxu0
  %v1362 = vadd.f32 %v1333, %v1361
  %1363 = vdwg.mxu0
  %v1364 = vmax.f32 %v1345, 0.0
  %v1365 = vmax.f32 %v1347, 0.0
  %v1366 = vmax.f32 %v1350, 0.0
  %v1367 = vmax.f32 %v1352, 0.0
  %v1368 = vmax.f32 %v1355, 0.0
  %v1369 = vmax.f32 %v1357, 0.0
  %v1370 = vmax.f32 %v1360, 0.0
  %v1371 = vmax.f32 %v1362, 0.0
  %v1372 = vpack.c.bf16 %v1364, %v1364
  %v1373 = vpack.c.bf16 %v1365, %v1365
  %v1374 = vpack.c.bf16 %v1366, %v1366
  %v1375 = vpack.c.bf16 %v1367, %v1367
  %v1376 = vpack.c.bf16 %v1368, %v1368
  %v1377 = vpack.c.bf16 %v1369, %v1369
  %v1378 = vpack.c.bf16 %v1370, %v1370
  %v1379 = vpack.c.bf16 %v1371, %v1371
  %1380 = vst.msk [vmem:[#allocation2 + $0x60] sm:$0xf] %vm695, %v1372
  %1381 = vst.msk [vmem:[#allocation2 + $0x64] sm:$0xf] %vm695, %v1373
  %1382 = vst.msk [vmem:[#allocation2 + $0x68] sm:$0xf] %vm695, %v1374
  %1383 = vst.msk [vmem:[#allocation2 + $0x6c] sm:$0xf] %vm695, %v1375
  %1384 = vst.msk [vmem:[#allocation2 + $0x70] sm:$0xf] %vm695, %v1376
  %1385 = vst.msk [vmem:[#allocation2 + $0x74] sm:$0xf] %vm695, %v1377
  %1386 = vst.msk [vmem:[#allocation2 + $0x78] sm:$0xf] %vm695, %v1378
  %1387 = vst.msk [vmem:[#allocation2 + $0x7c] sm:$0xf] %vm695, %v1379
  %s1388 = scalar_lea.vmem %s0, 32
  %v1389 = vld [vmem:[%s1388] sm:$0xf]
  %v1390 = vld [vmem:[%s1388 + $0x4] sm:$0xf]
  %v1393 = vunpack.c.l.b16 %v1389
  %v1394 = vunpack.c.l.b16 %v1390
  %v1395 = vpack.c.b16 %v1394, %v1393
  %1397 = vmatpush.bf16.msra.mxu0 0
  %1398 = vmatpush.bf16.msra.mxu0 0
  %1399 = vmatpush.bf16.msra.mxu0 0
  %1400 = vmatpush.bf16.msra.mxu0 0
  %1401 = vmatpush.bf16.msra.mxu0 0
  %1402 = vmatpush.bf16.msra.mxu0 0
  %1403 = vmatpush.bf16.msra.mxu0 0
  %1404 = vmatpush.bf16.msra.mxu0 %v1395
  %1405 = vmatmul.bf16.gmra.mxu0 %v357
  %v1406 = vpop.f32.mrf.mxu0
  %v1407 = vadd.f32 %v112, %v1406
  %v1408 = vpop.f32.mrf.mxu0
  %v1409 = vadd.f32 %v117, %v1408
  %1410 = vmatmul.bf16.gmra.mxu0 %v360
  %v1411 = vpop.f32.mrf.mxu0
  %v1412 = vadd.f32 %v122, %v1411
  %v1413 = vpop.f32.mrf.mxu0
  %v1414 = vadd.f32 %v127, %v1413
  %1415 = vmatmul.bf16.gmra.mxu0 %v363
  %v1416 = vpop.f32.mrf.mxu0
  %v1417 = vadd.f32 %v132, %v1416
  %v1418 = vpop.f32.mrf.mxu0
  %v1419 = vadd.f32 %v137, %v1418
  %1420 = vmatmul.bf16.gmra.mxu0 %v366
  %v1421 = vpop.f32.mrf.mxu0
  %v1422 = vadd.f32 %v142, %v1421
  %v1423 = vpop.f32.mrf.mxu0
  %v1424 = vadd.f32 %v147, %v1423
  %1425 = vmatmul.bf16.gmra.mxu0 %v369
  %v1426 = vpop.f32.mrf.mxu0
  %v1427 = vadd.f32 %v152, %v1426
  %v1428 = vpop.f32.mrf.mxu0
  %v1429 = vadd.f32 %v157, %v1428
  %1430 = vmatmul.bf16.gmra.mxu0 %v372
  %v1431 = vpop.f32.mrf.mxu0
  %v1432 = vadd.f32 %v162, %v1431
  %v1433 = vpop.f32.mrf.mxu0
  %v1434 = vadd.f32 %v167, %v1433
  %1435 = vmatmul.bf16.gmra.mxu0 %v375
  %v1436 = vpop.f32.mrf.mxu0
  %v1437 = vadd.f32 %v172, %v1436
  %v1438 = vpop.f32.mrf.mxu0
  %v1439 = vadd.f32 %v177, %v1438
  %1440 = vmatmul.bf16.gmra.mxu0 %v378
  %v1441 = vpop.f32.mrf.mxu0
  %v1442 = vadd.f32 %v182, %v1441
  %v1443 = vpop.f32.mrf.mxu0
  %v1444 = vadd.f32 %v187, %v1443
  %1445 = vmatmul.bf16.gmra.mxu0 %v381
  %v1446 = vpop.f32.mrf.mxu0
  %v1447 = vadd.f32 %v192, %v1446
  %v1448 = vpop.f32.mrf.mxu0
  %v1449 = vadd.f32 %v197, %v1448
  %1450 = vmatmul.bf16.gmra.mxu0 %v384
  %v1451 = vpop.f32.mrf.mxu0
  %v1452 = vadd.f32 %v202, %v1451
  %v1453 = vpop.f32.mrf.mxu0
  %v1454 = vadd.f32 %v207, %v1453
  %1455 = vmatmul.bf16.gmra.mxu0 %v387
  %v1456 = vpop.f32.mrf.mxu0
  %v1457 = vadd.f32 %v212, %v1456
  %v1458 = vpop.f32.mrf.mxu0
  %v1459 = vadd.f32 %v217, %v1458
  %1460 = vmatmul.bf16.gmra.mxu0 %v390
  %v1461 = vpop.f32.mrf.mxu0
  %v1462 = vadd.f32 %v222, %v1461
  %v1463 = vpop.f32.mrf.mxu0
  %v1464 = vadd.f32 %v227, %v1463
  %1465 = vmatmul.bf16.gmra.mxu0 %v393
  %v1466 = vpop.f32.mrf.mxu0
  %v1467 = vadd.f32 %v232, %v1466
  %v1468 = vpop.f32.mrf.mxu0
  %v1469 = vadd.f32 %v237, %v1468
  %1470 = vmatmul.bf16.gmra.mxu0 %v396
  %v1471 = vpop.f32.mrf.mxu0
  %v1472 = vadd.f32 %v242, %v1471
  %v1473 = vpop.f32.mrf.mxu0
  %v1474 = vadd.f32 %v247, %v1473
  %1475 = vmatmul.bf16.gmra.mxu0 %v399
  %v1476 = vpop.f32.mrf.mxu0
  %v1477 = vadd.f32 %v252, %v1476
  %v1478 = vpop.f32.mrf.mxu0
  %v1479 = vadd.f32 %v257, %v1478
  %1480 = vmatmul.bf16.gmra.mxu0 %v402
  %v1481 = vpop.f32.mrf.mxu0
  %v1482 = vadd.f32 %v262, %v1481
  %v1483 = vpop.f32.mrf.mxu0
  %v1484 = vadd.f32 %v267, %v1483
  %1485 = vdwg.mxu0
  %v1486 = vmax.f32 %v1407, 0.0
  %v1487 = vmax.f32 %v1409, 0.0
  %v1488 = vmax.f32 %v1412, 0.0
  %v1489 = vmax.f32 %v1414, 0.0
  %v1490 = vmax.f32 %v1417, 0.0
  %v1491 = vmax.f32 %v1419, 0.0
  %v1492 = vmax.f32 %v1422, 0.0
  %v1493 = vmax.f32 %v1424, 0.0
  %v1494 = vmax.f32 %v1427, 0.0
  %v1495 = vmax.f32 %v1429, 0.0
  %v1496 = vmax.f32 %v1432, 0.0
  %v1497 = vmax.f32 %v1434, 0.0
  %v1498 = vmax.f32 %v1437, 0.0
  %v1499 = vmax.f32 %v1439, 0.0
  %v1500 = vmax.f32 %v1442, 0.0
  %v1501 = vmax.f32 %v1444, 0.0
  %v1502 = vmax.f32 %v1447, 0.0
  %v1503 = vmax.f32 %v1449, 0.0
  %v1504 = vmax.f32 %v1452, 0.0
  %v1505 = vmax.f32 %v1454, 0.0
  %v1506 = vmax.f32 %v1457, 0.0
  %v1507 = vmax.f32 %v1459, 0.0
  %v1508 = vmax.f32 %v1462, 0.0
  %v1509 = vmax.f32 %v1464, 0.0
  %v1510 = vmax.f32 %v1467, 0.0
  %v1511 = vmax.f32 %v1469, 0.0
  %v1512 = vmax.f32 %v1472, 0.0
  %v1513 = vmax.f32 %v1474, 0.0
  %v1514 = vmax.f32 %v1477, 0.0
  %v1515 = vmax.f32 %v1479, 0.0
  %v1516 = vmax.f32 %v1482, 0.0
  %v1517 = vmax.f32 %v1484, 0.0
  %v1518 = vpack.c.bf16 %v1487, %v1486
  %v1519 = vpack.c.bf16 %v1489, %v1488
  %v1520 = vpack.c.bf16 %v1491, %v1490
  %v1521 = vpack.c.bf16 %v1493, %v1492
  %v1522 = vpack.c.bf16 %v1495, %v1494
  %v1523 = vpack.c.bf16 %v1497, %v1496
  %v1524 = vpack.c.bf16 %v1499, %v1498
  %v1525 = vpack.c.bf16 %v1501, %v1500
  %v1526 = vpack.c.bf16 %v1503, %v1502
  %v1527 = vpack.c.bf16 %v1505, %v1504
  %v1528 = vpack.c.bf16 %v1507, %v1506
  %v1529 = vpack.c.bf16 %v1509, %v1508
  %v1530 = vpack.c.bf16 %v1511, %v1510
  %v1531 = vpack.c.bf16 %v1513, %v1512
  %v1532 = vpack.c.bf16 %v1515, %v1514
  %v1533 = vpack.c.bf16 %v1517, %v1516
  %1534 = vmatpush.bf16.msra.mxu0 %v1525
  %1535 = vmatpush.bf16.msra.mxu0 %v1524
  %1536 = vmatpush.bf16.msra.mxu0 %v1523
  %1537 = vmatpush.bf16.msra.mxu0 %v1522
  %1538 = vmatpush.bf16.msra.mxu0 %v1521
  %1539 = vmatpush.bf16.msra.mxu0 %v1520
  %1540 = vmatpush.bf16.msra.mxu0 %v1519
  %1541 = vmatpush.bf16.msra.mxu0 %v1518
  %1542 = vmatmul.bf16.gmra.mxu0 %v605
  %v1543 = vpop.f32.mrf.mxu0
  %v1544 = vadd.f32 %v544, %v1543
  %v1545 = vpop.f32.mrf.mxu0
  %v1546 = vadd.f32 %v549, %v1545
  %1547 = vmatmul.bf16.gmra.mxu0 %v607
  %v1548 = vpop.f32.mrf.mxu0
  %v1549 = vadd.f32 %v554, %v1548
  %v1550 = vpop.f32.mrf.mxu0
  %v1551 = vadd.f32 %v559, %v1550
  %1552 = vmatmul.bf16.gmra.mxu0 %v609
  %v1553 = vpop.f32.mrf.mxu0
  %v1554 = vadd.f32 %v564, %v1553
  %v1555 = vpop.f32.mrf.mxu0
  %v1556 = vadd.f32 %v569, %v1555
  %1557 = vmatmul.bf16.gmra.mxu0 %v611
  %v1558 = vpop.f32.mrf.mxu0
  %v1559 = vadd.f32 %v574, %v1558
  %v1560 = vpop.f32.mrf.mxu0
  %v1561 = vadd.f32 %v579, %v1560
  %1562 = vdwg.mxu0
  %1563 = vmatpush.bf16.msra.mxu0 %v1533
  %1564 = vmatpush.bf16.msra.mxu0 %v1532
  %1565 = vmatpush.bf16.msra.mxu0 %v1531
  %1566 = vmatpush.bf16.msra.mxu0 %v1530
  %1567 = vmatpush.bf16.msra.mxu0 %v1529
  %1568 = vmatpush.bf16.msra.mxu0 %v1528
  %1569 = vmatpush.bf16.msra.mxu0 %v1527
  %1570 = vmatpush.bf16.msra.mxu0 %v1526
  %1571 = vmatmul.bf16.gmra.mxu0 %v606
  %v1572 = vpop.f32.mrf.mxu0
  %v1573 = vadd.f32 %v1544, %v1572
  %v1574 = vpop.f32.mrf.mxu0
  %v1575 = vadd.f32 %v1546, %v1574
  %1576 = vmatmul.bf16.gmra.mxu0 %v608
  %v1577 = vpop.f32.mrf.mxu0
  %v1578 = vadd.f32 %v1549, %v1577
  %v1579 = vpop.f32.mrf.mxu0
  %v1580 = vadd.f32 %v1551, %v1579
  %1581 = vmatmul.bf16.gmra.mxu0 %v610
  %v1582 = vpop.f32.mrf.mxu0
  %v1583 = vadd.f32 %v1554, %v1582
  %v1584 = vpop.f32.mrf.mxu0
  %v1585 = vadd.f32 %v1556, %v1584
  %1586 = vmatmul.bf16.gmra.mxu0 %v612
  %v1587 = vpop.f32.mrf.mxu0
  %v1588 = vadd.f32 %v1559, %v1587
  %v1589 = vpop.f32.mrf.mxu0
  %v1590 = vadd.f32 %v1561, %v1589
  %1591 = vdwg.mxu0
  %v1592 = vmax.f32 %v1573, 0.0
  %v1593 = vmax.f32 %v1575, 0.0
  %v1594 = vmax.f32 %v1578, 0.0
  %v1595 = vmax.f32 %v1580, 0.0
  %v1596 = vmax.f32 %v1583, 0.0
  %v1597 = vmax.f32 %v1585, 0.0
  %v1598 = vmax.f32 %v1588, 0.0
  %v1599 = vmax.f32 %v1590, 0.0
  %v1600 = vpack.c.bf16 %v1592, %v1592
  %v1601 = vpack.c.bf16 %v1593, %v1593
  %v1602 = vpack.c.bf16 %v1594, %v1594
  %v1603 = vpack.c.bf16 %v1595, %v1595
  %v1604 = vpack.c.bf16 %v1596, %v1596
  %v1605 = vpack.c.bf16 %v1597, %v1597
  %v1606 = vpack.c.bf16 %v1598, %v1598
  %v1607 = vpack.c.bf16 %v1599, %v1599
  %1608 = vst.msk [vmem:[#allocation2 + $0x80] sm:$0xf] %vm695, %v1600
  %1609 = vst.msk [vmem:[#allocation2 + $0x84] sm:$0xf] %vm695, %v1601
  %1610 = vst.msk [vmem:[#allocation2 + $0x88] sm:$0xf] %vm695, %v1602
  %1611 = vst.msk [vmem:[#allocation2 + $0x8c] sm:$0xf] %vm695, %v1603
  %1612 = vst.msk [vmem:[#allocation2 + $0x90] sm:$0xf] %vm695, %v1604
  %1613 = vst.msk [vmem:[#allocation2 + $0x94] sm:$0xf] %vm695, %v1605
  %1614 = vst.msk [vmem:[#allocation2 + $0x98] sm:$0xf] %vm695, %v1606
  %1615 = vst.msk [vmem:[#allocation2 + $0x9c] sm:$0xf] %vm695, %v1607
  %s1616 = scalar_lea.vmem %s0, 40
  %v1617 = vld [vmem:[%s1616] sm:$0xf]
  %v1618 = vld [vmem:[%s1616 + $0x4] sm:$0xf]
  %v1621 = vunpack.c.l.b16 %v1617
  %v1622 = vunpack.c.l.b16 %v1618
  %v1623 = vpack.c.b16 %v1622, %v1621
  %1625 = vmatpush.bf16.msra.mxu0 0
  %1626 = vmatpush.bf16.msra.mxu0 0
  %1627 = vmatpush.bf16.msra.mxu0 0
  %1628 = vmatpush.bf16.msra.mxu0 0
  %1629 = vmatpush.bf16.msra.mxu0 0
  %1630 = vmatpush.bf16.msra.mxu0 0
  %1631 = vmatpush.bf16.msra.mxu0 0
  %1632 = vmatpush.bf16.msra.mxu0 %v1623
  %1633 = vmatmul.bf16.gmra.mxu0 %v357
  %v1634 = vpop.f32.mrf.mxu0
  %v1635 = vadd.f32 %v112, %v1634
  %v1636 = vpop.f32.mrf.mxu0
  %v1637 = vadd.f32 %v117, %v1636
  %1638 = vmatmul.bf16.gmra.mxu0 %v360
  %v1639 = vpop.f32.mrf.mxu0
  %v1640 = vadd.f32 %v122, %v1639
  %v1641 = vpop.f32.mrf.mxu0
  %v1642 = vadd.f32 %v127, %v1641
  %1643 = vmatmul.bf16.gmra.mxu0 %v363
  %v1644 = vpop.f32.mrf.mxu0
  %v1645 = vadd.f32 %v132, %v1644
  %v1646 = vpop.f32.mrf.mxu0
  %v1647 = vadd.f32 %v137, %v1646
  %1648 = vmatmul.bf16.gmra.mxu0 %v366
  %v1649 = vpop.f32.mrf.mxu0
  %v1650 = vadd.f32 %v142, %v1649
  %v1651 = vpop.f32.mrf.mxu0
  %v1652 = vadd.f32 %v147, %v1651
  %1653 = vmatmul.bf16.gmra.mxu0 %v369
  %v1654 = vpop.f32.mrf.mxu0
  %v1655 = vadd.f32 %v152, %v1654
  %v1656 = vpop.f32.mrf.mxu0
  %v1657 = vadd.f32 %v157, %v1656
  %1658 = vmatmul.bf16.gmra.mxu0 %v372
  %v1659 = vpop.f32.mrf.mxu0
  %v1660 = vadd.f32 %v162, %v1659
  %v1661 = vpop.f32.mrf.mxu0
  %v1662 = vadd.f32 %v167, %v1661
  %1663 = vmatmul.bf16.gmra.mxu0 %v375
  %v1664 = vpop.f32.mrf.mxu0
  %v1665 = vadd.f32 %v172, %v1664
  %v1666 = vpop.f32.mrf.mxu0
  %v1667 = vadd.f32 %v177, %v1666
  %1668 = vmatmul.bf16.gmra.mxu0 %v378
  %v1669 = vpop.f32.mrf.mxu0
  %v1670 = vadd.f32 %v182, %v1669
  %v1671 = vpop.f32.mrf.mxu0
  %v1672 = vadd.f32 %v187, %v1671
  %1673 = vmatmul.bf16.gmra.mxu0 %v381
  %v1674 = vpop.f32.mrf.mxu0
  %v1675 = vadd.f32 %v192, %v1674
  %v1676 = vpop.f32.mrf.mxu0
  %v1677 = vadd.f32 %v197, %v1676
  %1678 = vmatmul.bf16.gmra.mxu0 %v384
  %v1679 = vpop.f32.mrf.mxu0
  %v1680 = vadd.f32 %v202, %v1679
  %v1681 = vpop.f32.mrf.mxu0
  %v1682 = vadd.f32 %v207, %v1681
  %1683 = vmatmul.bf16.gmra.mxu0 %v387
  %v1684 = vpop.f32.mrf.mxu0
  %v1685 = vadd.f32 %v212, %v1684
  %v1686 = vpop.f32.mrf.mxu0
  %v1687 = vadd.f32 %v217, %v1686
  %1688 = vmatmul.bf16.gmra.mxu0 %v390
  %v1689 = vpop.f32.mrf.mxu0
  %v1690 = vadd.f32 %v222, %v1689
  %v1691 = vpop.f32.mrf.mxu0
  %v1692 = vadd.f32 %v227, %v1691
  %1693 = vmatmul.bf16.gmra.mxu0 %v393
  %v1694 = vpop.f32.mrf.mxu0
  %v1695 = vadd.f32 %v232, %v1694
  %v1696 = vpop.f32.mrf.mxu0
  %v1697 = vadd.f32 %v237, %v1696
  %1698 = vmatmul.bf16.gmra.mxu0 %v396
  %v1699 = vpop.f32.mrf.mxu0
  %v1700 = vadd.f32 %v242, %v1699
  %v1701 = vpop.f32.mrf.mxu0
  %v1702 = vadd.f32 %v247, %v1701
  %1703 = vmatmul.bf16.gmra.mxu0 %v399
  %v1704 = vpop.f32.mrf.mxu0
  %v1705 = vadd.f32 %v252, %v1704
  %v1706 = vpop.f32.mrf.mxu0
  %v1707 = vadd.f32 %v257, %v1706
  %1708 = vmatmul.bf16.gmra.mxu0 %v402
  %v1709 = vpop.f32.mrf.mxu0
  %v1710 = vadd.f32 %v262, %v1709
  %v1711 = vpop.f32.mrf.mxu0
  %v1712 = vadd.f32 %v267, %v1711
  %1713 = vdwg.mxu0
  %v1714 = vmax.f32 %v1635, 0.0
  %v1715 = vmax.f32 %v1637, 0.0
  %v1716 = vmax.f32 %v1640, 0.0
  %v1717 = vmax.f32 %v1642, 0.0
  %v1718 = vmax.f32 %v1645, 0.0
  %v1719 = vmax.f32 %v1647, 0.0
  %v1720 = vmax.f32 %v1650, 0.0
  %v1721 = vmax.f32 %v1652, 0.0
  %v1722 = vmax.f32 %v1655, 0.0
  %v1723 = vmax.f32 %v1657, 0.0
  %v1724 = vmax.f32 %v1660, 0.0
  %v1725 = vmax.f32 %v1662, 0.0
  %v1726 = vmax.f32 %v1665, 0.0
  %v1727 = vmax.f32 %v1667, 0.0
  %v1728 = vmax.f32 %v1670, 0.0
  %v1729 = vmax.f32 %v1672, 0.0
  %v1730 = vmax.f32 %v1675, 0.0
  %v1731 = vmax.f32 %v1677, 0.0
  %v1732 = vmax.f32 %v1680, 0.0
  %v1733 = vmax.f32 %v1682, 0.0
  %v1734 = vmax.f32 %v1685, 0.0
  %v1735 = vmax.f32 %v1687, 0.0
  %v1736 = vmax.f32 %v1690, 0.0
  %v1737 = vmax.f32 %v1692, 0.0
  %v1738 = vmax.f32 %v1695, 0.0
  %v1739 = vmax.f32 %v1697, 0.0
  %v1740 = vmax.f32 %v1700, 0.0
  %v1741 = vmax.f32 %v1702, 0.0
  %v1742 = vmax.f32 %v1705, 0.0
  %v1743 = vmax.f32 %v1707, 0.0
  %v1744 = vmax.f32 %v1710, 0.0
  %v1745 = vmax.f32 %v1712, 0.0
  %v1746 = vpack.c.bf16 %v1715, %v1714
  %v1747 = vpack.c.bf16 %v1717, %v1716
  %v1748 = vpack.c.bf16 %v1719, %v1718
  %v1749 = vpack.c.bf16 %v1721, %v1720
  %v1750 = vpack.c.bf16 %v1723, %v1722
  %v1751 = vpack.c.bf16 %v1725, %v1724
  %v1752 = vpack.c.bf16 %v1727, %v1726
  %v1753 = vpack.c.bf16 %v1729, %v1728
  %v1754 = vpack.c.bf16 %v1731, %v1730
  %v1755 = vpack.c.bf16 %v1733, %v1732
  %v1756 = vpack.c.bf16 %v1735, %v1734
  %v1757 = vpack.c.bf16 %v1737, %v1736
  %v1758 = vpack.c.bf16 %v1739, %v1738
  %v1759 = vpack.c.bf16 %v1741, %v1740
  %v1760 = vpack.c.bf16 %v1743, %v1742
  %v1761 = vpack.c.bf16 %v1745, %v1744
  %1762 = vmatpush.bf16.msra.mxu0 %v1753
  %1763 = vmatpush.bf16.msra.mxu0 %v1752
  %1764 = vmatpush.bf16.msra.mxu0 %v1751
  %1765 = vmatpush.bf16.msra.mxu0 %v1750
  %1766 = vmatpush.bf16.msra.mxu0 %v1749
  %1767 = vmatpush.bf16.msra.mxu0 %v1748
  %1768 = vmatpush.bf16.msra.mxu0 %v1747
  %1769 = vmatpush.bf16.msra.mxu0 %v1746
  %1770 = vmatmul.bf16.gmra.mxu0 %v605
  %v1771 = vpop.f32.mrf.mxu0
  %v1772 = vadd.f32 %v544, %v1771
  %v1773 = vpop.f32.mrf.mxu0
  %v1774 = vadd.f32 %v549, %v1773
  %1775 = vmatmul.bf16.gmra.mxu0 %v607
  %v1776 = vpop.f32.mrf.mxu0
  %v1777 = vadd.f32 %v554, %v1776
  %v1778 = vpop.f32.mrf.mxu0
  %v1779 = vadd.f32 %v559, %v1778
  %1780 = vmatmul.bf16.gmra.mxu0 %v609
  %v1781 = vpop.f32.mrf.mxu0
  %v1782 = vadd.f32 %v564, %v1781
  %v1783 = vpop.f32.mrf.mxu0
  %v1784 = vadd.f32 %v569, %v1783
  %1785 = vmatmul.bf16.gmra.mxu0 %v611
  %v1786 = vpop.f32.mrf.mxu0
  %v1787 = vadd.f32 %v574, %v1786
  %v1788 = vpop.f32.mrf.mxu0
  %v1789 = vadd.f32 %v579, %v1788
  %1790 = vdwg.mxu0
  %1791 = vmatpush.bf16.msra.mxu0 %v1761
  %1792 = vmatpush.bf16.msra.mxu0 %v1760
  %1793 = vmatpush.bf16.msra.mxu0 %v1759
  %1794 = vmatpush.bf16.msra.mxu0 %v1758
  %1795 = vmatpush.bf16.msra.mxu0 %v1757
  %1796 = vmatpush.bf16.msra.mxu0 %v1756
  %1797 = vmatpush.bf16.msra.mxu0 %v1755
  %1798 = vmatpush.bf16.msra.mxu0 %v1754
  %1799 = vmatmul.bf16.gmra.mxu0 %v606
  %v1800 = vpop.f32.mrf.mxu0
  %v1801 = vadd.f32 %v1772, %v1800
  %v1802 = vpop.f32.mrf.mxu0
  %v1803 = vadd.f32 %v1774, %v1802
  %1804 = vmatmul.bf16.gmra.mxu0 %v608
  %v1805 = vpop.f32.mrf.mxu0
  %v1806 = vadd.f32 %v1777, %v1805
  %v1807 = vpop.f32.mrf.mxu0
  %v1808 = vadd.f32 %v1779, %v1807
  %1809 = vmatmul.bf16.gmra.mxu0 %v610
  %v1810 = vpop.f32.mrf.mxu0
  %v1811 = vadd.f32 %v1782, %v1810
  %v1812 = vpop.f32.mrf.mxu0
  %v1813 = vadd.f32 %v1784, %v1812
  %1814 = vmatmul.bf16.gmra.mxu0 %v612
  %v1815 = vpop.f32.mrf.mxu0
  %v1816 = vadd.f32 %v1787, %v1815
  %v1817 = vpop.f32.mrf.mxu0
  %v1818 = vadd.f32 %v1789, %v1817
  %1819 = vdwg.mxu0
  %v1820 = vmax.f32 %v1801, 0.0
  %v1821 = vmax.f32 %v1803, 0.0
  %v1822 = vmax.f32 %v1806, 0.0
  %v1823 = vmax.f32 %v1808, 0.0
  %v1824 = vmax.f32 %v1811, 0.0
  %v1825 = vmax.f32 %v1813, 0.0
  %v1826 = vmax.f32 %v1816, 0.0
  %v1827 = vmax.f32 %v1818, 0.0
  %v1828 = vpack.c.bf16 %v1820, %v1820
  %v1829 = vpack.c.bf16 %v1821, %v1821
  %v1830 = vpack.c.bf16 %v1822, %v1822
  %v1831 = vpack.c.bf16 %v1823, %v1823
  %v1832 = vpack.c.bf16 %v1824, %v1824
  %v1833 = vpack.c.bf16 %v1825, %v1825
  %v1834 = vpack.c.bf16 %v1826, %v1826
  %v1835 = vpack.c.bf16 %v1827, %v1827
  %1836 = vst.msk [vmem:[#allocation2 + $0xa0] sm:$0xf] %vm695, %v1828
  %1837 = vst.msk [vmem:[#allocation2 + $0xa4] sm:$0xf] %vm695, %v1829
  %1838 = vst.msk [vmem:[#allocation2 + $0xa8] sm:$0xf] %vm695, %v1830
  %1839 = vst.msk [vmem:[#allocation2 + $0xac] sm:$0xf] %vm695, %v1831
  %1840 = vst.msk [vmem:[#allocation2 + $0xb0] sm:$0xf] %vm695, %v1832
  %1841 = vst.msk [vmem:[#allocation2 + $0xb4] sm:$0xf] %vm695, %v1833
  %1842 = vst.msk [vmem:[#allocation2 + $0xb8] sm:$0xf] %vm695, %v1834
  %1843 = vst.msk [vmem:[#allocation2 + $0xbc] sm:$0xf] %vm695, %v1835
  %s1844 = scalar_lea.vmem %s0, 48
  %v1845 = vld [vmem:[%s1844] sm:$0xf]
  %v1846 = vld [vmem:[%s1844 + $0x4] sm:$0xf]
  %v1849 = vunpack.c.l.b16 %v1845
  %v1850 = vunpack.c.l.b16 %v1846
  %v1851 = vpack.c.b16 %v1850, %v1849
  %1853 = vmatpush.bf16.msra.mxu0 0
  %1854 = vmatpush.bf16.msra.mxu0 0
  %1855 = vmatpush.bf16.msra.mxu0 0
  %1856 = vmatpush.bf16.msra.mxu0 0
  %1857 = vmatpush.bf16.msra.mxu0 0
  %1858 = vmatpush.bf16.msra.mxu0 0
  %1859 = vmatpush.bf16.msra.mxu0 0
  %1860 = vmatpush.bf16.msra.mxu0 %v1851
  %1861 = vmatmul.bf16.gmra.mxu0 %v357
  %v1862 = vpop.f32.mrf.mxu0
  %v1863 = vadd.f32 %v112, %v1862
  %v1864 = vpop.f32.mrf.mxu0
  %v1865 = vadd.f32 %v117, %v1864
  %1866 = vmatmul.bf16.gmra.mxu0 %v360
  %v1867 = vpop.f32.mrf.mxu0
  %v1868 = vadd.f32 %v122, %v1867
  %v1869 = vpop.f32.mrf.mxu0
  %v1870 = vadd.f32 %v127, %v1869
  %1871 = vmatmul.bf16.gmra.mxu0 %v363
  %v1872 = vpop.f32.mrf.mxu0
  %v1873 = vadd.f32 %v132, %v1872
  %v1874 = vpop.f32.mrf.mxu0
  %v1875 = vadd.f32 %v137, %v1874
  %1876 = vmatmul.bf16.gmra.mxu0 %v366
  %v1877 = vpop.f32.mrf.mxu0
  %v1878 = vadd.f32 %v142, %v1877
  %v1879 = vpop.f32.mrf.mxu0
  %v1880 = vadd.f32 %v147, %v1879
  %1881 = vmatmul.bf16.gmra.mxu0 %v369
  %v1882 = vpop.f32.mrf.mxu0
  %v1883 = vadd.f32 %v152, %v1882
  %v1884 = vpop.f32.mrf.mxu0
  %v1885 = vadd.f32 %v157, %v1884
  %1886 = vmatmul.bf16.gmra.mxu0 %v372
  %v1887 = vpop.f32.mrf.mxu0
  %v1888 = vadd.f32 %v162, %v1887
  %v1889 = vpop.f32.mrf.mxu0
  %v1890 = vadd.f32 %v167, %v1889
  %1891 = vmatmul.bf16.gmra.mxu0 %v375
  %v1892 = vpop.f32.mrf.mxu0
  %v1893 = vadd.f32 %v172, %v1892
  %v1894 = vpop.f32.mrf.mxu0
  %v1895 = vadd.f32 %v177, %v1894
  %1896 = vmatmul.bf16.gmra.mxu0 %v378
  %v1897 = vpop.f32.mrf.mxu0
  %v1898 = vadd.f32 %v182, %v1897
  %v1899 = vpop.f32.mrf.mxu0
  %v1900 = vadd.f32 %v187, %v1899
  %1901 = vmatmul.bf16.gmra.mxu0 %v381
  %v1902 = vpop.f32.mrf.mxu0
  %v1903 = vadd.f32 %v192, %v1902
  %v1904 = vpop.f32.mrf.mxu0
  %v1905 = vadd.f32 %v197, %v1904
  %1906 = vmatmul.bf16.gmra.mxu0 %v384
  %v1907 = vpop.f32.mrf.mxu0
  %v1908 = vadd.f32 %v202, %v1907
  %v1909 = vpop.f32.mrf.mxu0
  %v1910 = vadd.f32 %v207, %v1909
  %1911 = vmatmul.bf16.gmra.mxu0 %v387
  %v1912 = vpop.f32.mrf.mxu0
  %v1913 = vadd.f32 %v212, %v1912
  %v1914 = vpop.f32.mrf.mxu0
  %v1915 = vadd.f32 %v217, %v1914
  %1916 = vmatmul.bf16.gmra.mxu0 %v390
  %v1917 = vpop.f32.mrf.mxu0
  %v1918 = vadd.f32 %v222, %v1917
  %v1919 = vpop.f32.mrf.mxu0
  %v1920 = vadd.f32 %v227, %v1919
  %1921 = vmatmul.bf16.gmra.mxu0 %v393
  %v1922 = vpop.f32.mrf.mxu0
  %v1923 = vadd.f32 %v232, %v1922
  %v1924 = vpop.f32.mrf.mxu0
  %v1925 = vadd.f32 %v237, %v1924
  %1926 = vmatmul.bf16.gmra.mxu0 %v396
  %v1927 = vpop.f32.mrf.mxu0
  %v1928 = vadd.f32 %v242, %v1927
  %v1929 = vpop.f32.mrf.mxu0
  %v1930 = vadd.f32 %v247, %v1929
  %1931 = vmatmul.bf16.gmra.mxu0 %v399
  %v1932 = vpop.f32.mrf.mxu0
  %v1933 = vadd.f32 %v252, %v1932
  %v1934 = vpop.f32.mrf.mxu0
  %v1935 = vadd.f32 %v257, %v1934
  %1936 = vmatmul.bf16.gmra.mxu0 %v402
  %v1937 = vpop.f32.mrf.mxu0
  %v1938 = vadd.f32 %v262, %v1937
  %v1939 = vpop.f32.mrf.mxu0
  %v1940 = vadd.f32 %v267, %v1939
  %1941 = vdwg.mxu0
  %v1942 = vmax.f32 %v1863, 0.0
  %v1943 = vmax.f32 %v1865, 0.0
  %v1944 = vmax.f32 %v1868, 0.0
  %v1945 = vmax.f32 %v1870, 0.0
  %v1946 = vmax.f32 %v1873, 0.0
  %v1947 = vmax.f32 %v1875, 0.0
  %v1948 = vmax.f32 %v1878, 0.0
  %v1949 = vmax.f32 %v1880, 0.0
  %v1950 = vmax.f32 %v1883, 0.0
  %v1951 = vmax.f32 %v1885, 0.0
  %v1952 = vmax.f32 %v1888, 0.0
  %v1953 = vmax.f32 %v1890, 0.0
  %v1954 = vmax.f32 %v1893, 0.0
  %v1955 = vmax.f32 %v1895, 0.0
  %v1956 = vmax.f32 %v1898, 0.0
  %v1957 = vmax.f32 %v1900, 0.0
  %v1958 = vmax.f32 %v1903, 0.0
  %v1959 = vmax.f32 %v1905, 0.0
  %v1960 = vmax.f32 %v1908, 0.0
  %v1961 = vmax.f32 %v1910, 0.0
  %v1962 = vmax.f32 %v1913, 0.0
  %v1963 = vmax.f32 %v1915, 0.0
  %v1964 = vmax.f32 %v1918, 0.0
  %v1965 = vmax.f32 %v1920, 0.0
  %v1966 = vmax.f32 %v1923, 0.0
  %v1967 = vmax.f32 %v1925, 0.0
  %v1968 = vmax.f32 %v1928, 0.0
  %v1969 = vmax.f32 %v1930, 0.0
  %v1970 = vmax.f32 %v1933, 0.0
  %v1971 = vmax.f32 %v1935, 0.0
  %v1972 = vmax.f32 %v1938, 0.0
  %v1973 = vmax.f32 %v1940, 0.0
  %v1974 = vpack.c.bf16 %v1943, %v1942
  %v1975 = vpack.c.bf16 %v1945, %v1944
  %v1976 = vpack.c.bf16 %v1947, %v1946
  %v1977 = vpack.c.bf16 %v1949, %v1948
  %v1978 = vpack.c.bf16 %v1951, %v1950
  %v1979 = vpack.c.bf16 %v1953, %v1952
  %v1980 = vpack.c.bf16 %v1955, %v1954
  %v1981 = vpack.c.bf16 %v1957, %v1956
  %v1982 = vpack.c.bf16 %v1959, %v1958
  %v1983 = vpack.c.bf16 %v1961, %v1960
  %v1984 = vpack.c.bf16 %v1963, %v1962
  %v1985 = vpack.c.bf16 %v1965, %v1964
  %v1986 = vpack.c.bf16 %v1967, %v1966
  %v1987 = vpack.c.bf16 %v1969, %v1968
  %v1988 = vpack.c.bf16 %v1971, %v1970
  %v1989 = vpack.c.bf16 %v1973, %v1972
  %1990 = vmatpush.bf16.msra.mxu0 %v1981
  %1991 = vmatpush.bf16.msra.mxu0 %v1980
  %1992 = vmatpush.bf16.msra.mxu0 %v1979
  %1993 = vmatpush.bf16.msra.mxu0 %v1978
  %1994 = vmatpush.bf16.msra.mxu0 %v1977
  %1995 = vmatpush.bf16.msra.mxu0 %v1976
  %1996 = vmatpush.bf16.msra.mxu0 %v1975
  %1997 = vmatpush.bf16.msra.mxu0 %v1974
  %1998 = vmatmul.bf16.gmra.mxu0 %v605
  %v1999 = vpop.f32.mrf.mxu0
  %v2000 = vadd.f32 %v544, %v1999
  %v2001 = vpop.f32.mrf.mxu0
  %v2002 = vadd.f32 %v549, %v2001
  %2003 = vmatmul.bf16.gmra.mxu0 %v607
  %v2004 = vpop.f32.mrf.mxu0
  %v2005 = vadd.f32 %v554, %v2004
  %v2006 = vpop.f32.mrf.mxu0
  %v2007 = vadd.f32 %v559, %v2006
  %2008 = vmatmul.bf16.gmra.mxu0 %v609
  %v2009 = vpop.f32.mrf.mxu0
  %v2010 = vadd.f32 %v564, %v2009
  %v2011 = vpop.f32.mrf.mxu0
  %v2012 = vadd.f32 %v569, %v2011
  %2013 = vmatmul.bf16.gmra.mxu0 %v611
  %v2014 = vpop.f32.mrf.mxu0
  %v2015 = vadd.f32 %v574, %v2014
  %v2016 = vpop.f32.mrf.mxu0
  %v2017 = vadd.f32 %v579, %v2016
  %2018 = vdwg.mxu0
  %2019 = vmatpush.bf16.msra.mxu0 %v1989
  %2020 = vmatpush.bf16.msra.mxu0 %v1988
  %2021 = vmatpush.bf16.msra.mxu0 %v1987
  %2022 = vmatpush.bf16.msra.mxu0 %v1986
  %2023 = vmatpush.bf16.msra.mxu0 %v1985
  %2024 = vmatpush.bf16.msra.mxu0 %v1984
  %2025 = vmatpush.bf16.msra.mxu0 %v1983
  %2026 = vmatpush.bf16.msra.mxu0 %v1982
  %2027 = vmatmul.bf16.gmra.mxu0 %v606
  %v2028 = vpop.f32.mrf.mxu0
  %v2029 = vadd.f32 %v2000, %v2028
  %v2030 = vpop.f32.mrf.mxu0
  %v2031 = vadd.f32 %v2002, %v2030
  %2032 = vmatmul.bf16.gmra.mxu0 %v608
  %v2033 = vpop.f32.mrf.mxu0
  %v2034 = vadd.f32 %v2005, %v2033
  %v2035 = vpop.f32.mrf.mxu0
  %v2036 = vadd.f32 %v2007, %v2035
  %2037 = vmatmul.bf16.gmra.mxu0 %v610
  %v2038 = vpop.f32.mrf.mxu0
  %v2039 = vadd.f32 %v2010, %v2038
  %v2040 = vpop.f32.mrf.mxu0
  %v2041 = vadd.f32 %v2012, %v2040
  %2042 = vmatmul.bf16.gmra.mxu0 %v612
  %v2043 = vpop.f32.mrf.mxu0
  %v2044 = vadd.f32 %v2015, %v2043
  %v2045 = vpop.f32.mrf.mxu0
  %v2046 = vadd.f32 %v2017, %v2045
  %2047 = vdwg.mxu0
  %v2048 = vmax.f32 %v2029, 0.0
  %v2049 = vmax.f32 %v2031, 0.0
  %v2050 = vmax.f32 %v2034, 0.0
  %v2051 = vmax.f32 %v2036, 0.0
  %v2052 = vmax.f32 %v2039, 0.0
  %v2053 = vmax.f32 %v2041, 0.0
  %v2054 = vmax.f32 %v2044, 0.0
  %v2055 = vmax.f32 %v2046, 0.0
  %v2056 = vpack.c.bf16 %v2048, %v2048
  %v2057 = vpack.c.bf16 %v2049, %v2049
  %v2058 = vpack.c.bf16 %v2050, %v2050
  %v2059 = vpack.c.bf16 %v2051, %v2051
  %v2060 = vpack.c.bf16 %v2052, %v2052
  %v2061 = vpack.c.bf16 %v2053, %v2053
  %v2062 = vpack.c.bf16 %v2054, %v2054
  %v2063 = vpack.c.bf16 %v2055, %v2055
  %2064 = vst.msk [vmem:[#allocation2 + $0xc0] sm:$0xf] %vm695, %v2056
  %2065 = vst.msk [vmem:[#allocation2 + $0xc4] sm:$0xf] %vm695, %v2057
  %2066 = vst.msk [vmem:[#allocation2 + $0xc8] sm:$0xf] %vm695, %v2058
  %2067 = vst.msk [vmem:[#allocation2 + $0xcc] sm:$0xf] %vm695, %v2059
  %2068 = vst.msk [vmem:[#allocation2 + $0xd0] sm:$0xf] %vm695, %v2060
  %2069 = vst.msk [vmem:[#allocation2 + $0xd4] sm:$0xf] %vm695, %v2061
  %2070 = vst.msk [vmem:[#allocation2 + $0xd8] sm:$0xf] %vm695, %v2062
  %2071 = vst.msk [vmem:[#allocation2 + $0xdc] sm:$0xf] %vm695, %v2063
  %s2072 = scalar_lea.vmem %s0, 56
  %v2073 = vld [vmem:[%s2072] sm:$0xf]
  %v2074 = vld [vmem:[%s2072 + $0x4] sm:$0xf]
  %v2077 = vunpack.c.l.b16 %v2073
  %v2078 = vunpack.c.l.b16 %v2074
  %v2079 = vpack.c.b16 %v2078, %v2077
  %2081 = vmatpush.bf16.msra.mxu0 0
  %2082 = vmatpush.bf16.msra.mxu0 0
  %2083 = vmatpush.bf16.msra.mxu0 0
  %2084 = vmatpush.bf16.msra.mxu0 0
  %2085 = vmatpush.bf16.msra.mxu0 0
  %2086 = vmatpush.bf16.msra.mxu0 0
  %2087 = vmatpush.bf16.msra.mxu0 0
  %2088 = vmatpush.bf16.msra.mxu0 %v2079
  %2089 = vmatmul.bf16.gmra.mxu0 %v357
  %v2090 = vpop.f32.mrf.mxu0
  %v2091 = vadd.f32 %v112, %v2090
  %v2092 = vpop.f32.mrf.mxu0
  %v2093 = vadd.f32 %v117, %v2092
  %2094 = vmatmul.bf16.gmra.mxu0 %v360
  %v2095 = vpop.f32.mrf.mxu0
  %v2096 = vadd.f32 %v122, %v2095
  %v2097 = vpop.f32.mrf.mxu0
  %v2098 = vadd.f32 %v127, %v2097
  %2099 = vmatmul.bf16.gmra.mxu0 %v363
  %v2100 = vpop.f32.mrf.mxu0
  %v2101 = vadd.f32 %v132, %v2100
  %v2102 = vpop.f32.mrf.mxu0
  %v2103 = vadd.f32 %v137, %v2102
  %2104 = vmatmul.bf16.gmra.mxu0 %v366
  %v2105 = vpop.f32.mrf.mxu0
  %v2106 = vadd.f32 %v142, %v2105
  %v2107 = vpop.f32.mrf.mxu0
  %v2108 = vadd.f32 %v147, %v2107
  %2109 = vmatmul.bf16.gmra.mxu0 %v369
  %v2110 = vpop.f32.mrf.mxu0
  %v2111 = vadd.f32 %v152, %v2110
  %v2112 = vpop.f32.mrf.mxu0
  %v2113 = vadd.f32 %v157, %v2112
  %2114 = vmatmul.bf16.gmra.mxu0 %v372
  %v2115 = vpop.f32.mrf.mxu0
  %v2116 = vadd.f32 %v162, %v2115
  %v2117 = vpop.f32.mrf.mxu0
  %v2118 = vadd.f32 %v167, %v2117
  %2119 = vmatmul.bf16.gmra.mxu0 %v375
  %v2120 = vpop.f32.mrf.mxu0
  %v2121 = vadd.f32 %v172, %v2120
  %v2122 = vpop.f32.mrf.mxu0
  %v2123 = vadd.f32 %v177, %v2122
  %2124 = vmatmul.bf16.gmra.mxu0 %v378
  %v2125 = vpop.f32.mrf.mxu0
  %v2126 = vadd.f32 %v182, %v2125
  %v2127 = vpop.f32.mrf.mxu0
  %v2128 = vadd.f32 %v187, %v2127
  %2129 = vmatmul.bf16.gmra.mxu0 %v381
  %v2130 = vpop.f32.mrf.mxu0
  %v2131 = vadd.f32 %v192, %v2130
  %v2132 = vpop.f32.mrf.mxu0
  %v2133 = vadd.f32 %v197, %v2132
  %2134 = vmatmul.bf16.gmra.mxu0 %v384
  %v2135 = vpop.f32.mrf.mxu0
  %v2136 = vadd.f32 %v202, %v2135
  %v2137 = vpop.f32.mrf.mxu0
  %v2138 = vadd.f32 %v207, %v2137
  %2139 = vmatmul.bf16.gmra.mxu0 %v387
  %v2140 = vpop.f32.mrf.mxu0
  %v2141 = vadd.f32 %v212, %v2140
  %v2142 = vpop.f32.mrf.mxu0
  %v2143 = vadd.f32 %v217, %v2142
  %2144 = vmatmul.bf16.gmra.mxu0 %v390
  %v2145 = vpop.f32.mrf.mxu0
  %v2146 = vadd.f32 %v222, %v2145
  %v2147 = vpop.f32.mrf.mxu0
  %v2148 = vadd.f32 %v227, %v2147
  %2149 = vmatmul.bf16.gmra.mxu0 %v393
  %v2150 = vpop.f32.mrf.mxu0
  %v2151 = vadd.f32 %v232, %v2150
  %v2152 = vpop.f32.mrf.mxu0
  %v2153 = vadd.f32 %v237, %v2152
  %2154 = vmatmul.bf16.gmra.mxu0 %v396
  %v2155 = vpop.f32.mrf.mxu0
  %v2156 = vadd.f32 %v242, %v2155
  %v2157 = vpop.f32.mrf.mxu0
  %v2158 = vadd.f32 %v247, %v2157
  %2159 = vmatmul.bf16.gmra.mxu0 %v399
  %v2160 = vpop.f32.mrf.mxu0
  %v2161 = vadd.f32 %v252, %v2160
  %v2162 = vpop.f32.mrf.mxu0
  %v2163 = vadd.f32 %v257, %v2162
  %2164 = vmatmul.bf16.gmra.mxu0 %v402
  %v2165 = vpop.f32.mrf.mxu0
  %v2166 = vadd.f32 %v262, %v2165
  %v2167 = vpop.f32.mrf.mxu0
  %v2168 = vadd.f32 %v267, %v2167
  %2169 = vdwg.mxu0
  %v2170 = vmax.f32 %v2091, 0.0
  %v2171 = vmax.f32 %v2093, 0.0
  %v2172 = vmax.f32 %v2096, 0.0
  %v2173 = vmax.f32 %v2098, 0.0
  %v2174 = vmax.f32 %v2101, 0.0
  %v2175 = vmax.f32 %v2103, 0.0
  %v2176 = vmax.f32 %v2106, 0.0
  %v2177 = vmax.f32 %v2108, 0.0
  %v2178 = vmax.f32 %v2111, 0.0
  %v2179 = vmax.f32 %v2113, 0.0
  %v2180 = vmax.f32 %v2116, 0.0
  %v2181 = vmax.f32 %v2118, 0.0
  %v2182 = vmax.f32 %v2121, 0.0
  %v2183 = vmax.f32 %v2123, 0.0
  %v2184 = vmax.f32 %v2126, 0.0
  %v2185 = vmax.f32 %v2128, 0.0
  %v2186 = vmax.f32 %v2131, 0.0
  %v2187 = vmax.f32 %v2133, 0.0
  %v2188 = vmax.f32 %v2136, 0.0
  %v2189 = vmax.f32 %v2138, 0.0
  %v2190 = vmax.f32 %v2141, 0.0
  %v2191 = vmax.f32 %v2143, 0.0
  %v2192 = vmax.f32 %v2146, 0.0
  %v2193 = vmax.f32 %v2148, 0.0
  %v2194 = vmax.f32 %v2151, 0.0
  %v2195 = vmax.f32 %v2153, 0.0
  %v2196 = vmax.f32 %v2156, 0.0
  %v2197 = vmax.f32 %v2158, 0.0
  %v2198 = vmax.f32 %v2161, 0.0
  %v2199 = vmax.f32 %v2163, 0.0
  %v2200 = vmax.f32 %v2166, 0.0
  %v2201 = vmax.f32 %v2168, 0.0
  %v2202 = vpack.c.bf16 %v2171, %v2170
  %v2203 = vpack.c.bf16 %v2173, %v2172
  %v2204 = vpack.c.bf16 %v2175, %v2174
  %v2205 = vpack.c.bf16 %v2177, %v2176
  %v2206 = vpack.c.bf16 %v2179, %v2178
  %v2207 = vpack.c.bf16 %v2181, %v2180
  %v2208 = vpack.c.bf16 %v2183, %v2182
  %v2209 = vpack.c.bf16 %v2185, %v2184
  %v2210 = vpack.c.bf16 %v2187, %v2186
  %v2211 = vpack.c.bf16 %v2189, %v2188
  %v2212 = vpack.c.bf16 %v2191, %v2190
  %v2213 = vpack.c.bf16 %v2193, %v2192
  %v2214 = vpack.c.bf16 %v2195, %v2194
  %v2215 = vpack.c.bf16 %v2197, %v2196
  %v2216 = vpack.c.bf16 %v2199, %v2198
  %v2217 = vpack.c.bf16 %v2201, %v2200
  %2218 = vmatpush.bf16.msra.mxu0 %v2209
  %2219 = vmatpush.bf16.msra.mxu0 %v2208
  %2220 = vmatpush.bf16.msra.mxu0 %v2207
  %2221 = vmatpush.bf16.msra.mxu0 %v2206
  %2222 = vmatpush.bf16.msra.mxu0 %v2205
  %2223 = vmatpush.bf16.msra.mxu0 %v2204
  %2224 = vmatpush.bf16.msra.mxu0 %v2203
  %2225 = vmatpush.bf16.msra.mxu0 %v2202
  %2226 = vmatmul.bf16.gmra.mxu0 %v605
  %v2227 = vpop.f32.mrf.mxu0
  %v2228 = vadd.f32 %v544, %v2227
  %v2229 = vpop.f32.mrf.mxu0
  %v2230 = vadd.f32 %v549, %v2229
  %2231 = vmatmul.bf16.gmra.mxu0 %v607
  %v2232 = vpop.f32.mrf.mxu0
  %v2233 = vadd.f32 %v554, %v2232
  %v2234 = vpop.f32.mrf.mxu0
  %v2235 = vadd.f32 %v559, %v2234
  %2236 = vmatmul.bf16.gmra.mxu0 %v609
  %v2237 = vpop.f32.mrf.mxu0
  %v2238 = vadd.f32 %v564, %v2237
  %v2239 = vpop.f32.mrf.mxu0
  %v2240 = vadd.f32 %v569, %v2239
  %2241 = vmatmul.bf16.gmra.mxu0 %v611
  %v2242 = vpop.f32.mrf.mxu0
  %v2243 = vadd.f32 %v574, %v2242
  %v2244 = vpop.f32.mrf.mxu0
  %v2245 = vadd.f32 %v579, %v2244
  %2246 = vdwg.mxu0
  %2247 = vmatpush.bf16.msra.mxu0 %v2217
  %2248 = vmatpush.bf16.msra.mxu0 %v2216
  %2249 = vmatpush.bf16.msra.mxu0 %v2215
  %2250 = vmatpush.bf16.msra.mxu0 %v2214
  %2251 = vmatpush.bf16.msra.mxu0 %v2213
  %2252 = vmatpush.bf16.msra.mxu0 %v2212
  %2253 = vmatpush.bf16.msra.mxu0 %v2211
  %2254 = vmatpush.bf16.msra.mxu0 %v2210
  %2255 = vmatmul.bf16.gmra.mxu0 %v606
  %v2256 = vpop.f32.mrf.mxu0
  %v2257 = vadd.f32 %v2228, %v2256
  %v2258 = vpop.f32.mrf.mxu0
  %v2259 = vadd.f32 %v2230, %v2258
  %2260 = vmatmul.bf16.gmra.mxu0 %v608
  %v2261 = vpop.f32.mrf.mxu0
  %v2262 = vadd.f32 %v2233, %v2261
  %v2263 = vpop.f32.mrf.mxu0
  %v2264 = vadd.f32 %v2235, %v2263
  %2265 = vmatmul.bf16.gmra.mxu0 %v610
  %v2266 = vpop.f32.mrf.mxu0
  %v2267 = vadd.f32 %v2238, %v2266
  %v2268 = vpop.f32.mrf.mxu0
  %v2269 = vadd.f32 %v2240, %v2268
  %2270 = vmatmul.bf16.gmra.mxu0 %v612
  %v2271 = vpop.f32.mrf.mxu0
  %v2272 = vadd.f32 %v2243, %v2271
  %v2273 = vpop.f32.mrf.mxu0
  %v2274 = vadd.f32 %v2245, %v2273
  %2275 = vdwg.mxu0
  %v2276 = vmax.f32 %v2257, 0.0
  %v2277 = vmax.f32 %v2259, 0.0
  %v2278 = vmax.f32 %v2262, 0.0
  %v2279 = vmax.f32 %v2264, 0.0
  %v2280 = vmax.f32 %v2267, 0.0
  %v2281 = vmax.f32 %v2269, 0.0
  %v2282 = vmax.f32 %v2272, 0.0
  %v2283 = vmax.f32 %v2274, 0.0
  %v2284 = vpack.c.bf16 %v2276, %v2276
  %v2285 = vpack.c.bf16 %v2277, %v2277
  %v2286 = vpack.c.bf16 %v2278, %v2278
  %v2287 = vpack.c.bf16 %v2279, %v2279
  %v2288 = vpack.c.bf16 %v2280, %v2280
  %v2289 = vpack.c.bf16 %v2281, %v2281
  %v2290 = vpack.c.bf16 %v2282, %v2282
  %v2291 = vpack.c.bf16 %v2283, %v2283
  %2292 = vst.msk [vmem:[#allocation2 + $0xe0] sm:$0xf] %vm695, %v2284
  %2293 = vst.msk [vmem:[#allocation2 + $0xe4] sm:$0xf] %vm695, %v2285
  %2294 = vst.msk [vmem:[#allocation2 + $0xe8] sm:$0xf] %vm695, %v2286
  %2295 = vst.msk [vmem:[#allocation2 + $0xec] sm:$0xf] %vm695, %v2287
  %2296 = vst.msk [vmem:[#allocation2 + $0xf0] sm:$0xf] %vm695, %v2288
  %2297 = vst.msk [vmem:[#allocation2 + $0xf4] sm:$0xf] %vm695, %v2289
  %2298 = vst.msk [vmem:[#allocation2 + $0xf8] sm:$0xf] %vm695, %v2290
  %2299 = vst.msk [vmem:[#allocation2 + $0xfc] sm:$0xf] %vm695, %v2291
  %s2300 = scalar_lea.vmem %s0, 64
  %v2301 = vld [vmem:[%s2300] sm:$0xf]
  %v2302 = vld [vmem:[%s2300 + $0x4] sm:$0xf]
  %v2305 = vunpack.c.l.b16 %v2301
  %v2306 = vunpack.c.l.b16 %v2302
  %v2307 = vpack.c.b16 %v2306, %v2305
  %2309 = vmatpush.bf16.msra.mxu0 0
  %2310 = vmatpush.bf16.msra.mxu0 0
  %2311 = vmatpush.bf16.msra.mxu0 0
  %2312 = vmatpush.bf16.msra.mxu0 0
  %2313 = vmatpush.bf16.msra.mxu0 0
  %2314 = vmatpush.bf16.msra.mxu0 0
  %2315 = vmatpush.bf16.msra.mxu0 0
  %2316 = vmatpush.bf16.msra.mxu0 %v2307
  %2317 = vmatmul.bf16.gmra.mxu0 %v357
  %v2318 = vpop.f32.mrf.mxu0
  %v2319 = vadd.f32 %v112, %v2318
  %v2320 = vpop.f32.mrf.mxu0
  %v2321 = vadd.f32 %v117, %v2320
  %2322 = vmatmul.bf16.gmra.mxu0 %v360
  %v2323 = vpop.f32.mrf.mxu0
  %v2324 = vadd.f32 %v122, %v2323
  %v2325 = vpop.f32.mrf.mxu0
  %v2326 = vadd.f32 %v127, %v2325
  %2327 = vmatmul.bf16.gmra.mxu0 %v363
  %v2328 = vpop.f32.mrf.mxu0
  %v2329 = vadd.f32 %v132, %v2328
  %v2330 = vpop.f32.mrf.mxu0
  %v2331 = vadd.f32 %v137, %v2330
  %2332 = vmatmul.bf16.gmra.mxu0 %v366
  %v2333 = vpop.f32.mrf.mxu0
  %v2334 = vadd.f32 %v142, %v2333
  %v2335 = vpop.f32.mrf.mxu0
  %v2336 = vadd.f32 %v147, %v2335
  %2337 = vmatmul.bf16.gmra.mxu0 %v369
  %v2338 = vpop.f32.mrf.mxu0
  %v2339 = vadd.f32 %v152, %v2338
  %v2340 = vpop.f32.mrf.mxu0
  %v2341 = vadd.f32 %v157, %v2340
  %2342 = vmatmul.bf16.gmra.mxu0 %v372
  %v2343 = vpop.f32.mrf.mxu0
  %v2344 = vadd.f32 %v162, %v2343
  %v2345 = vpop.f32.mrf.mxu0
  %v2346 = vadd.f32 %v167, %v2345
  %2347 = vmatmul.bf16.gmra.mxu0 %v375
  %v2348 = vpop.f32.mrf.mxu0
  %v2349 = vadd.f32 %v172, %v2348
  %v2350 = vpop.f32.mrf.mxu0
  %v2351 = vadd.f32 %v177, %v2350
  %2352 = vmatmul.bf16.gmra.mxu0 %v378
  %v2353 = vpop.f32.mrf.mxu0
  %v2354 = vadd.f32 %v182, %v2353
  %v2355 = vpop.f32.mrf.mxu0
  %v2356 = vadd.f32 %v187, %v2355
  %2357 = vmatmul.bf16.gmra.mxu0 %v381
  %v2358 = vpop.f32.mrf.mxu0
  %v2359 = vadd.f32 %v192, %v2358
  %v2360 = vpop.f32.mrf.mxu0
  %v2361 = vadd.f32 %v197, %v2360
  %2362 = vmatmul.bf16.gmra.mxu0 %v384
  %v2363 = vpop.f32.mrf.mxu0
  %v2364 = vadd.f32 %v202, %v2363
  %v2365 = vpop.f32.mrf.mxu0
  %v2366 = vadd.f32 %v207, %v2365
  %2367 = vmatmul.bf16.gmra.mxu0 %v387
  %v2368 = vpop.f32.mrf.mxu0
  %v2369 = vadd.f32 %v212, %v2368
  %v2370 = vpop.f32.mrf.mxu0
  %v2371 = vadd.f32 %v217, %v2370
  %2372 = vmatmul.bf16.gmra.mxu0 %v390
  %v2373 = vpop.f32.mrf.mxu0
  %v2374 = vadd.f32 %v222, %v2373
  %v2375 = vpop.f32.mrf.mxu0
  %v2376 = vadd.f32 %v227, %v2375
  %2377 = vmatmul.bf16.gmra.mxu0 %v393
  %v2378 = vpop.f32.mrf.mxu0
  %v2379 = vadd.f32 %v232, %v2378
  %v2380 = vpop.f32.mrf.mxu0
  %v2381 = vadd.f32 %v237, %v2380
  %2382 = vmatmul.bf16.gmra.mxu0 %v396
  %v2383 = vpop.f32.mrf.mxu0
  %v2384 = vadd.f32 %v242, %v2383
  %v2385 = vpop.f32.mrf.mxu0
  %v2386 = vadd.f32 %v247, %v2385
  %2387 = vmatmul.bf16.gmra.mxu0 %v399
  %v2388 = vpop.f32.mrf.mxu0
  %v2389 = vadd.f32 %v252, %v2388
  %v2390 = vpop.f32.mrf.mxu0
  %v2391 = vadd.f32 %v257, %v2390
  %2392 = vmatmul.bf16.gmra.mxu0 %v402
  %v2393 = vpop.f32.mrf.mxu0
  %v2394 = vadd.f32 %v262, %v2393
  %v2395 = vpop.f32.mrf.mxu0
  %v2396 = vadd.f32 %v267, %v2395
  %2397 = vdwg.mxu0
  %v2398 = vmax.f32 %v2319, 0.0
  %v2399 = vmax.f32 %v2321, 0.0
  %v2400 = vmax.f32 %v2324, 0.0
  %v2401 = vmax.f32 %v2326, 0.0
  %v2402 = vmax.f32 %v2329, 0.0
  %v2403 = vmax.f32 %v2331, 0.0
  %v2404 = vmax.f32 %v2334, 0.0
  %v2405 = vmax.f32 %v2336, 0.0
  %v2406 = vmax.f32 %v2339, 0.0
  %v2407 = vmax.f32 %v2341, 0.0
  %v2408 = vmax.f32 %v2344, 0.0
  %v2409 = vmax.f32 %v2346, 0.0
  %v2410 = vmax.f32 %v2349, 0.0
  %v2411 = vmax.f32 %v2351, 0.0
  %v2412 = vmax.f32 %v2354, 0.0
  %v2413 = vmax.f32 %v2356, 0.0
  %v2414 = vmax.f32 %v2359, 0.0
  %v2415 = vmax.f32 %v2361, 0.0
  %v2416 = vmax.f32 %v2364, 0.0
  %v2417 = vmax.f32 %v2366, 0.0
  %v2418 = vmax.f32 %v2369, 0.0
  %v2419 = vmax.f32 %v2371, 0.0
  %v2420 = vmax.f32 %v2374, 0.0
  %v2421 = vmax.f32 %v2376, 0.0
  %v2422 = vmax.f32 %v2379, 0.0
  %v2423 = vmax.f32 %v2381, 0.0
  %v2424 = vmax.f32 %v2384, 0.0
  %v2425 = vmax.f32 %v2386, 0.0
  %v2426 = vmax.f32 %v2389, 0.0
  %v2427 = vmax.f32 %v2391, 0.0
  %v2428 = vmax.f32 %v2394, 0.0
  %v2429 = vmax.f32 %v2396, 0.0
  %v2430 = vpack.c.bf16 %v2399, %v2398
  %v2431 = vpack.c.bf16 %v2401, %v2400
  %v2432 = vpack.c.bf16 %v2403, %v2402
  %v2433 = vpack.c.bf16 %v2405, %v2404
  %v2434 = vpack.c.bf16 %v2407, %v2406
  %v2435 = vpack.c.bf16 %v2409, %v2408
  %v2436 = vpack.c.bf16 %v2411, %v2410
  %v2437 = vpack.c.bf16 %v2413, %v2412
  %v2438 = vpack.c.bf16 %v2415, %v2414
  %v2439 = vpack.c.bf16 %v2417, %v2416
  %v2440 = vpack.c.bf16 %v2419, %v2418
  %v2441 = vpack.c.bf16 %v2421, %v2420
  %v2442 = vpack.c.bf16 %v2423, %v2422
  %v2443 = vpack.c.bf16 %v2425, %v2424
  %v2444 = vpack.c.bf16 %v2427, %v2426
  %v2445 = vpack.c.bf16 %v2429, %v2428
  %2446 = vmatpush.bf16.msra.mxu0 %v2437
  %2447 = vmatpush.bf16.msra.mxu0 %v2436
  %2448 = vmatpush.bf16.msra.mxu0 %v2435
  %2449 = vmatpush.bf16.msra.mxu0 %v2434
  %2450 = vmatpush.bf16.msra.mxu0 %v2433
  %2451 = vmatpush.bf16.msra.mxu0 %v2432
  %2452 = vmatpush.bf16.msra.mxu0 %v2431
  %2453 = vmatpush.bf16.msra.mxu0 %v2430
  %2454 = vmatmul.bf16.gmra.mxu0 %v605
  %v2455 = vpop.f32.mrf.mxu0
  %v2456 = vadd.f32 %v544, %v2455
  %v2457 = vpop.f32.mrf.mxu0
  %v2458 = vadd.f32 %v549, %v2457
  %2459 = vmatmul.bf16.gmra.mxu0 %v607
  %v2460 = vpop.f32.mrf.mxu0
  %v2461 = vadd.f32 %v554, %v2460
  %v2462 = vpop.f32.mrf.mxu0
  %v2463 = vadd.f32 %v559, %v2462
  %2464 = vmatmul.bf16.gmra.mxu0 %v609
  %v2465 = vpop.f32.mrf.mxu0
  %v2466 = vadd.f32 %v564, %v2465
  %v2467 = vpop.f32.mrf.mxu0
  %v2468 = vadd.f32 %v569, %v2467
  %2469 = vmatmul.bf16.gmra.mxu0 %v611
  %v2470 = vpop.f32.mrf.mxu0
  %v2471 = vadd.f32 %v574, %v2470
  %v2472 = vpop.f32.mrf.mxu0
  %v2473 = vadd.f32 %v579, %v2472
  %2474 = vdwg.mxu0
  %2475 = vmatpush.bf16.msra.mxu0 %v2445
  %2476 = vmatpush.bf16.msra.mxu0 %v2444
  %2477 = vmatpush.bf16.msra.mxu0 %v2443
  %2478 = vmatpush.bf16.msra.mxu0 %v2442
  %2479 = vmatpush.bf16.msra.mxu0 %v2441
  %2480 = vmatpush.bf16.msra.mxu0 %v2440
  %2481 = vmatpush.bf16.msra.mxu0 %v2439
  %2482 = vmatpush.bf16.msra.mxu0 %v2438
  %2483 = vmatmul.bf16.gmra.mxu0 %v606
  %v2484 = vpop.f32.mrf.mxu0
  %v2485 = vadd.f32 %v2456, %v2484
  %v2486 = vpop.f32.mrf.mxu0
  %v2487 = vadd.f32 %v2458, %v2486
  %2488 = vmatmul.bf16.gmra.mxu0 %v608
  %v2489 = vpop.f32.mrf.mxu0
  %v2490 = vadd.f32 %v2461, %v2489
  %v2491 = vpop.f32.mrf.mxu0
  %v2492 = vadd.f32 %v2463, %v2491
  %2493 = vmatmul.bf16.gmra.mxu0 %v610
  %v2494 = vpop.f32.mrf.mxu0
  %v2495 = vadd.f32 %v2466, %v2494
  %v2496 = vpop.f32.mrf.mxu0
  %v2497 = vadd.f32 %v2468, %v2496
  %2498 = vmatmul.bf16.gmra.mxu0 %v612
  %v2499 = vpop.f32.mrf.mxu0
  %v2500 = vadd.f32 %v2471, %v2499
  %v2501 = vpop.f32.mrf.mxu0
  %v2502 = vadd.f32 %v2473, %v2501
  %2503 = vdwg.mxu0
  %v2504 = vmax.f32 %v2485, 0.0
  %v2505 = vmax.f32 %v2487, 0.0
  %v2506 = vmax.f32 %v2490, 0.0
  %v2507 = vmax.f32 %v2492, 0.0
  %v2508 = vmax.f32 %v2495, 0.0
  %v2509 = vmax.f32 %v2497, 0.0
  %v2510 = vmax.f32 %v2500, 0.0
  %v2511 = vmax.f32 %v2502, 0.0
  %v2512 = vpack.c.bf16 %v2504, %v2504
  %v2513 = vpack.c.bf16 %v2505, %v2505
  %v2514 = vpack.c.bf16 %v2506, %v2506
  %v2515 = vpack.c.bf16 %v2507, %v2507
  %v2516 = vpack.c.bf16 %v2508, %v2508
  %v2517 = vpack.c.bf16 %v2509, %v2509
  %v2518 = vpack.c.bf16 %v2510, %v2510
  %v2519 = vpack.c.bf16 %v2511, %v2511
  %2520 = vst.msk [vmem:[#allocation2 + $0x100] sm:$0xf] %vm695, %v2512
  %2521 = vst.msk [vmem:[#allocation2 + $0x104] sm:$0xf] %vm695, %v2513
  %2522 = vst.msk [vmem:[#allocation2 + $0x108] sm:$0xf] %vm695, %v2514
  %2523 = vst.msk [vmem:[#allocation2 + $0x10c] sm:$0xf] %vm695, %v2515
  %2524 = vst.msk [vmem:[#allocation2 + $0x110] sm:$0xf] %vm695, %v2516
  %2525 = vst.msk [vmem:[#allocation2 + $0x114] sm:$0xf] %vm695, %v2517
  %2526 = vst.msk [vmem:[#allocation2 + $0x118] sm:$0xf] %vm695, %v2518
  %2527 = vst.msk [vmem:[#allocation2 + $0x11c] sm:$0xf] %vm695, %v2519
  %s2528 = scalar_lea.vmem %s0, 72
  %v2529 = vld [vmem:[%s2528] sm:$0xf]
  %v2530 = vld [vmem:[%s2528 + $0x4] sm:$0xf]
  %v2533 = vunpack.c.l.b16 %v2529
  %v2534 = vunpack.c.l.b16 %v2530
  %v2535 = vpack.c.b16 %v2534, %v2533
  %2537 = vmatpush.bf16.msra.mxu0 0
  %2538 = vmatpush.bf16.msra.mxu0 0
  %2539 = vmatpush.bf16.msra.mxu0 0
  %2540 = vmatpush.bf16.msra.mxu0 0
  %2541 = vmatpush.bf16.msra.mxu0 0
  %2542 = vmatpush.bf16.msra.mxu0 0
  %2543 = vmatpush.bf16.msra.mxu0 0
  %2544 = vmatpush.bf16.msra.mxu0 %v2535
  %2545 = vmatmul.bf16.gmra.mxu0 %v357
  %v2546 = vpop.f32.mrf.mxu0
  %v2547 = vadd.f32 %v112, %v2546
  %v2548 = vpop.f32.mrf.mxu0
  %v2549 = vadd.f32 %v117, %v2548
  %2550 = vmatmul.bf16.gmra.mxu0 %v360
  %v2551 = vpop.f32.mrf.mxu0
  %v2552 = vadd.f32 %v122, %v2551
  %v2553 = vpop.f32.mrf.mxu0
  %v2554 = vadd.f32 %v127, %v2553
  %2555 = vmatmul.bf16.gmra.mxu0 %v363
  %v2556 = vpop.f32.mrf.mxu0
  %v2557 = vadd.f32 %v132, %v2556
  %v2558 = vpop.f32.mrf.mxu0
  %v2559 = vadd.f32 %v137, %v2558
  %2560 = vmatmul.bf16.gmra.mxu0 %v366
  %v2561 = vpop.f32.mrf.mxu0
  %v2562 = vadd.f32 %v142, %v2561
  %v2563 = vpop.f32.mrf.mxu0
  %v2564 = vadd.f32 %v147, %v2563
  %2565 = vmatmul.bf16.gmra.mxu0 %v369
  %v2566 = vpop.f32.mrf.mxu0
  %v2567 = vadd.f32 %v152, %v2566
  %v2568 = vpop.f32.mrf.mxu0
  %v2569 = vadd.f32 %v157, %v2568
  %2570 = vmatmul.bf16.gmra.mxu0 %v372
  %v2571 = vpop.f32.mrf.mxu0
  %v2572 = vadd.f32 %v162, %v2571
  %v2573 = vpop.f32.mrf.mxu0
  %v2574 = vadd.f32 %v167, %v2573
  %2575 = vmatmul.bf16.gmra.mxu0 %v375
  %v2576 = vpop.f32.mrf.mxu0
  %v2577 = vadd.f32 %v172, %v2576
  %v2578 = vpop.f32.mrf.mxu0
  %v2579 = vadd.f32 %v177, %v2578
  %2580 = vmatmul.bf16.gmra.mxu0 %v378
  %v2581 = vpop.f32.mrf.mxu0
  %v2582 = vadd.f32 %v182, %v2581
  %v2583 = vpop.f32.mrf.mxu0
  %v2584 = vadd.f32 %v187, %v2583
  %2585 = vmatmul.bf16.gmra.mxu0 %v381
  %v2586 = vpop.f32.mrf.mxu0
  %v2587 = vadd.f32 %v192, %v2586
  %v2588 = vpop.f32.mrf.mxu0
  %v2589 = vadd.f32 %v197, %v2588
  %2590 = vmatmul.bf16.gmra.mxu0 %v384
  %v2591 = vpop.f32.mrf.mxu0
  %v2592 = vadd.f32 %v202, %v2591
  %v2593 = vpop.f32.mrf.mxu0
  %v2594 = vadd.f32 %v207, %v2593
  %2595 = vmatmul.bf16.gmra.mxu0 %v387
  %v2596 = vpop.f32.mrf.mxu0
  %v2597 = vadd.f32 %v212, %v2596
  %v2598 = vpop.f32.mrf.mxu0
  %v2599 = vadd.f32 %v217, %v2598
  %2600 = vmatmul.bf16.gmra.mxu0 %v390
  %v2601 = vpop.f32.mrf.mxu0
  %v2602 = vadd.f32 %v222, %v2601
  %v2603 = vpop.f32.mrf.mxu0
  %v2604 = vadd.f32 %v227, %v2603
  %2605 = vmatmul.bf16.gmra.mxu0 %v393
  %v2606 = vpop.f32.mrf.mxu0
  %v2607 = vadd.f32 %v232, %v2606
  %v2608 = vpop.f32.mrf.mxu0
  %v2609 = vadd.f32 %v237, %v2608
  %2610 = vmatmul.bf16.gmra.mxu0 %v396
  %v2611 = vpop.f32.mrf.mxu0
  %v2612 = vadd.f32 %v242, %v2611
  %v2613 = vpop.f32.mrf.mxu0
  %v2614 = vadd.f32 %v247, %v2613
  %2615 = vmatmul.bf16.gmra.mxu0 %v399
  %v2616 = vpop.f32.mrf.mxu0
  %v2617 = vadd.f32 %v252, %v2616
  %v2618 = vpop.f32.mrf.mxu0
  %v2619 = vadd.f32 %v257, %v2618
  %2620 = vmatmul.bf16.gmra.mxu0 %v402
  %v2621 = vpop.f32.mrf.mxu0
  %v2622 = vadd.f32 %v262, %v2621
  %v2623 = vpop.f32.mrf.mxu0
  %v2624 = vadd.f32 %v267, %v2623
  %2625 = vdwg.mxu0
  %v2626 = vmax.f32 %v2547, 0.0
  %v2627 = vmax.f32 %v2549, 0.0
  %v2628 = vmax.f32 %v2552, 0.0
  %v2629 = vmax.f32 %v2554, 0.0
  %v2630 = vmax.f32 %v2557, 0.0
  %v2631 = vmax.f32 %v2559, 0.0
  %v2632 = vmax.f32 %v2562, 0.0
  %v2633 = vmax.f32 %v2564, 0.0
  %v2634 = vmax.f32 %v2567, 0.0
  %v2635 = vmax.f32 %v2569, 0.0
  %v2636 = vmax.f32 %v2572, 0.0
  %v2637 = vmax.f32 %v2574, 0.0
  %v2638 = vmax.f32 %v2577, 0.0
  %v2639 = vmax.f32 %v2579, 0.0
  %v2640 = vmax.f32 %v2582, 0.0
  %v2641 = vmax.f32 %v2584, 0.0
  %v2642 = vmax.f32 %v2587, 0.0
  %v2643 = vmax.f32 %v2589, 0.0
  %v2644 = vmax.f32 %v2592, 0.0
  %v2645 = vmax.f32 %v2594, 0.0
  %v2646 = vmax.f32 %v2597, 0.0
  %v2647 = vmax.f32 %v2599, 0.0
  %v2648 = vmax.f32 %v2602, 0.0
  %v2649 = vmax.f32 %v2604, 0.0
  %v2650 = vmax.f32 %v2607, 0.0
  %v2651 = vmax.f32 %v2609, 0.0
  %v2652 = vmax.f32 %v2612, 0.0
  %v2653 = vmax.f32 %v2614, 0.0
  %v2654 = vmax.f32 %v2617, 0.0
  %v2655 = vmax.f32 %v2619, 0.0
  %v2656 = vmax.f32 %v2622, 0.0
  %v2657 = vmax.f32 %v2624, 0.0
  %v2658 = vpack.c.bf16 %v2627, %v2626
  %v2659 = vpack.c.bf16 %v2629, %v2628
  %v2660 = vpack.c.bf16 %v2631, %v2630
  %v2661 = vpack.c.bf16 %v2633, %v2632
  %v2662 = vpack.c.bf16 %v2635, %v2634
  %v2663 = vpack.c.bf16 %v2637, %v2636
  %v2664 = vpack.c.bf16 %v2639, %v2638
  %v2665 = vpack.c.bf16 %v2641, %v2640
  %v2666 = vpack.c.bf16 %v2643, %v2642
  %v2667 = vpack.c.bf16 %v2645, %v2644
  %v2668 = vpack.c.bf16 %v2647, %v2646
  %v2669 = vpack.c.bf16 %v2649, %v2648
  %v2670 = vpack.c.bf16 %v2651, %v2650
  %v2671 = vpack.c.bf16 %v2653, %v2652
  %v2672 = vpack.c.bf16 %v2655, %v2654
  %v2673 = vpack.c.bf16 %v2657, %v2656
  %2674 = vmatpush.bf16.msra.mxu0 %v2665
  %2675 = vmatpush.bf16.msra.mxu0 %v2664
  %2676 = vmatpush.bf16.msra.mxu0 %v2663
  %2677 = vmatpush.bf16.msra.mxu0 %v2662
  %2678 = vmatpush.bf16.msra.mxu0 %v2661
  %2679 = vmatpush.bf16.msra.mxu0 %v2660
  %2680 = vmatpush.bf16.msra.mxu0 %v2659
  %2681 = vmatpush.bf16.msra.mxu0 %v2658
  %2682 = vmatmul.bf16.gmra.mxu0 %v605
  %v2683 = vpop.f32.mrf.mxu0
  %v2684 = vadd.f32 %v544, %v2683
  %v2685 = vpop.f32.mrf.mxu0
  %v2686 = vadd.f32 %v549, %v2685
  %2687 = vmatmul.bf16.gmra.mxu0 %v607
  %v2688 = vpop.f32.mrf.mxu0
  %v2689 = vadd.f32 %v554, %v2688
  %v2690 = vpop.f32.mrf.mxu0
  %v2691 = vadd.f32 %v559, %v2690
  %2692 = vmatmul.bf16.gmra.mxu0 %v609
  %v2693 = vpop.f32.mrf.mxu0
  %v2694 = vadd.f32 %v564, %v2693
  %v2695 = vpop.f32.mrf.mxu0
  %v2696 = vadd.f32 %v569, %v2695
  %2697 = vmatmul.bf16.gmra.mxu0 %v611
  %v2698 = vpop.f32.mrf.mxu0
  %v2699 = vadd.f32 %v574, %v2698
  %v2700 = vpop.f32.mrf.mxu0
  %v2701 = vadd.f32 %v579, %v2700
  %2702 = vdwg.mxu0
  %2703 = vmatpush.bf16.msra.mxu0 %v2673
  %2704 = vmatpush.bf16.msra.mxu0 %v2672
  %2705 = vmatpush.bf16.msra.mxu0 %v2671
  %2706 = vmatpush.bf16.msra.mxu0 %v2670
  %2707 = vmatpush.bf16.msra.mxu0 %v2669
  %2708 = vmatpush.bf16.msra.mxu0 %v2668
  %2709 = vmatpush.bf16.msra.mxu0 %v2667
  %2710 = vmatpush.bf16.msra.mxu0 %v2666
  %2711 = vmatmul.bf16.gmra.mxu0 %v606
  %v2712 = vpop.f32.mrf.mxu0
  %v2713 = vadd.f32 %v2684, %v2712
  %v2714 = vpop.f32.mrf.mxu0
  %v2715 = vadd.f32 %v2686, %v2714
  %2716 = vmatmul.bf16.gmra.mxu0 %v608
  %v2717 = vpop.f32.mrf.mxu0
  %v2718 = vadd.f32 %v2689, %v2717
  %v2719 = vpop.f32.mrf.mxu0
  %v2720 = vadd.f32 %v2691, %v2719
  %2721 = vmatmul.bf16.gmra.mxu0 %v610
  %v2722 = vpop.f32.mrf.mxu0
  %v2723 = vadd.f32 %v2694, %v2722
  %v2724 = vpop.f32.mrf.mxu0
  %v2725 = vadd.f32 %v2696, %v2724
  %2726 = vmatmul.bf16.gmra.mxu0 %v612
  %v2727 = vpop.f32.mrf.mxu0
  %v2728 = vadd.f32 %v2699, %v2727
  %v2729 = vpop.f32.mrf.mxu0
  %v2730 = vadd.f32 %v2701, %v2729
  %2731 = vdwg.mxu0
  %v2732 = vmax.f32 %v2713, 0.0
  %v2733 = vmax.f32 %v2715, 0.0
  %v2734 = vmax.f32 %v2718, 0.0
  %v2735 = vmax.f32 %v2720, 0.0
  %v2736 = vmax.f32 %v2723, 0.0
  %v2737 = vmax.f32 %v2725, 0.0
  %v2738 = vmax.f32 %v2728, 0.0
  %v2739 = vmax.f32 %v2730, 0.0
  %v2740 = vpack.c.bf16 %v2732, %v2732
  %v2741 = vpack.c.bf16 %v2733, %v2733
  %v2742 = vpack.c.bf16 %v2734, %v2734
  %v2743 = vpack.c.bf16 %v2735, %v2735
  %v2744 = vpack.c.bf16 %v2736, %v2736
  %v2745 = vpack.c.bf16 %v2737, %v2737
  %v2746 = vpack.c.bf16 %v2738, %v2738
  %v2747 = vpack.c.bf16 %v2739, %v2739
  %2748 = vst.msk [vmem:[#allocation2 + $0x120] sm:$0xf] %vm695, %v2740
  %2749 = vst.msk [vmem:[#allocation2 + $0x124] sm:$0xf] %vm695, %v2741
  %2750 = vst.msk [vmem:[#allocation2 + $0x128] sm:$0xf] %vm695, %v2742
  %2751 = vst.msk [vmem:[#allocation2 + $0x12c] sm:$0xf] %vm695, %v2743
  %2752 = vst.msk [vmem:[#allocation2 + $0x130] sm:$0xf] %vm695, %v2744
  %2753 = vst.msk [vmem:[#allocation2 + $0x134] sm:$0xf] %vm695, %v2745
  %2754 = vst.msk [vmem:[#allocation2 + $0x138] sm:$0xf] %vm695, %v2746
  %2755 = vst.msk [vmem:[#allocation2 + $0x13c] sm:$0xf] %vm695, %v2747
  %s2756 = scalar_lea.vmem %s0, 80
  %v2757 = vld [vmem:[%s2756] sm:$0xf]
  %v2758 = vld [vmem:[%s2756 + $0x4] sm:$0xf]
  %v2761 = vunpack.c.l.b16 %v2757
  %v2762 = vunpack.c.l.b16 %v2758
  %v2763 = vpack.c.b16 %v2762, %v2761
  %2765 = vmatpush.bf16.msra.mxu0 0
  %2766 = vmatpush.bf16.msra.mxu0 0
  %2767 = vmatpush.bf16.msra.mxu0 0
  %2768 = vmatpush.bf16.msra.mxu0 0
  %2769 = vmatpush.bf16.msra.mxu0 0
  %2770 = vmatpush.bf16.msra.mxu0 0
  %2771 = vmatpush.bf16.msra.mxu0 0
  %2772 = vmatpush.bf16.msra.mxu0 %v2763
  %2773 = vmatmul.bf16.gmra.mxu0 %v357
  %v2774 = vpop.f32.mrf.mxu0
  %v2775 = vadd.f32 %v112, %v2774
  %v2776 = vpop.f32.mrf.mxu0
  %v2777 = vadd.f32 %v117, %v2776
  %2778 = vmatmul.bf16.gmra.mxu0 %v360
  %v2779 = vpop.f32.mrf.mxu0
  %v2780 = vadd.f32 %v122, %v2779
  %v2781 = vpop.f32.mrf.mxu0
  %v2782 = vadd.f32 %v127, %v2781
  %2783 = vmatmul.bf16.gmra.mxu0 %v363
  %v2784 = vpop.f32.mrf.mxu0
  %v2785 = vadd.f32 %v132, %v2784
  %v2786 = vpop.f32.mrf.mxu0
  %v2787 = vadd.f32 %v137, %v2786
  %2788 = vmatmul.bf16.gmra.mxu0 %v366
  %v2789 = vpop.f32.mrf.mxu0
  %v2790 = vadd.f32 %v142, %v2789
  %v2791 = vpop.f32.mrf.mxu0
  %v2792 = vadd.f32 %v147, %v2791
  %2793 = vmatmul.bf16.gmra.mxu0 %v369
  %v2794 = vpop.f32.mrf.mxu0
  %v2795 = vadd.f32 %v152, %v2794
  %v2796 = vpop.f32.mrf.mxu0
  %v2797 = vadd.f32 %v157, %v2796
  %2798 = vmatmul.bf16.gmra.mxu0 %v372
  %v2799 = vpop.f32.mrf.mxu0
  %v2800 = vadd.f32 %v162, %v2799
  %v2801 = vpop.f32.mrf.mxu0
  %v2802 = vadd.f32 %v167, %v2801
  %2803 = vmatmul.bf16.gmra.mxu0 %v375
  %v2804 = vpop.f32.mrf.mxu0
  %v2805 = vadd.f32 %v172, %v2804
  %v2806 = vpop.f32.mrf.mxu0
  %v2807 = vadd.f32 %v177, %v2806
  %2808 = vmatmul.bf16.gmra.mxu0 %v378
  %v2809 = vpop.f32.mrf.mxu0
  %v2810 = vadd.f32 %v182, %v2809
  %v2811 = vpop.f32.mrf.mxu0
  %v2812 = vadd.f32 %v187, %v2811
  %2813 = vmatmul.bf16.gmra.mxu0 %v381
  %v2814 = vpop.f32.mrf.mxu0
  %v2815 = vadd.f32 %v192, %v2814
  %v2816 = vpop.f32.mrf.mxu0
  %v2817 = vadd.f32 %v197, %v2816
  %2818 = vmatmul.bf16.gmra.mxu0 %v384
  %v2819 = vpop.f32.mrf.mxu0
  %v2820 = vadd.f32 %v202, %v2819
  %v2821 = vpop.f32.mrf.mxu0
  %v2822 = vadd.f32 %v207, %v2821
  %2823 = vmatmul.bf16.gmra.mxu0 %v387
  %v2824 = vpop.f32.mrf.mxu0
  %v2825 = vadd.f32 %v212, %v2824
  %v2826 = vpop.f32.mrf.mxu0
  %v2827 = vadd.f32 %v217, %v2826
  %2828 = vmatmul.bf16.gmra.mxu0 %v390
  %v2829 = vpop.f32.mrf.mxu0
  %v2830 = vadd.f32 %v222, %v2829
  %v2831 = vpop.f32.mrf.mxu0
  %v2832 = vadd.f32 %v227, %v2831
  %2833 = vmatmul.bf16.gmra.mxu0 %v393
  %v2834 = vpop.f32.mrf.mxu0
  %v2835 = vadd.f32 %v232, %v2834
  %v2836 = vpop.f32.mrf.mxu0
  %v2837 = vadd.f32 %v237, %v2836
  %2838 = vmatmul.bf16.gmra.mxu0 %v396
  %v2839 = vpop.f32.mrf.mxu0
  %v2840 = vadd.f32 %v242, %v2839
  %v2841 = vpop.f32.mrf.mxu0
  %v2842 = vadd.f32 %v247, %v2841
  %2843 = vmatmul.bf16.gmra.mxu0 %v399
  %v2844 = vpop.f32.mrf.mxu0
  %v2845 = vadd.f32 %v252, %v2844
  %v2846 = vpop.f32.mrf.mxu0
  %v2847 = vadd.f32 %v257, %v2846
  %2848 = vmatmul.bf16.gmra.mxu0 %v402
  %v2849 = vpop.f32.mrf.mxu0
  %v2850 = vadd.f32 %v262, %v2849
  %v2851 = vpop.f32.mrf.mxu0
  %v2852 = vadd.f32 %v267, %v2851
  %2853 = vdwg.mxu0
  %v2854 = vmax.f32 %v2775, 0.0
  %v2855 = vmax.f32 %v2777, 0.0
  %v2856 = vmax.f32 %v2780, 0.0
  %v2857 = vmax.f32 %v2782, 0.0
  %v2858 = vmax.f32 %v2785, 0.0
  %v2859 = vmax.f32 %v2787, 0.0
  %v2860 = vmax.f32 %v2790, 0.0
  %v2861 = vmax.f32 %v2792, 0.0
  %v2862 = vmax.f32 %v2795, 0.0
  %v2863 = vmax.f32 %v2797, 0.0
  %v2864 = vmax.f32 %v2800, 0.0
  %v2865 = vmax.f32 %v2802, 0.0
  %v2866 = vmax.f32 %v2805, 0.0
  %v2867 = vmax.f32 %v2807, 0.0
  %v2868 = vmax.f32 %v2810, 0.0
  %v2869 = vmax.f32 %v2812, 0.0
  %v2870 = vmax.f32 %v2815, 0.0
  %v2871 = vmax.f32 %v2817, 0.0
  %v2872 = vmax.f32 %v2820, 0.0
  %v2873 = vmax.f32 %v2822, 0.0
  %v2874 = vmax.f32 %v2825, 0.0
  %v2875 = vmax.f32 %v2827, 0.0
  %v2876 = vmax.f32 %v2830, 0.0
  %v2877 = vmax.f32 %v2832, 0.0
  %v2878 = vmax.f32 %v2835, 0.0
  %v2879 = vmax.f32 %v2837, 0.0
  %v2880 = vmax.f32 %v2840, 0.0
  %v2881 = vmax.f32 %v2842, 0.0
  %v2882 = vmax.f32 %v2845, 0.0
  %v2883 = vmax.f32 %v2847, 0.0
  %v2884 = vmax.f32 %v2850, 0.0
  %v2885 = vmax.f32 %v2852, 0.0
  %v2886 = vpack.c.bf16 %v2855, %v2854
  %v2887 = vpack.c.bf16 %v2857, %v2856
  %v2888 = vpack.c.bf16 %v2859, %v2858
  %v2889 = vpack.c.bf16 %v2861, %v2860
  %v2890 = vpack.c.bf16 %v2863, %v2862
  %v2891 = vpack.c.bf16 %v2865, %v2864
  %v2892 = vpack.c.bf16 %v2867, %v2866
  %v2893 = vpack.c.bf16 %v2869, %v2868
  %v2894 = vpack.c.bf16 %v2871, %v2870
  %v2895 = vpack.c.bf16 %v2873, %v2872
  %v2896 = vpack.c.bf16 %v2875, %v2874
  %v2897 = vpack.c.bf16 %v2877, %v2876
  %v2898 = vpack.c.bf16 %v2879, %v2878
  %v2899 = vpack.c.bf16 %v2881, %v2880
  %v2900 = vpack.c.bf16 %v2883, %v2882
  %v2901 = vpack.c.bf16 %v2885, %v2884
  %2902 = vmatpush.bf16.msra.mxu0 %v2893
  %2903 = vmatpush.bf16.msra.mxu0 %v2892
  %2904 = vmatpush.bf16.msra.mxu0 %v2891
  %2905 = vmatpush.bf16.msra.mxu0 %v2890
  %2906 = vmatpush.bf16.msra.mxu0 %v2889
  %2907 = vmatpush.bf16.msra.mxu0 %v2888
  %2908 = vmatpush.bf16.msra.mxu0 %v2887
  %2909 = vmatpush.bf16.msra.mxu0 %v2886
  %2910 = vmatmul.bf16.gmra.mxu0 %v605
  %v2911 = vpop.f32.mrf.mxu0
  %v2912 = vadd.f32 %v544, %v2911
  %v2913 = vpop.f32.mrf.mxu0
  %v2914 = vadd.f32 %v549, %v2913
  %2915 = vmatmul.bf16.gmra.mxu0 %v607
  %v2916 = vpop.f32.mrf.mxu0
  %v2917 = vadd.f32 %v554, %v2916
  %v2918 = vpop.f32.mrf.mxu0
  %v2919 = vadd.f32 %v559, %v2918
  %2920 = vmatmul.bf16.gmra.mxu0 %v609
  %v2921 = vpop.f32.mrf.mxu0
  %v2922 = vadd.f32 %v564, %v2921
  %v2923 = vpop.f32.mrf.mxu0
  %v2924 = vadd.f32 %v569, %v2923
  %2925 = vmatmul.bf16.gmra.mxu0 %v611
  %v2926 = vpop.f32.mrf.mxu0
  %v2927 = vadd.f32 %v574, %v2926
  %v2928 = vpop.f32.mrf.mxu0
  %v2929 = vadd.f32 %v579, %v2928
  %2930 = vdwg.mxu0
  %2931 = vmatpush.bf16.msra.mxu0 %v2901
  %2932 = vmatpush.bf16.msra.mxu0 %v2900
  %2933 = vmatpush.bf16.msra.mxu0 %v2899
  %2934 = vmatpush.bf16.msra.mxu0 %v2898
  %2935 = vmatpush.bf16.msra.mxu0 %v2897
  %2936 = vmatpush.bf16.msra.mxu0 %v2896
  %2937 = vmatpush.bf16.msra.mxu0 %v2895
  %2938 = vmatpush.bf16.msra.mxu0 %v2894
  %2939 = vmatmul.bf16.gmra.mxu0 %v606
  %v2940 = vpop.f32.mrf.mxu0
  %v2941 = vadd.f32 %v2912, %v2940
  %v2942 = vpop.f32.mrf.mxu0
  %v2943 = vadd.f32 %v2914, %v2942
  %2944 = vmatmul.bf16.gmra.mxu0 %v608
  %v2945 = vpop.f32.mrf.mxu0
  %v2946 = vadd.f32 %v2917, %v2945
  %v2947 = vpop.f32.mrf.mxu0
  %v2948 = vadd.f32 %v2919, %v2947
  %2949 = vmatmul.bf16.gmra.mxu0 %v610
  %v2950 = vpop.f32.mrf.mxu0
  %v2951 = vadd.f32 %v2922, %v2950
  %v2952 = vpop.f32.mrf.mxu0
  %v2953 = vadd.f32 %v2924, %v2952
  %2954 = vmatmul.bf16.gmra.mxu0 %v612
  %v2955 = vpop.f32.mrf.mxu0
  %v2956 = vadd.f32 %v2927, %v2955
  %v2957 = vpop.f32.mrf.mxu0
  %v2958 = vadd.f32 %v2929, %v2957
  %2959 = vdwg.mxu0
  %v2960 = vmax.f32 %v2941, 0.0
  %v2961 = vmax.f32 %v2943, 0.0
  %v2962 = vmax.f32 %v2946, 0.0
  %v2963 = vmax.f32 %v2948, 0.0
  %v2964 = vmax.f32 %v2951, 0.0
  %v2965 = vmax.f32 %v2953, 0.0
  %v2966 = vmax.f32 %v2956, 0.0
  %v2967 = vmax.f32 %v2958, 0.0
  %v2968 = vpack.c.bf16 %v2960, %v2960
  %v2969 = vpack.c.bf16 %v2961, %v2961
  %v2970 = vpack.c.bf16 %v2962, %v2962
  %v2971 = vpack.c.bf16 %v2963, %v2963
  %v2972 = vpack.c.bf16 %v2964, %v2964
  %v2973 = vpack.c.bf16 %v2965, %v2965
  %v2974 = vpack.c.bf16 %v2966, %v2966
  %v2975 = vpack.c.bf16 %v2967, %v2967
  %2976 = vst.msk [vmem:[#allocation2 + $0x140] sm:$0xf] %vm695, %v2968
  %2977 = vst.msk [vmem:[#allocation2 + $0x144] sm:$0xf] %vm695, %v2969
  %2978 = vst.msk [vmem:[#allocation2 + $0x148] sm:$0xf] %vm695, %v2970
  %2979 = vst.msk [vmem:[#allocation2 + $0x14c] sm:$0xf] %vm695, %v2971
  %2980 = vst.msk [vmem:[#allocation2 + $0x150] sm:$0xf] %vm695, %v2972
  %2981 = vst.msk [vmem:[#allocation2 + $0x154] sm:$0xf] %vm695, %v2973
  %2982 = vst.msk [vmem:[#allocation2 + $0x158] sm:$0xf] %vm695, %v2974
  %2983 = vst.msk [vmem:[#allocation2 + $0x15c] sm:$0xf] %vm695, %v2975
  %s2984 = scalar_lea.vmem %s0, 88
  %v2985 = vld [vmem:[%s2984] sm:$0xf]
  %v2986 = vld [vmem:[%s2984 + $0x4] sm:$0xf]
  %v2989 = vunpack.c.l.b16 %v2985
  %v2990 = vunpack.c.l.b16 %v2986
  %v2991 = vpack.c.b16 %v2990, %v2989
  %2993 = vmatpush.bf16.msra.mxu0 0
  %2994 = vmatpush.bf16.msra.mxu0 0
  %2995 = vmatpush.bf16.msra.mxu0 0
  %2996 = vmatpush.bf16.msra.mxu0 0
  %2997 = vmatpush.bf16.msra.mxu0 0
  %2998 = vmatpush.bf16.msra.mxu0 0
  %2999 = vmatpush.bf16.msra.mxu0 0
  %3000 = vmatpush.bf16.msra.mxu0 %v2991
  %3001 = vmatmul.bf16.gmra.mxu0 %v357
  %v3002 = vpop.f32.mrf.mxu0
  %v3003 = vadd.f32 %v112, %v3002
  %v3004 = vpop.f32.mrf.mxu0
  %v3005 = vadd.f32 %v117, %v3004
  %3006 = vmatmul.bf16.gmra.mxu0 %v360
  %v3007 = vpop.f32.mrf.mxu0
  %v3008 = vadd.f32 %v122, %v3007
  %v3009 = vpop.f32.mrf.mxu0
  %v3010 = vadd.f32 %v127, %v3009
  %3011 = vmatmul.bf16.gmra.mxu0 %v363
  %v3012 = vpop.f32.mrf.mxu0
  %v3013 = vadd.f32 %v132, %v3012
  %v3014 = vpop.f32.mrf.mxu0
  %v3015 = vadd.f32 %v137, %v3014
  %3016 = vmatmul.bf16.gmra.mxu0 %v366
  %v3017 = vpop.f32.mrf.mxu0
  %v3018 = vadd.f32 %v142, %v3017
  %v3019 = vpop.f32.mrf.mxu0
  %v3020 = vadd.f32 %v147, %v3019
  %3021 = vmatmul.bf16.gmra.mxu0 %v369
  %v3022 = vpop.f32.mrf.mxu0
  %v3023 = vadd.f32 %v152, %v3022
  %v3024 = vpop.f32.mrf.mxu0
  %v3025 = vadd.f32 %v157, %v3024
  %3026 = vmatmul.bf16.gmra.mxu0 %v372
  %v3027 = vpop.f32.mrf.mxu0
  %v3028 = vadd.f32 %v162, %v3027
  %v3029 = vpop.f32.mrf.mxu0
  %v3030 = vadd.f32 %v167, %v3029
  %3031 = vmatmul.bf16.gmra.mxu0 %v375
  %v3032 = vpop.f32.mrf.mxu0
  %v3033 = vadd.f32 %v172, %v3032
  %v3034 = vpop.f32.mrf.mxu0
  %v3035 = vadd.f32 %v177, %v3034
  %3036 = vmatmul.bf16.gmra.mxu0 %v378
  %v3037 = vpop.f32.mrf.mxu0
  %v3038 = vadd.f32 %v182, %v3037
  %v3039 = vpop.f32.mrf.mxu0
  %v3040 = vadd.f32 %v187, %v3039
  %3041 = vmatmul.bf16.gmra.mxu0 %v381
  %v3042 = vpop.f32.mrf.mxu0
  %v3043 = vadd.f32 %v192, %v3042
  %v3044 = vpop.f32.mrf.mxu0
  %v3045 = vadd.f32 %v197, %v3044
  %3046 = vmatmul.bf16.gmra.mxu0 %v384
  %v3047 = vpop.f32.mrf.mxu0
  %v3048 = vadd.f32 %v202, %v3047
  %v3049 = vpop.f32.mrf.mxu0
  %v3050 = vadd.f32 %v207, %v3049
  %3051 = vmatmul.bf16.gmra.mxu0 %v387
  %v3052 = vpop.f32.mrf.mxu0
  %v3053 = vadd.f32 %v212, %v3052
  %v3054 = vpop.f32.mrf.mxu0
  %v3055 = vadd.f32 %v217, %v3054
  %3056 = vmatmul.bf16.gmra.mxu0 %v390
  %v3057 = vpop.f32.mrf.mxu0
  %v3058 = vadd.f32 %v222, %v3057
  %v3059 = vpop.f32.mrf.mxu0
  %v3060 = vadd.f32 %v227, %v3059
  %3061 = vmatmul.bf16.gmra.mxu0 %v393
  %v3062 = vpop.f32.mrf.mxu0
  %v3063 = vadd.f32 %v232, %v3062
  %v3064 = vpop.f32.mrf.mxu0
  %v3065 = vadd.f32 %v237, %v3064
  %3066 = vmatmul.bf16.gmra.mxu0 %v396
  %v3067 = vpop.f32.mrf.mxu0
  %v3068 = vadd.f32 %v242, %v3067
  %v3069 = vpop.f32.mrf.mxu0
  %v3070 = vadd.f32 %v247, %v3069
  %3071 = vmatmul.bf16.gmra.mxu0 %v399
  %v3072 = vpop.f32.mrf.mxu0
  %v3073 = vadd.f32 %v252, %v3072
  %v3074 = vpop.f32.mrf.mxu0
  %v3075 = vadd.f32 %v257, %v3074
  %3076 = vmatmul.bf16.gmra.mxu0 %v402
  %v3077 = vpop.f32.mrf.mxu0
  %v3078 = vadd.f32 %v262, %v3077
  %v3079 = vpop.f32.mrf.mxu0
  %v3080 = vadd.f32 %v267, %v3079
  %3081 = vdwg.mxu0
  %v3082 = vmax.f32 %v3003, 0.0
  %v3083 = vmax.f32 %v3005, 0.0
  %v3084 = vmax.f32 %v3008, 0.0
  %v3085 = vmax.f32 %v3010, 0.0
  %v3086 = vmax.f32 %v3013, 0.0
  %v3087 = vmax.f32 %v3015, 0.0
  %v3088 = vmax.f32 %v3018, 0.0
  %v3089 = vmax.f32 %v3020, 0.0
  %v3090 = vmax.f32 %v3023, 0.0
  %v3091 = vmax.f32 %v3025, 0.0
  %v3092 = vmax.f32 %v3028, 0.0
  %v3093 = vmax.f32 %v3030, 0.0
  %v3094 = vmax.f32 %v3033, 0.0
  %v3095 = vmax.f32 %v3035, 0.0
  %v3096 = vmax.f32 %v3038, 0.0
  %v3097 = vmax.f32 %v3040, 0.0
  %v3098 = vmax.f32 %v3043, 0.0
  %v3099 = vmax.f32 %v3045, 0.0
  %v3100 = vmax.f32 %v3048, 0.0
  %v3101 = vmax.f32 %v3050, 0.0
  %v3102 = vmax.f32 %v3053, 0.0
  %v3103 = vmax.f32 %v3055, 0.0
  %v3104 = vmax.f32 %v3058, 0.0
  %v3105 = vmax.f32 %v3060, 0.0
  %v3106 = vmax.f32 %v3063, 0.0
  %v3107 = vmax.f32 %v3065, 0.0
  %v3108 = vmax.f32 %v3068, 0.0
  %v3109 = vmax.f32 %v3070, 0.0
  %v3110 = vmax.f32 %v3073, 0.0
  %v3111 = vmax.f32 %v3075, 0.0
  %v3112 = vmax.f32 %v3078, 0.0
  %v3113 = vmax.f32 %v3080, 0.0
  %v3114 = vpack.c.bf16 %v3083, %v3082
  %v3115 = vpack.c.bf16 %v3085, %v3084
  %v3116 = vpack.c.bf16 %v3087, %v3086
  %v3117 = vpack.c.bf16 %v3089, %v3088
  %v3118 = vpack.c.bf16 %v3091, %v3090
  %v3119 = vpack.c.bf16 %v3093, %v3092
  %v3120 = vpack.c.bf16 %v3095, %v3094
  %v3121 = vpack.c.bf16 %v3097, %v3096
  %v3122 = vpack.c.bf16 %v3099, %v3098
  %v3123 = vpack.c.bf16 %v3101, %v3100
  %v3124 = vpack.c.bf16 %v3103, %v3102
  %v3125 = vpack.c.bf16 %v3105, %v3104
  %v3126 = vpack.c.bf16 %v3107, %v3106
  %v3127 = vpack.c.bf16 %v3109, %v3108
  %v3128 = vpack.c.bf16 %v3111, %v3110
  %v3129 = vpack.c.bf16 %v3113, %v3112
  %3130 = vmatpush.bf16.msra.mxu0 %v3121
  %3131 = vmatpush.bf16.msra.mxu0 %v3120
  %3132 = vmatpush.bf16.msra.mxu0 %v3119
  %3133 = vmatpush.bf16.msra.mxu0 %v3118
  %3134 = vmatpush.bf16.msra.mxu0 %v3117
  %3135 = vmatpush.bf16.msra.mxu0 %v3116
  %3136 = vmatpush.bf16.msra.mxu0 %v3115
  %3137 = vmatpush.bf16.msra.mxu0 %v3114
  %3138 = vmatmul.bf16.gmra.mxu0 %v605
  %v3139 = vpop.f32.mrf.mxu0
  %v3140 = vadd.f32 %v544, %v3139
  %v3141 = vpop.f32.mrf.mxu0
  %v3142 = vadd.f32 %v549, %v3141
  %3143 = vmatmul.bf16.gmra.mxu0 %v607
  %v3144 = vpop.f32.mrf.mxu0
  %v3145 = vadd.f32 %v554, %v3144
  %v3146 = vpop.f32.mrf.mxu0
  %v3147 = vadd.f32 %v559, %v3146
  %3148 = vmatmul.bf16.gmra.mxu0 %v609
  %v3149 = vpop.f32.mrf.mxu0
  %v3150 = vadd.f32 %v564, %v3149
  %v3151 = vpop.f32.mrf.mxu0
  %v3152 = vadd.f32 %v569, %v3151
  %3153 = vmatmul.bf16.gmra.mxu0 %v611
  %v3154 = vpop.f32.mrf.mxu0
  %v3155 = vadd.f32 %v574, %v3154
  %v3156 = vpop.f32.mrf.mxu0
  %v3157 = vadd.f32 %v579, %v3156
  %3158 = vdwg.mxu0
  %3159 = vmatpush.bf16.msra.mxu0 %v3129
  %3160 = vmatpush.bf16.msra.mxu0 %v3128
  %3161 = vmatpush.bf16.msra.mxu0 %v3127
  %3162 = vmatpush.bf16.msra.mxu0 %v3126
  %3163 = vmatpush.bf16.msra.mxu0 %v3125
  %3164 = vmatpush.bf16.msra.mxu0 %v3124
  %3165 = vmatpush.bf16.msra.mxu0 %v3123
  %3166 = vmatpush.bf16.msra.mxu0 %v3122
  %3167 = vmatmul.bf16.gmra.mxu0 %v606
  %v3168 = vpop.f32.mrf.mxu0
  %v3169 = vadd.f32 %v3140, %v3168
  %v3170 = vpop.f32.mrf.mxu0
  %v3171 = vadd.f32 %v3142, %v3170
  %3172 = vmatmul.bf16.gmra.mxu0 %v608
  %v3173 = vpop.f32.mrf.mxu0
  %v3174 = vadd.f32 %v3145, %v3173
  %v3175 = vpop.f32.mrf.mxu0
  %v3176 = vadd.f32 %v3147, %v3175
  %3177 = vmatmul.bf16.gmra.mxu0 %v610
  %v3178 = vpop.f32.mrf.mxu0
  %v3179 = vadd.f32 %v3150, %v3178
  %v3180 = vpop.f32.mrf.mxu0
  %v3181 = vadd.f32 %v3152, %v3180
  %3182 = vmatmul.bf16.gmra.mxu0 %v612
  %v3183 = vpop.f32.mrf.mxu0
  %v3184 = vadd.f32 %v3155, %v3183
  %v3185 = vpop.f32.mrf.mxu0
  %v3186 = vadd.f32 %v3157, %v3185
  %3187 = vdwg.mxu0
  %v3188 = vmax.f32 %v3169, 0.0
  %v3189 = vmax.f32 %v3171, 0.0
  %v3190 = vmax.f32 %v3174, 0.0
  %v3191 = vmax.f32 %v3176, 0.0
  %v3192 = vmax.f32 %v3179, 0.0
  %v3193 = vmax.f32 %v3181, 0.0
  %v3194 = vmax.f32 %v3184, 0.0
  %v3195 = vmax.f32 %v3186, 0.0
  %v3196 = vpack.c.bf16 %v3188, %v3188
  %v3197 = vpack.c.bf16 %v3189, %v3189
  %v3198 = vpack.c.bf16 %v3190, %v3190
  %v3199 = vpack.c.bf16 %v3191, %v3191
  %v3200 = vpack.c.bf16 %v3192, %v3192
  %v3201 = vpack.c.bf16 %v3193, %v3193
  %v3202 = vpack.c.bf16 %v3194, %v3194
  %v3203 = vpack.c.bf16 %v3195, %v3195
  %3204 = vst.msk [vmem:[#allocation2 + $0x160] sm:$0xf] %vm695, %v3196
  %3205 = vst.msk [vmem:[#allocation2 + $0x164] sm:$0xf] %vm695, %v3197
  %3206 = vst.msk [vmem:[#allocation2 + $0x168] sm:$0xf] %vm695, %v3198
  %3207 = vst.msk [vmem:[#allocation2 + $0x16c] sm:$0xf] %vm695, %v3199
  %3208 = vst.msk [vmem:[#allocation2 + $0x170] sm:$0xf] %vm695, %v3200
  %3209 = vst.msk [vmem:[#allocation2 + $0x174] sm:$0xf] %vm695, %v3201
  %3210 = vst.msk [vmem:[#allocation2 + $0x178] sm:$0xf] %vm695, %v3202
  %3211 = vst.msk [vmem:[#allocation2 + $0x17c] sm:$0xf] %vm695, %v3203
  %s3212 = scalar_lea.vmem %s0, 96
  %v3213 = vld [vmem:[%s3212] sm:$0xf]
  %v3214 = vld [vmem:[%s3212 + $0x4] sm:$0xf]
  %v3217 = vunpack.c.l.b16 %v3213
  %v3218 = vunpack.c.l.b16 %v3214
  %v3219 = vpack.c.b16 %v3218, %v3217
  %3221 = vmatpush.bf16.msra.mxu0 0
  %3222 = vmatpush.bf16.msra.mxu0 0
  %3223 = vmatpush.bf16.msra.mxu0 0
  %3224 = vmatpush.bf16.msra.mxu0 0
  %3225 = vmatpush.bf16.msra.mxu0 0
  %3226 = vmatpush.bf16.msra.mxu0 0
  %3227 = vmatpush.bf16.msra.mxu0 0
  %3228 = vmatpush.bf16.msra.mxu0 %v3219
  %3229 = vmatmul.bf16.gmra.mxu0 %v357
  %v3230 = vpop.f32.mrf.mxu0
  %v3231 = vadd.f32 %v112, %v3230
  %v3232 = vpop.f32.mrf.mxu0
  %v3233 = vadd.f32 %v117, %v3232
  %3234 = vmatmul.bf16.gmra.mxu0 %v360
  %v3235 = vpop.f32.mrf.mxu0
  %v3236 = vadd.f32 %v122, %v3235
  %v3237 = vpop.f32.mrf.mxu0
  %v3238 = vadd.f32 %v127, %v3237
  %3239 = vmatmul.bf16.gmra.mxu0 %v363
  %v3240 = vpop.f32.mrf.mxu0
  %v3241 = vadd.f32 %v132, %v3240
  %v3242 = vpop.f32.mrf.mxu0
  %v3243 = vadd.f32 %v137, %v3242
  %3244 = vmatmul.bf16.gmra.mxu0 %v366
  %v3245 = vpop.f32.mrf.mxu0
  %v3246 = vadd.f32 %v142, %v3245
  %v3247 = vpop.f32.mrf.mxu0
  %v3248 = vadd.f32 %v147, %v3247
  %3249 = vmatmul.bf16.gmra.mxu0 %v369
  %v3250 = vpop.f32.mrf.mxu0
  %v3251 = vadd.f32 %v152, %v3250
  %v3252 = vpop.f32.mrf.mxu0
  %v3253 = vadd.f32 %v157, %v3252
  %3254 = vmatmul.bf16.gmra.mxu0 %v372
  %v3255 = vpop.f32.mrf.mxu0
  %v3256 = vadd.f32 %v162, %v3255
  %v3257 = vpop.f32.mrf.mxu0
  %v3258 = vadd.f32 %v167, %v3257
  %3259 = vmatmul.bf16.gmra.mxu0 %v375
  %v3260 = vpop.f32.mrf.mxu0
  %v3261 = vadd.f32 %v172, %v3260
  %v3262 = vpop.f32.mrf.mxu0
  %v3263 = vadd.f32 %v177, %v3262
  %3264 = vmatmul.bf16.gmra.mxu0 %v378
  %v3265 = vpop.f32.mrf.mxu0
  %v3266 = vadd.f32 %v182, %v3265
  %v3267 = vpop.f32.mrf.mxu0
  %v3268 = vadd.f32 %v187, %v3267
  %3269 = vmatmul.bf16.gmra.mxu0 %v381
  %v3270 = vpop.f32.mrf.mxu0
  %v3271 = vadd.f32 %v192, %v3270
  %v3272 = vpop.f32.mrf.mxu0
  %v3273 = vadd.f32 %v197, %v3272
  %3274 = vmatmul.bf16.gmra.mxu0 %v384
  %v3275 = vpop.f32.mrf.mxu0
  %v3276 = vadd.f32 %v202, %v3275
  %v3277 = vpop.f32.mrf.mxu0
  %v3278 = vadd.f32 %v207, %v3277
  %3279 = vmatmul.bf16.gmra.mxu0 %v387
  %v3280 = vpop.f32.mrf.mxu0
  %v3281 = vadd.f32 %v212, %v3280
  %v3282 = vpop.f32.mrf.mxu0
  %v3283 = vadd.f32 %v217, %v3282
  %3284 = vmatmul.bf16.gmra.mxu0 %v390
  %v3285 = vpop.f32.mrf.mxu0
  %v3286 = vadd.f32 %v222, %v3285
  %v3287 = vpop.f32.mrf.mxu0
  %v3288 = vadd.f32 %v227, %v3287
  %3289 = vmatmul.bf16.gmra.mxu0 %v393
  %v3290 = vpop.f32.mrf.mxu0
  %v3291 = vadd.f32 %v232, %v3290
  %v3292 = vpop.f32.mrf.mxu0
  %v3293 = vadd.f32 %v237, %v3292
  %3294 = vmatmul.bf16.gmra.mxu0 %v396
  %v3295 = vpop.f32.mrf.mxu0
  %v3296 = vadd.f32 %v242, %v3295
  %v3297 = vpop.f32.mrf.mxu0
  %v3298 = vadd.f32 %v247, %v3297
  %3299 = vmatmul.bf16.gmra.mxu0 %v399
  %v3300 = vpop.f32.mrf.mxu0
  %v3301 = vadd.f32 %v252, %v3300
  %v3302 = vpop.f32.mrf.mxu0
  %v3303 = vadd.f32 %v257, %v3302
  %3304 = vmatmul.bf16.gmra.mxu0 %v402
  %v3305 = vpop.f32.mrf.mxu0
  %v3306 = vadd.f32 %v262, %v3305
  %v3307 = vpop.f32.mrf.mxu0
  %v3308 = vadd.f32 %v267, %v3307
  %3309 = vdwg.mxu0
  %v3310 = vmax.f32 %v3231, 0.0
  %v3311 = vmax.f32 %v3233, 0.0
  %v3312 = vmax.f32 %v3236, 0.0
  %v3313 = vmax.f32 %v3238, 0.0
  %v3314 = vmax.f32 %v3241, 0.0
  %v3315 = vmax.f32 %v3243, 0.0
  %v3316 = vmax.f32 %v3246, 0.0
  %v3317 = vmax.f32 %v3248, 0.0
  %v3318 = vmax.f32 %v3251, 0.0
  %v3319 = vmax.f32 %v3253, 0.0
  %v3320 = vmax.f32 %v3256, 0.0
  %v3321 = vmax.f32 %v3258, 0.0
  %v3322 = vmax.f32 %v3261, 0.0
  %v3323 = vmax.f32 %v3263, 0.0
  %v3324 = vmax.f32 %v3266, 0.0
  %v3325 = vmax.f32 %v3268, 0.0
  %v3326 = vmax.f32 %v3271, 0.0
  %v3327 = vmax.f32 %v3273, 0.0
  %v3328 = vmax.f32 %v3276, 0.0
  %v3329 = vmax.f32 %v3278, 0.0
  %v3330 = vmax.f32 %v3281, 0.0
  %v3331 = vmax.f32 %v3283, 0.0
  %v3332 = vmax.f32 %v3286, 0.0
  %v3333 = vmax.f32 %v3288, 0.0
  %v3334 = vmax.f32 %v3291, 0.0
  %v3335 = vmax.f32 %v3293, 0.0
  %v3336 = vmax.f32 %v3296, 0.0
  %v3337 = vmax.f32 %v3298, 0.0
  %v3338 = vmax.f32 %v3301, 0.0
  %v3339 = vmax.f32 %v3303, 0.0
  %v3340 = vmax.f32 %v3306, 0.0
  %v3341 = vmax.f32 %v3308, 0.0
  %v3342 = vpack.c.bf16 %v3311, %v3310
  %v3343 = vpack.c.bf16 %v3313, %v3312
  %v3344 = vpack.c.bf16 %v3315, %v3314
  %v3345 = vpack.c.bf16 %v3317, %v3316
  %v3346 = vpack.c.bf16 %v3319, %v3318
  %v3347 = vpack.c.bf16 %v3321, %v3320
  %v3348 = vpack.c.bf16 %v3323, %v3322
  %v3349 = vpack.c.bf16 %v3325, %v3324
  %v3350 = vpack.c.bf16 %v3327, %v3326
  %v3351 = vpack.c.bf16 %v3329, %v3328
  %v3352 = vpack.c.bf16 %v3331, %v3330
  %v3353 = vpack.c.bf16 %v3333, %v3332
  %v3354 = vpack.c.bf16 %v3335, %v3334
  %v3355 = vpack.c.bf16 %v3337, %v3336
  %v3356 = vpack.c.bf16 %v3339, %v3338
  %v3357 = vpack.c.bf16 %v3341, %v3340
  %3358 = vmatpush.bf16.msra.mxu0 %v3349
  %3359 = vmatpush.bf16.msra.mxu0 %v3348
  %3360 = vmatpush.bf16.msra.mxu0 %v3347
  %3361 = vmatpush.bf16.msra.mxu0 %v3346
  %3362 = vmatpush.bf16.msra.mxu0 %v3345
  %3363 = vmatpush.bf16.msra.mxu0 %v3344
  %3364 = vmatpush.bf16.msra.mxu0 %v3343
  %3365 = vmatpush.bf16.msra.mxu0 %v3342
  %3366 = vmatmul.bf16.gmra.mxu0 %v605
  %v3367 = vpop.f32.mrf.mxu0
  %v3368 = vadd.f32 %v544, %v3367
  %v3369 = vpop.f32.mrf.mxu0
  %v3370 = vadd.f32 %v549, %v3369
  %3371 = vmatmul.bf16.gmra.mxu0 %v607
  %v3372 = vpop.f32.mrf.mxu0
  %v3373 = vadd.f32 %v554, %v3372
  %v3374 = vpop.f32.mrf.mxu0
  %v3375 = vadd.f32 %v559, %v3374
  %3376 = vmatmul.bf16.gmra.mxu0 %v609
  %v3377 = vpop.f32.mrf.mxu0
  %v3378 = vadd.f32 %v564, %v3377
  %v3379 = vpop.f32.mrf.mxu0
  %v3380 = vadd.f32 %v569, %v3379
  %3381 = vmatmul.bf16.gmra.mxu0 %v611
  %v3382 = vpop.f32.mrf.mxu0
  %v3383 = vadd.f32 %v574, %v3382
  %v3384 = vpop.f32.mrf.mxu0
  %v3385 = vadd.f32 %v579, %v3384
  %3386 = vdwg.mxu0
  %3387 = vmatpush.bf16.msra.mxu0 %v3357
  %3388 = vmatpush.bf16.msra.mxu0 %v3356
  %3389 = vmatpush.bf16.msra.mxu0 %v3355
  %3390 = vmatpush.bf16.msra.mxu0 %v3354
  %3391 = vmatpush.bf16.msra.mxu0 %v3353
  %3392 = vmatpush.bf16.msra.mxu0 %v3352
  %3393 = vmatpush.bf16.msra.mxu0 %v3351
  %3394 = vmatpush.bf16.msra.mxu0 %v3350
  %3395 = vmatmul.bf16.gmra.mxu0 %v606
  %v3396 = vpop.f32.mrf.mxu0
  %v3397 = vadd.f32 %v3368, %v3396
  %v3398 = vpop.f32.mrf.mxu0
  %v3399 = vadd.f32 %v3370, %v3398
  %3400 = vmatmul.bf16.gmra.mxu0 %v608
  %v3401 = vpop.f32.mrf.mxu0
  %v3402 = vadd.f32 %v3373, %v3401
  %v3403 = vpop.f32.mrf.mxu0
  %v3404 = vadd.f32 %v3375, %v3403
  %3405 = vmatmul.bf16.gmra.mxu0 %v610
  %v3406 = vpop.f32.mrf.mxu0
  %v3407 = vadd.f32 %v3378, %v3406
  %v3408 = vpop.f32.mrf.mxu0
  %v3409 = vadd.f32 %v3380, %v3408
  %3410 = vmatmul.bf16.gmra.mxu0 %v612
  %v3411 = vpop.f32.mrf.mxu0
  %v3412 = vadd.f32 %v3383, %v3411
  %v3413 = vpop.f32.mrf.mxu0
  %v3414 = vadd.f32 %v3385, %v3413
  %3415 = vdwg.mxu0
  %v3416 = vmax.f32 %v3397, 0.0
  %v3417 = vmax.f32 %v3399, 0.0
  %v3418 = vmax.f32 %v3402, 0.0
  %v3419 = vmax.f32 %v3404, 0.0
  %v3420 = vmax.f32 %v3407, 0.0
  %v3421 = vmax.f32 %v3409, 0.0
  %v3422 = vmax.f32 %v3412, 0.0
  %v3423 = vmax.f32 %v3414, 0.0
  %v3424 = vpack.c.bf16 %v3416, %v3416
  %v3425 = vpack.c.bf16 %v3417, %v3417
  %v3426 = vpack.c.bf16 %v3418, %v3418
  %v3427 = vpack.c.bf16 %v3419, %v3419
  %v3428 = vpack.c.bf16 %v3420, %v3420
  %v3429 = vpack.c.bf16 %v3421, %v3421
  %v3430 = vpack.c.bf16 %v3422, %v3422
  %v3431 = vpack.c.bf16 %v3423, %v3423
  %3432 = vst.msk [vmem:[#allocation2 + $0x180] sm:$0xf] %vm695, %v3424
  %3433 = vst.msk [vmem:[#allocation2 + $0x184] sm:$0xf] %vm695, %v3425
  %3434 = vst.msk [vmem:[#allocation2 + $0x188] sm:$0xf] %vm695, %v3426
  %3435 = vst.msk [vmem:[#allocation2 + $0x18c] sm:$0xf] %vm695, %v3427
  %3436 = vst.msk [vmem:[#allocation2 + $0x190] sm:$0xf] %vm695, %v3428
  %3437 = vst.msk [vmem:[#allocation2 + $0x194] sm:$0xf] %vm695, %v3429
  %3438 = vst.msk [vmem:[#allocation2 + $0x198] sm:$0xf] %vm695, %v3430
  %3439 = vst.msk [vmem:[#allocation2 + $0x19c] sm:$0xf] %vm695, %v3431
  %s3440 = scalar_lea.vmem %s0, 104
  %v3441 = vld [vmem:[%s3440] sm:$0xf]
  %v3442 = vld [vmem:[%s3440 + $0x4] sm:$0xf]
  %v3445 = vunpack.c.l.b16 %v3441
  %v3446 = vunpack.c.l.b16 %v3442
  %v3447 = vpack.c.b16 %v3446, %v3445
  %3449 = vmatpush.bf16.msra.mxu0 0
  %3450 = vmatpush.bf16.msra.mxu0 0
  %3451 = vmatpush.bf16.msra.mxu0 0
  %3452 = vmatpush.bf16.msra.mxu0 0
  %3453 = vmatpush.bf16.msra.mxu0 0
  %3454 = vmatpush.bf16.msra.mxu0 0
  %3455 = vmatpush.bf16.msra.mxu0 0
  %3456 = vmatpush.bf16.msra.mxu0 %v3447
  %3457 = vmatmul.bf16.gmra.mxu0 %v357
  %v3458 = vpop.f32.mrf.mxu0
  %v3459 = vadd.f32 %v112, %v3458
  %v3460 = vpop.f32.mrf.mxu0
  %v3461 = vadd.f32 %v117, %v3460
  %3462 = vmatmul.bf16.gmra.mxu0 %v360
  %v3463 = vpop.f32.mrf.mxu0
  %v3464 = vadd.f32 %v122, %v3463
  %v3465 = vpop.f32.mrf.mxu0
  %v3466 = vadd.f32 %v127, %v3465
  %3467 = vmatmul.bf16.gmra.mxu0 %v363
  %v3468 = vpop.f32.mrf.mxu0
  %v3469 = vadd.f32 %v132, %v3468
  %v3470 = vpop.f32.mrf.mxu0
  %v3471 = vadd.f32 %v137, %v3470
  %3472 = vmatmul.bf16.gmra.mxu0 %v366
  %v3473 = vpop.f32.mrf.mxu0
  %v3474 = vadd.f32 %v142, %v3473
  %v3475 = vpop.f32.mrf.mxu0
  %v3476 = vadd.f32 %v147, %v3475
  %3477 = vmatmul.bf16.gmra.mxu0 %v369
  %v3478 = vpop.f32.mrf.mxu0
  %v3479 = vadd.f32 %v152, %v3478
  %v3480 = vpop.f32.mrf.mxu0
  %v3481 = vadd.f32 %v157, %v3480
  %3482 = vmatmul.bf16.gmra.mxu0 %v372
  %v3483 = vpop.f32.mrf.mxu0
  %v3484 = vadd.f32 %v162, %v3483
  %v3485 = vpop.f32.mrf.mxu0
  %v3486 = vadd.f32 %v167, %v3485
  %3487 = vmatmul.bf16.gmra.mxu0 %v375
  %v3488 = vpop.f32.mrf.mxu0
  %v3489 = vadd.f32 %v172, %v3488
  %v3490 = vpop.f32.mrf.mxu0
  %v3491 = vadd.f32 %v177, %v3490
  %3492 = vmatmul.bf16.gmra.mxu0 %v378
  %v3493 = vpop.f32.mrf.mxu0
  %v3494 = vadd.f32 %v182, %v3493
  %v3495 = vpop.f32.mrf.mxu0
  %v3496 = vadd.f32 %v187, %v3495
  %3497 = vmatmul.bf16.gmra.mxu0 %v381
  %v3498 = vpop.f32.mrf.mxu0
  %v3499 = vadd.f32 %v192, %v3498
  %v3500 = vpop.f32.mrf.mxu0
  %v3501 = vadd.f32 %v197, %v3500
  %3502 = vmatmul.bf16.gmra.mxu0 %v384
  %v3503 = vpop.f32.mrf.mxu0
  %v3504 = vadd.f32 %v202, %v3503
  %v3505 = vpop.f32.mrf.mxu0
  %v3506 = vadd.f32 %v207, %v3505
  %3507 = vmatmul.bf16.gmra.mxu0 %v387
  %v3508 = vpop.f32.mrf.mxu0
  %v3509 = vadd.f32 %v212, %v3508
  %v3510 = vpop.f32.mrf.mxu0
  %v3511 = vadd.f32 %v217, %v3510
  %3512 = vmatmul.bf16.gmra.mxu0 %v390
  %v3513 = vpop.f32.mrf.mxu0
  %v3514 = vadd.f32 %v222, %v3513
  %v3515 = vpop.f32.mrf.mxu0
  %v3516 = vadd.f32 %v227, %v3515
  %3517 = vmatmul.bf16.gmra.mxu0 %v393
  %v3518 = vpop.f32.mrf.mxu0
  %v3519 = vadd.f32 %v232, %v3518
  %v3520 = vpop.f32.mrf.mxu0
  %v3521 = vadd.f32 %v237, %v3520
  %3522 = vmatmul.bf16.gmra.mxu0 %v396
  %v3523 = vpop.f32.mrf.mxu0
  %v3524 = vadd.f32 %v242, %v3523
  %v3525 = vpop.f32.mrf.mxu0
  %v3526 = vadd.f32 %v247, %v3525
  %3527 = vmatmul.bf16.gmra.mxu0 %v399
  %v3528 = vpop.f32.mrf.mxu0
  %v3529 = vadd.f32 %v252, %v3528
  %v3530 = vpop.f32.mrf.mxu0
  %v3531 = vadd.f32 %v257, %v3530
  %3532 = vmatmul.bf16.gmra.mxu0 %v402
  %v3533 = vpop.f32.mrf.mxu0
  %v3534 = vadd.f32 %v262, %v3533
  %v3535 = vpop.f32.mrf.mxu0
  %v3536 = vadd.f32 %v267, %v3535
  %3537 = vdwg.mxu0
  %v3538 = vmax.f32 %v3459, 0.0
  %v3539 = vmax.f32 %v3461, 0.0
  %v3540 = vmax.f32 %v3464, 0.0
  %v3541 = vmax.f32 %v3466, 0.0
  %v3542 = vmax.f32 %v3469, 0.0
  %v3543 = vmax.f32 %v3471, 0.0
  %v3544 = vmax.f32 %v3474, 0.0
  %v3545 = vmax.f32 %v3476, 0.0
  %v3546 = vmax.f32 %v3479, 0.0
  %v3547 = vmax.f32 %v3481, 0.0
  %v3548 = vmax.f32 %v3484, 0.0
  %v3549 = vmax.f32 %v3486, 0.0
  %v3550 = vmax.f32 %v3489, 0.0
  %v3551 = vmax.f32 %v3491, 0.0
  %v3552 = vmax.f32 %v3494, 0.0
  %v3553 = vmax.f32 %v3496, 0.0
  %v3554 = vmax.f32 %v3499, 0.0
  %v3555 = vmax.f32 %v3501, 0.0
  %v3556 = vmax.f32 %v3504, 0.0
  %v3557 = vmax.f32 %v3506, 0.0
  %v3558 = vmax.f32 %v3509, 0.0
  %v3559 = vmax.f32 %v3511, 0.0
  %v3560 = vmax.f32 %v3514, 0.0
  %v3561 = vmax.f32 %v3516, 0.0
  %v3562 = vmax.f32 %v3519, 0.0
  %v3563 = vmax.f32 %v3521, 0.0
  %v3564 = vmax.f32 %v3524, 0.0
  %v3565 = vmax.f32 %v3526, 0.0
  %v3566 = vmax.f32 %v3529, 0.0
  %v3567 = vmax.f32 %v3531, 0.0
  %v3568 = vmax.f32 %v3534, 0.0
  %v3569 = vmax.f32 %v3536, 0.0
  %v3570 = vpack.c.bf16 %v3539, %v3538
  %v3571 = vpack.c.bf16 %v3541, %v3540
  %v3572 = vpack.c.bf16 %v3543, %v3542
  %v3573 = vpack.c.bf16 %v3545, %v3544
  %v3574 = vpack.c.bf16 %v3547, %v3546
  %v3575 = vpack.c.bf16 %v3549, %v3548
  %v3576 = vpack.c.bf16 %v3551, %v3550
  %v3577 = vpack.c.bf16 %v3553, %v3552
  %v3578 = vpack.c.bf16 %v3555, %v3554
  %v3579 = vpack.c.bf16 %v3557, %v3556
  %v3580 = vpack.c.bf16 %v3559, %v3558
  %v3581 = vpack.c.bf16 %v3561, %v3560
  %v3582 = vpack.c.bf16 %v3563, %v3562
  %v3583 = vpack.c.bf16 %v3565, %v3564
  %v3584 = vpack.c.bf16 %v3567, %v3566
  %v3585 = vpack.c.bf16 %v3569, %v3568
  %3586 = vmatpush.bf16.msra.mxu0 %v3577
  %3587 = vmatpush.bf16.msra.mxu0 %v3576
  %3588 = vmatpush.bf16.msra.mxu0 %v3575
  %3589 = vmatpush.bf16.msra.mxu0 %v3574
  %3590 = vmatpush.bf16.msra.mxu0 %v3573
  %3591 = vmatpush.bf16.msra.mxu0 %v3572
  %3592 = vmatpush.bf16.msra.mxu0 %v3571
  %3593 = vmatpush.bf16.msra.mxu0 %v3570
  %3594 = vmatmul.bf16.gmra.mxu0 %v605
  %v3595 = vpop.f32.mrf.mxu0
  %v3596 = vadd.f32 %v544, %v3595
  %v3597 = vpop.f32.mrf.mxu0
  %v3598 = vadd.f32 %v549, %v3597
  %3599 = vmatmul.bf16.gmra.mxu0 %v607
  %v3600 = vpop.f32.mrf.mxu0
  %v3601 = vadd.f32 %v554, %v3600
  %v3602 = vpop.f32.mrf.mxu0
  %v3603 = vadd.f32 %v559, %v3602
  %3604 = vmatmul.bf16.gmra.mxu0 %v609
  %v3605 = vpop.f32.mrf.mxu0
  %v3606 = vadd.f32 %v564, %v3605
  %v3607 = vpop.f32.mrf.mxu0
  %v3608 = vadd.f32 %v569, %v3607
  %3609 = vmatmul.bf16.gmra.mxu0 %v611
  %v3610 = vpop.f32.mrf.mxu0
  %v3611 = vadd.f32 %v574, %v3610
  %v3612 = vpop.f32.mrf.mxu0
  %v3613 = vadd.f32 %v579, %v3612
  %3614 = vdwg.mxu0
  %3615 = vmatpush.bf16.msra.mxu0 %v3585
  %3616 = vmatpush.bf16.msra.mxu0 %v3584
  %3617 = vmatpush.bf16.msra.mxu0 %v3583
  %3618 = vmatpush.bf16.msra.mxu0 %v3582
  %3619 = vmatpush.bf16.msra.mxu0 %v3581
  %3620 = vmatpush.bf16.msra.mxu0 %v3580
  %3621 = vmatpush.bf16.msra.mxu0 %v3579
  %3622 = vmatpush.bf16.msra.mxu0 %v3578
  %3623 = vmatmul.bf16.gmra.mxu0 %v606
  %v3624 = vpop.f32.mrf.mxu0
  %v3625 = vadd.f32 %v3596, %v3624
  %v3626 = vpop.f32.mrf.mxu0
  %v3627 = vadd.f32 %v3598, %v3626
  %3628 = vmatmul.bf16.gmra.mxu0 %v608
  %v3629 = vpop.f32.mrf.mxu0
  %v3630 = vadd.f32 %v3601, %v3629
  %v3631 = vpop.f32.mrf.mxu0
  %v3632 = vadd.f32 %v3603, %v3631
  %3633 = vmatmul.bf16.gmra.mxu0 %v610
  %v3634 = vpop.f32.mrf.mxu0
  %v3635 = vadd.f32 %v3606, %v3634
  %v3636 = vpop.f32.mrf.mxu0
  %v3637 = vadd.f32 %v3608, %v3636
  %3638 = vmatmul.bf16.gmra.mxu0 %v612
  %v3639 = vpop.f32.mrf.mxu0
  %v3640 = vadd.f32 %v3611, %v3639
  %v3641 = vpop.f32.mrf.mxu0
  %v3642 = vadd.f32 %v3613, %v3641
  %3643 = vdwg.mxu0
  %v3644 = vmax.f32 %v3625, 0.0
  %v3645 = vmax.f32 %v3627, 0.0
  %v3646 = vmax.f32 %v3630, 0.0
  %v3647 = vmax.f32 %v3632, 0.0
  %v3648 = vmax.f32 %v3635, 0.0
  %v3649 = vmax.f32 %v3637, 0.0
  %v3650 = vmax.f32 %v3640, 0.0
  %v3651 = vmax.f32 %v3642, 0.0
  %v3652 = vpack.c.bf16 %v3644, %v3644
  %v3653 = vpack.c.bf16 %v3645, %v3645
  %v3654 = vpack.c.bf16 %v3646, %v3646
  %v3655 = vpack.c.bf16 %v3647, %v3647
  %v3656 = vpack.c.bf16 %v3648, %v3648
  %v3657 = vpack.c.bf16 %v3649, %v3649
  %v3658 = vpack.c.bf16 %v3650, %v3650
  %v3659 = vpack.c.bf16 %v3651, %v3651
  %3660 = vst.msk [vmem:[#allocation2 + $0x1a0] sm:$0xf] %vm695, %v3652
  %3661 = vst.msk [vmem:[#allocation2 + $0x1a4] sm:$0xf] %vm695, %v3653
  %3662 = vst.msk [vmem:[#allocation2 + $0x1a8] sm:$0xf] %vm695, %v3654
  %3663 = vst.msk [vmem:[#allocation2 + $0x1ac] sm:$0xf] %vm695, %v3655
  %3664 = vst.msk [vmem:[#allocation2 + $0x1b0] sm:$0xf] %vm695, %v3656
  %3665 = vst.msk [vmem:[#allocation2 + $0x1b4] sm:$0xf] %vm695, %v3657
  %3666 = vst.msk [vmem:[#allocation2 + $0x1b8] sm:$0xf] %vm695, %v3658
  %3667 = vst.msk [vmem:[#allocation2 + $0x1bc] sm:$0xf] %vm695, %v3659
  %s3668 = scalar_lea.vmem %s0, 112
  %v3669 = vld [vmem:[%s3668] sm:$0xf]
  %v3670 = vld [vmem:[%s3668 + $0x4] sm:$0xf]
  %v3673 = vunpack.c.l.b16 %v3669
  %v3674 = vunpack.c.l.b16 %v3670
  %v3675 = vpack.c.b16 %v3674, %v3673
  %3677 = vmatpush.bf16.msra.mxu0 0
  %3678 = vmatpush.bf16.msra.mxu0 0
  %3679 = vmatpush.bf16.msra.mxu0 0
  %3680 = vmatpush.bf16.msra.mxu0 0
  %3681 = vmatpush.bf16.msra.mxu0 0
  %3682 = vmatpush.bf16.msra.mxu0 0
  %3683 = vmatpush.bf16.msra.mxu0 0
  %3684 = vmatpush.bf16.msra.mxu0 %v3675
  %3685 = vmatmul.bf16.gmra.mxu0 %v357
  %v3686 = vpop.f32.mrf.mxu0
  %v3687 = vadd.f32 %v112, %v3686
  %v3688 = vpop.f32.mrf.mxu0
  %v3689 = vadd.f32 %v117, %v3688
  %3690 = vmatmul.bf16.gmra.mxu0 %v360
  %v3691 = vpop.f32.mrf.mxu0
  %v3692 = vadd.f32 %v122, %v3691
  %v3693 = vpop.f32.mrf.mxu0
  %v3694 = vadd.f32 %v127, %v3693
  %3695 = vmatmul.bf16.gmra.mxu0 %v363
  %v3696 = vpop.f32.mrf.mxu0
  %v3697 = vadd.f32 %v132, %v3696
  %v3698 = vpop.f32.mrf.mxu0
  %v3699 = vadd.f32 %v137, %v3698
  %3700 = vmatmul.bf16.gmra.mxu0 %v366
  %v3701 = vpop.f32.mrf.mxu0
  %v3702 = vadd.f32 %v142, %v3701
  %v3703 = vpop.f32.mrf.mxu0
  %v3704 = vadd.f32 %v147, %v3703
  %3705 = vmatmul.bf16.gmra.mxu0 %v369
  %v3706 = vpop.f32.mrf.mxu0
  %v3707 = vadd.f32 %v152, %v3706
  %v3708 = vpop.f32.mrf.mxu0
  %v3709 = vadd.f32 %v157, %v3708
  %3710 = vmatmul.bf16.gmra.mxu0 %v372
  %v3711 = vpop.f32.mrf.mxu0
  %v3712 = vadd.f32 %v162, %v3711
  %v3713 = vpop.f32.mrf.mxu0
  %v3714 = vadd.f32 %v167, %v3713
  %3715 = vmatmul.bf16.gmra.mxu0 %v375
  %v3716 = vpop.f32.mrf.mxu0
  %v3717 = vadd.f32 %v172, %v3716
  %v3718 = vpop.f32.mrf.mxu0
  %v3719 = vadd.f32 %v177, %v3718
  %3720 = vmatmul.bf16.gmra.mxu0 %v378
  %v3721 = vpop.f32.mrf.mxu0
  %v3722 = vadd.f32 %v182, %v3721
  %v3723 = vpop.f32.mrf.mxu0
  %v3724 = vadd.f32 %v187, %v3723
  %3725 = vmatmul.bf16.gmra.mxu0 %v381
  %v3726 = vpop.f32.mrf.mxu0
  %v3727 = vadd.f32 %v192, %v3726
  %v3728 = vpop.f32.mrf.mxu0
  %v3729 = vadd.f32 %v197, %v3728
  %3730 = vmatmul.bf16.gmra.mxu0 %v384
  %v3731 = vpop.f32.mrf.mxu0
  %v3732 = vadd.f32 %v202, %v3731
  %v3733 = vpop.f32.mrf.mxu0
  %v3734 = vadd.f32 %v207, %v3733
  %3735 = vmatmul.bf16.gmra.mxu0 %v387
  %v3736 = vpop.f32.mrf.mxu0
  %v3737 = vadd.f32 %v212, %v3736
  %v3738 = vpop.f32.mrf.mxu0
  %v3739 = vadd.f32 %v217, %v3738
  %3740 = vmatmul.bf16.gmra.mxu0 %v390
  %v3741 = vpop.f32.mrf.mxu0
  %v3742 = vadd.f32 %v222, %v3741
  %v3743 = vpop.f32.mrf.mxu0
  %v3744 = vadd.f32 %v227, %v3743
  %3745 = vmatmul.bf16.gmra.mxu0 %v393
  %v3746 = vpop.f32.mrf.mxu0
  %v3747 = vadd.f32 %v232, %v3746
  %v3748 = vpop.f32.mrf.mxu0
  %v3749 = vadd.f32 %v237, %v3748
  %3750 = vmatmul.bf16.gmra.mxu0 %v396
  %v3751 = vpop.f32.mrf.mxu0
  %v3752 = vadd.f32 %v242, %v3751
  %v3753 = vpop.f32.mrf.mxu0
  %v3754 = vadd.f32 %v247, %v3753
  %3755 = vmatmul.bf16.gmra.mxu0 %v399
  %v3756 = vpop.f32.mrf.mxu0
  %v3757 = vadd.f32 %v252, %v3756
  %v3758 = vpop.f32.mrf.mxu0
  %v3759 = vadd.f32 %v257, %v3758
  %3760 = vmatmul.bf16.gmra.mxu0 %v402
  %v3761 = vpop.f32.mrf.mxu0
  %v3762 = vadd.f32 %v262, %v3761
  %v3763 = vpop.f32.mrf.mxu0
  %v3764 = vadd.f32 %v267, %v3763
  %3765 = vdwg.mxu0
  %v3766 = vmax.f32 %v3687, 0.0
  %v3767 = vmax.f32 %v3689, 0.0
  %v3768 = vmax.f32 %v3692, 0.0
  %v3769 = vmax.f32 %v3694, 0.0
  %v3770 = vmax.f32 %v3697, 0.0
  %v3771 = vmax.f32 %v3699, 0.0
  %v3772 = vmax.f32 %v3702, 0.0
  %v3773 = vmax.f32 %v3704, 0.0
  %v3774 = vmax.f32 %v3707, 0.0
  %v3775 = vmax.f32 %v3709, 0.0
  %v3776 = vmax.f32 %v3712, 0.0
  %v3777 = vmax.f32 %v3714, 0.0
  %v3778 = vmax.f32 %v3717, 0.0
  %v3779 = vmax.f32 %v3719, 0.0
  %v3780 = vmax.f32 %v3722, 0.0
  %v3781 = vmax.f32 %v3724, 0.0
  %v3782 = vmax.f32 %v3727, 0.0
  %v3783 = vmax.f32 %v3729, 0.0
  %v3784 = vmax.f32 %v3732, 0.0
  %v3785 = vmax.f32 %v3734, 0.0
  %v3786 = vmax.f32 %v3737, 0.0
  %v3787 = vmax.f32 %v3739, 0.0
  %v3788 = vmax.f32 %v3742, 0.0
  %v3789 = vmax.f32 %v3744, 0.0
  %v3790 = vmax.f32 %v3747, 0.0
  %v3791 = vmax.f32 %v3749, 0.0
  %v3792 = vmax.f32 %v3752, 0.0
  %v3793 = vmax.f32 %v3754, 0.0
  %v3794 = vmax.f32 %v3757, 0.0
  %v3795 = vmax.f32 %v3759, 0.0
  %v3796 = vmax.f32 %v3762, 0.0
  %v3797 = vmax.f32 %v3764, 0.0
  %v3798 = vpack.c.bf16 %v3767, %v3766
  %v3799 = vpack.c.bf16 %v3769, %v3768
  %v3800 = vpack.c.bf16 %v3771, %v3770
  %v3801 = vpack.c.bf16 %v3773, %v3772
  %v3802 = vpack.c.bf16 %v3775, %v3774
  %v3803 = vpack.c.bf16 %v3777, %v3776
  %v3804 = vpack.c.bf16 %v3779, %v3778
  %v3805 = vpack.c.bf16 %v3781, %v3780
  %v3806 = vpack.c.bf16 %v3783, %v3782
  %v3807 = vpack.c.bf16 %v3785, %v3784
  %v3808 = vpack.c.bf16 %v3787, %v3786
  %v3809 = vpack.c.bf16 %v3789, %v3788
  %v3810 = vpack.c.bf16 %v3791, %v3790
  %v3811 = vpack.c.bf16 %v3793, %v3792
  %v3812 = vpack.c.bf16 %v3795, %v3794
  %v3813 = vpack.c.bf16 %v3797, %v3796
  %3814 = vmatpush.bf16.msra.mxu0 %v3805
  %3815 = vmatpush.bf16.msra.mxu0 %v3804
  %3816 = vmatpush.bf16.msra.mxu0 %v3803
  %3817 = vmatpush.bf16.msra.mxu0 %v3802
  %3818 = vmatpush.bf16.msra.mxu0 %v3801
  %3819 = vmatpush.bf16.msra.mxu0 %v3800
  %3820 = vmatpush.bf16.msra.mxu0 %v3799
  %3821 = vmatpush.bf16.msra.mxu0 %v3798
  %3822 = vmatmul.bf16.gmra.mxu0 %v605
  %v3823 = vpop.f32.mrf.mxu0
  %v3824 = vadd.f32 %v544, %v3823
  %v3825 = vpop.f32.mrf.mxu0
  %v3826 = vadd.f32 %v549, %v3825
  %3827 = vmatmul.bf16.gmra.mxu0 %v607
  %v3828 = vpop.f32.mrf.mxu0
  %v3829 = vadd.f32 %v554, %v3828
  %v3830 = vpop.f32.mrf.mxu0
  %v3831 = vadd.f32 %v559, %v3830
  %3832 = vmatmul.bf16.gmra.mxu0 %v609
  %v3833 = vpop.f32.mrf.mxu0
  %v3834 = vadd.f32 %v564, %v3833
  %v3835 = vpop.f32.mrf.mxu0
  %v3836 = vadd.f32 %v569, %v3835
  %3837 = vmatmul.bf16.gmra.mxu0 %v611
  %v3838 = vpop.f32.mrf.mxu0
  %v3839 = vadd.f32 %v574, %v3838
  %v3840 = vpop.f32.mrf.mxu0
  %v3841 = vadd.f32 %v579, %v3840
  %3842 = vdwg.mxu0
  %3843 = vmatpush.bf16.msra.mxu0 %v3813
  %3844 = vmatpush.bf16.msra.mxu0 %v3812
  %3845 = vmatpush.bf16.msra.mxu0 %v3811
  %3846 = vmatpush.bf16.msra.mxu0 %v3810
  %3847 = vmatpush.bf16.msra.mxu0 %v3809
  %3848 = vmatpush.bf16.msra.mxu0 %v3808
  %3849 = vmatpush.bf16.msra.mxu0 %v3807
  %3850 = vmatpush.bf16.msra.mxu0 %v3806
  %3851 = vmatmul.bf16.gmra.mxu0 %v606
  %v3852 = vpop.f32.mrf.mxu0
  %v3853 = vadd.f32 %v3824, %v3852
  %v3854 = vpop.f32.mrf.mxu0
  %v3855 = vadd.f32 %v3826, %v3854
  %3856 = vmatmul.bf16.gmra.mxu0 %v608
  %v3857 = vpop.f32.mrf.mxu0
  %v3858 = vadd.f32 %v3829, %v3857
  %v3859 = vpop.f32.mrf.mxu0
  %v3860 = vadd.f32 %v3831, %v3859
  %3861 = vmatmul.bf16.gmra.mxu0 %v610
  %v3862 = vpop.f32.mrf.mxu0
  %v3863 = vadd.f32 %v3834, %v3862
  %v3864 = vpop.f32.mrf.mxu0
  %v3865 = vadd.f32 %v3836, %v3864
  %3866 = vmatmul.bf16.gmra.mxu0 %v612
  %v3867 = vpop.f32.mrf.mxu0
  %v3868 = vadd.f32 %v3839, %v3867
  %v3869 = vpop.f32.mrf.mxu0
  %v3870 = vadd.f32 %v3841, %v3869
  %3871 = vdwg.mxu0
  %v3872 = vmax.f32 %v3853, 0.0
  %v3873 = vmax.f32 %v3855, 0.0
  %v3874 = vmax.f32 %v3858, 0.0
  %v3875 = vmax.f32 %v3860, 0.0
  %v3876 = vmax.f32 %v3863, 0.0
  %v3877 = vmax.f32 %v3865, 0.0
  %v3878 = vmax.f32 %v3868, 0.0
  %v3879 = vmax.f32 %v3870, 0.0
  %v3880 = vpack.c.bf16 %v3872, %v3872
  %v3881 = vpack.c.bf16 %v3873, %v3873
  %v3882 = vpack.c.bf16 %v3874, %v3874
  %v3883 = vpack.c.bf16 %v3875, %v3875
  %v3884 = vpack.c.bf16 %v3876, %v3876
  %v3885 = vpack.c.bf16 %v3877, %v3877
  %v3886 = vpack.c.bf16 %v3878, %v3878
  %v3887 = vpack.c.bf16 %v3879, %v3879
  %3888 = vst.msk [vmem:[#allocation2 + $0x1c0] sm:$0xf] %vm695, %v3880
  %3889 = vst.msk [vmem:[#allocation2 + $0x1c4] sm:$0xf] %vm695, %v3881
  %3890 = vst.msk [vmem:[#allocation2 + $0x1c8] sm:$0xf] %vm695, %v3882
  %3891 = vst.msk [vmem:[#allocation2 + $0x1cc] sm:$0xf] %vm695, %v3883
  %3892 = vst.msk [vmem:[#allocation2 + $0x1d0] sm:$0xf] %vm695, %v3884
  %3893 = vst.msk [vmem:[#allocation2 + $0x1d4] sm:$0xf] %vm695, %v3885
  %3894 = vst.msk [vmem:[#allocation2 + $0x1d8] sm:$0xf] %vm695, %v3886
  %3895 = vst.msk [vmem:[#allocation2 + $0x1dc] sm:$0xf] %vm695, %v3887
  %s3896 = scalar_lea.vmem %s0, 120
  %v3897 = vld [vmem:[%s3896] sm:$0xf]
  %v3898 = vld [vmem:[%s3896 + $0x4] sm:$0xf]
  %v3901 = vunpack.c.l.b16 %v3897
  %v3902 = vunpack.c.l.b16 %v3898
  %v3903 = vpack.c.b16 %v3902, %v3901
  %3905 = vmatpush.bf16.msra.mxu0 0
  %3906 = vmatpush.bf16.msra.mxu0 0
  %3907 = vmatpush.bf16.msra.mxu0 0
  %3908 = vmatpush.bf16.msra.mxu0 0
  %3909 = vmatpush.bf16.msra.mxu0 0
  %3910 = vmatpush.bf16.msra.mxu0 0
  %3911 = vmatpush.bf16.msra.mxu0 0
  %3912 = vmatpush.bf16.msra.mxu0 %v3903
  %3913 = vmatmul.bf16.gmra.mxu0 %v357
  %v3914 = vpop.f32.mrf.mxu0
  %v3915 = vadd.f32 %v112, %v3914
  %v3916 = vpop.f32.mrf.mxu0
  %v3917 = vadd.f32 %v117, %v3916
  %3918 = vmatmul.bf16.gmra.mxu0 %v360
  %v3919 = vpop.f32.mrf.mxu0
  %v3920 = vadd.f32 %v122, %v3919
  %v3921 = vpop.f32.mrf.mxu0
  %v3922 = vadd.f32 %v127, %v3921
  %3923 = vmatmul.bf16.gmra.mxu0 %v363
  %v3924 = vpop.f32.mrf.mxu0
  %v3925 = vadd.f32 %v132, %v3924
  %v3926 = vpop.f32.mrf.mxu0
  %v3927 = vadd.f32 %v137, %v3926
  %3928 = vmatmul.bf16.gmra.mxu0 %v366
  %v3929 = vpop.f32.mrf.mxu0
  %v3930 = vadd.f32 %v142, %v3929
  %v3931 = vpop.f32.mrf.mxu0
  %v3932 = vadd.f32 %v147, %v3931
  %3933 = vmatmul.bf16.gmra.mxu0 %v369
  %v3934 = vpop.f32.mrf.mxu0
  %v3935 = vadd.f32 %v152, %v3934
  %v3936 = vpop.f32.mrf.mxu0
  %v3937 = vadd.f32 %v157, %v3936
  %3938 = vmatmul.bf16.gmra.mxu0 %v372
  %v3939 = vpop.f32.mrf.mxu0
  %v3940 = vadd.f32 %v162, %v3939
  %v3941 = vpop.f32.mrf.mxu0
  %v3942 = vadd.f32 %v167, %v3941
  %3943 = vmatmul.bf16.gmra.mxu0 %v375
  %v3944 = vpop.f32.mrf.mxu0
  %v3945 = vadd.f32 %v172, %v3944
  %v3946 = vpop.f32.mrf.mxu0
  %v3947 = vadd.f32 %v177, %v3946
  %3948 = vmatmul.bf16.gmra.mxu0 %v378
  %v3949 = vpop.f32.mrf.mxu0
  %v3950 = vadd.f32 %v182, %v3949
  %v3951 = vpop.f32.mrf.mxu0
  %v3952 = vadd.f32 %v187, %v3951
  %3953 = vmatmul.bf16.gmra.mxu0 %v381
  %v3954 = vpop.f32.mrf.mxu0
  %v3955 = vadd.f32 %v192, %v3954
  %v3956 = vpop.f32.mrf.mxu0
  %v3957 = vadd.f32 %v197, %v3956
  %3958 = vmatmul.bf16.gmra.mxu0 %v384
  %v3959 = vpop.f32.mrf.mxu0
  %v3960 = vadd.f32 %v202, %v3959
  %v3961 = vpop.f32.mrf.mxu0
  %v3962 = vadd.f32 %v207, %v3961
  %3963 = vmatmul.bf16.gmra.mxu0 %v387
  %v3964 = vpop.f32.mrf.mxu0
  %v3965 = vadd.f32 %v212, %v3964
  %v3966 = vpop.f32.mrf.mxu0
  %v3967 = vadd.f32 %v217, %v3966
  %3968 = vmatmul.bf16.gmra.mxu0 %v390
  %v3969 = vpop.f32.mrf.mxu0
  %v3970 = vadd.f32 %v222, %v3969
  %v3971 = vpop.f32.mrf.mxu0
  %v3972 = vadd.f32 %v227, %v3971
  %3973 = vmatmul.bf16.gmra.mxu0 %v393
  %v3974 = vpop.f32.mrf.mxu0
  %v3975 = vadd.f32 %v232, %v3974
  %v3976 = vpop.f32.mrf.mxu0
  %v3977 = vadd.f32 %v237, %v3976
  %3978 = vmatmul.bf16.gmra.mxu0 %v396
  %v3979 = vpop.f32.mrf.mxu0
  %v3980 = vadd.f32 %v242, %v3979
  %v3981 = vpop.f32.mrf.mxu0
  %v3982 = vadd.f32 %v247, %v3981
  %3983 = vmatmul.bf16.gmra.mxu0 %v399
  %v3984 = vpop.f32.mrf.mxu0
  %v3985 = vadd.f32 %v252, %v3984
  %v3986 = vpop.f32.mrf.mxu0
  %v3987 = vadd.f32 %v257, %v3986
  %3988 = vmatmul.bf16.gmra.mxu0 %v402
  %v3989 = vpop.f32.mrf.mxu0
  %v3990 = vadd.f32 %v262, %v3989
  %v3991 = vpop.f32.mrf.mxu0
  %v3992 = vadd.f32 %v267, %v3991
  %3993 = vdwg.mxu0
  %v3994 = vmax.f32 %v3915, 0.0
  %v3995 = vmax.f32 %v3917, 0.0
  %v3996 = vmax.f32 %v3920, 0.0
  %v3997 = vmax.f32 %v3922, 0.0
  %v3998 = vmax.f32 %v3925, 0.0
  %v3999 = vmax.f32 %v3927, 0.0
  %v4000 = vmax.f32 %v3930, 0.0
  %v4001 = vmax.f32 %v3932, 0.0
  %v4002 = vmax.f32 %v3935, 0.0
  %v4003 = vmax.f32 %v3937, 0.0
  %v4004 = vmax.f32 %v3940, 0.0
  %v4005 = vmax.f32 %v3942, 0.0
  %v4006 = vmax.f32 %v3945, 0.0
  %v4007 = vmax.f32 %v3947, 0.0
  %v4008 = vmax.f32 %v3950, 0.0
  %v4009 = vmax.f32 %v3952, 0.0
  %v4010 = vmax.f32 %v3955, 0.0
  %v4011 = vmax.f32 %v3957, 0.0
  %v4012 = vmax.f32 %v3960, 0.0
  %v4013 = vmax.f32 %v3962, 0.0
  %v4014 = vmax.f32 %v3965, 0.0
  %v4015 = vmax.f32 %v3967, 0.0
  %v4016 = vmax.f32 %v3970, 0.0
  %v4017 = vmax.f32 %v3972, 0.0
  %v4018 = vmax.f32 %v3975, 0.0
  %v4019 = vmax.f32 %v3977, 0.0
  %v4020 = vmax.f32 %v3980, 0.0
  %v4021 = vmax.f32 %v3982, 0.0
  %v4022 = vmax.f32 %v3985, 0.0
  %v4023 = vmax.f32 %v3987, 0.0
  %v4024 = vmax.f32 %v3990, 0.0
  %v4025 = vmax.f32 %v3992, 0.0
  %v4026 = vpack.c.bf16 %v3995, %v3994
  %v4027 = vpack.c.bf16 %v3997, %v3996
  %v4028 = vpack.c.bf16 %v3999, %v3998
  %v4029 = vpack.c.bf16 %v4001, %v4000
  %v4030 = vpack.c.bf16 %v4003, %v4002
  %v4031 = vpack.c.bf16 %v4005, %v4004
  %v4032 = vpack.c.bf16 %v4007, %v4006
  %v4033 = vpack.c.bf16 %v4009, %v4008
  %v4034 = vpack.c.bf16 %v4011, %v4010
  %v4035 = vpack.c.bf16 %v4013, %v4012
  %v4036 = vpack.c.bf16 %v4015, %v4014
  %v4037 = vpack.c.bf16 %v4017, %v4016
  %v4038 = vpack.c.bf16 %v4019, %v4018
  %v4039 = vpack.c.bf16 %v4021, %v4020
  %v4040 = vpack.c.bf16 %v4023, %v4022
  %v4041 = vpack.c.bf16 %v4025, %v4024
  %4042 = vmatpush.bf16.msra.mxu0 %v4033
  %4043 = vmatpush.bf16.msra.mxu0 %v4032
  %4044 = vmatpush.bf16.msra.mxu0 %v4031
  %4045 = vmatpush.bf16.msra.mxu0 %v4030
  %4046 = vmatpush.bf16.msra.mxu0 %v4029
  %4047 = vmatpush.bf16.msra.mxu0 %v4028
  %4048 = vmatpush.bf16.msra.mxu0 %v4027
  %4049 = vmatpush.bf16.msra.mxu0 %v4026
  %4050 = vmatmul.bf16.gmra.mxu0 %v605
  %v4051 = vpop.f32.mrf.mxu0
  %v4052 = vadd.f32 %v544, %v4051
  %v4053 = vpop.f32.mrf.mxu0
  %v4054 = vadd.f32 %v549, %v4053
  %4055 = vmatmul.bf16.gmra.mxu0 %v607
  %v4056 = vpop.f32.mrf.mxu0
  %v4057 = vadd.f32 %v554, %v4056
  %v4058 = vpop.f32.mrf.mxu0
  %v4059 = vadd.f32 %v559, %v4058
  %4060 = vmatmul.bf16.gmra.mxu0 %v609
  %v4061 = vpop.f32.mrf.mxu0
  %v4062 = vadd.f32 %v564, %v4061
  %v4063 = vpop.f32.mrf.mxu0
  %v4064 = vadd.f32 %v569, %v4063
  %4065 = vmatmul.bf16.gmra.mxu0 %v611
  %v4066 = vpop.f32.mrf.mxu0
  %v4067 = vadd.f32 %v574, %v4066
  %v4068 = vpop.f32.mrf.mxu0
  %v4069 = vadd.f32 %v579, %v4068
  %4070 = vdwg.mxu0
  %4071 = vmatpush.bf16.msra.mxu0 %v4041
  %4072 = vmatpush.bf16.msra.mxu0 %v4040
  %4073 = vmatpush.bf16.msra.mxu0 %v4039
  %4074 = vmatpush.bf16.msra.mxu0 %v4038
  %4075 = vmatpush.bf16.msra.mxu0 %v4037
  %4076 = vmatpush.bf16.msra.mxu0 %v4036
  %4077 = vmatpush.bf16.msra.mxu0 %v4035
  %4078 = vmatpush.bf16.msra.mxu0 %v4034
  %4079 = vmatmul.bf16.gmra.mxu0 %v606
  %v4080 = vpop.f32.mrf.mxu0
  %v4081 = vadd.f32 %v4052, %v4080
  %v4082 = vpop.f32.mrf.mxu0
  %v4083 = vadd.f32 %v4054, %v4082
  %4084 = vmatmul.bf16.gmra.mxu0 %v608
  %v4085 = vpop.f32.mrf.mxu0
  %v4086 = vadd.f32 %v4057, %v4085
  %v4087 = vpop.f32.mrf.mxu0
  %v4088 = vadd.f32 %v4059, %v4087
  %4089 = vmatmul.bf16.gmra.mxu0 %v610
  %v4090 = vpop.f32.mrf.mxu0
  %v4091 = vadd.f32 %v4062, %v4090
  %v4092 = vpop.f32.mrf.mxu0
  %v4093 = vadd.f32 %v4064, %v4092
  %4094 = vmatmul.bf16.gmra.mxu0 %v612
  %v4095 = vpop.f32.mrf.mxu0
  %v4096 = vadd.f32 %v4067, %v4095
  %v4097 = vpop.f32.mrf.mxu0
  %v4098 = vadd.f32 %v4069, %v4097
  %4099 = vdwg.mxu0
  %v4100 = vmax.f32 %v4081, 0.0
  %v4101 = vmax.f32 %v4083, 0.0
  %v4102 = vmax.f32 %v4086, 0.0
  %v4103 = vmax.f32 %v4088, 0.0
  %v4104 = vmax.f32 %v4091, 0.0
  %v4105 = vmax.f32 %v4093, 0.0
  %v4106 = vmax.f32 %v4096, 0.0
  %v4107 = vmax.f32 %v4098, 0.0
  %v4108 = vpack.c.bf16 %v4100, %v4100
  %v4109 = vpack.c.bf16 %v4101, %v4101
  %v4110 = vpack.c.bf16 %v4102, %v4102
  %v4111 = vpack.c.bf16 %v4103, %v4103
  %v4112 = vpack.c.bf16 %v4104, %v4104
  %v4113 = vpack.c.bf16 %v4105, %v4105
  %v4114 = vpack.c.bf16 %v4106, %v4106
  %v4115 = vpack.c.bf16 %v4107, %v4107
  %4116 = vst.msk [vmem:[#allocation2 + $0x1e0] sm:$0xf] %vm695, %v4108
  %4117 = vst.msk [vmem:[#allocation2 + $0x1e4] sm:$0xf] %vm695, %v4109
  %4118 = vst.msk [vmem:[#allocation2 + $0x1e8] sm:$0xf] %vm695, %v4110
  %4119 = vst.msk [vmem:[#allocation2 + $0x1ec] sm:$0xf] %vm695, %v4111
  %4120 = vst.msk [vmem:[#allocation2 + $0x1f0] sm:$0xf] %vm695, %v4112
  %4121 = vst.msk [vmem:[#allocation2 + $0x1f4] sm:$0xf] %vm695, %v4113
  %4122 = vst.msk [vmem:[#allocation2 + $0x1f8] sm:$0xf] %vm695, %v4114
  %4123 = vst.msk [vmem:[#allocation2 + $0x1fc] sm:$0xf] %vm695, %v4115
  %v4124 = vld [vmem:[%s5] sm:$0xff]
  %v4125 = vld [vmem:[%s5 + $0x8] sm:$0xff]
  %v4126 = vld [vmem:[%s5 + $0x10] sm:$0xff]
  %v4127 = vld [vmem:[%s5 + $0x18] sm:$0xff]
  %v4128 = vld [vmem:[%s5 + $0x20] sm:$0xff]
  %v4129 = vld [vmem:[%s5 + $0x28] sm:$0xff]
  %v4130 = vld [vmem:[%s5 + $0x30] sm:$0xff]
  %v4131 = vld [vmem:[%s5 + $0x38] sm:$0xff]
  %v4132 = vld [vmem:[%s5 + $0x40] sm:$0xff]
  %v4133 = vld [vmem:[%s5 + $0x48] sm:$0xff]
  %v4134 = vld [vmem:[%s5 + $0x50] sm:$0xff]
  %v4135 = vld [vmem:[%s5 + $0x58] sm:$0xff]
  %v4136 = vld [vmem:[%s5 + $0x60] sm:$0xff]
  %v4137 = vld [vmem:[%s5 + $0x68] sm:$0xff]
  %v4138 = vld [vmem:[%s5 + $0x70] sm:$0xff]
  %v4139 = vld [vmem:[%s5 + $0x78] sm:$0xff]
  %v4140 = vld [vmem:[#allocation2] sm:$0xf]
  %v4141 = vld [vmem:[#allocation2 + $0x4] sm:$0xf]
  %v4142 = vld [vmem:[#allocation2 + $0x8] sm:$0xf]
  %v4143 = vld [vmem:[#allocation2 + $0xc] sm:$0xf]
  %v4144 = vld [vmem:[#allocation2 + $0x10] sm:$0xf]
  %v4145 = vld [vmem:[#allocation2 + $0x14] sm:$0xf]
  %v4146 = vld [vmem:[#allocation2 + $0x18] sm:$0xf]
  %v4147 = vld [vmem:[#allocation2 + $0x1c] sm:$0xf]
  %v4148 = vld [vmem:[#allocation2 + $0x20] sm:$0xf]
  %v4149 = vld [vmem:[#allocation2 + $0x24] sm:$0xf]
  %v4150 = vld [vmem:[#allocation2 + $0x28] sm:$0xf]
  %v4151 = vld [vmem:[#allocation2 + $0x2c] sm:$0xf]
  %v4152 = vld [vmem:[#allocation2 + $0x30] sm:$0xf]
  %v4153 = vld [vmem:[#allocation2 + $0x34] sm:$0xf]
  %v4154 = vld [vmem:[#allocation2 + $0x38] sm:$0xf]
  %v4155 = vld [vmem:[#allocation2 + $0x3c] sm:$0xf]
  %v4156 = vld [vmem:[#allocation2 + $0x40] sm:$0xf]
  %v4157 = vld [vmem:[#allocation2 + $0x44] sm:$0xf]
  %v4158 = vld [vmem:[#allocation2 + $0x48] sm:$0xf]
  %v4159 = vld [vmem:[#allocation2 + $0x4c] sm:$0xf]
  %v4160 = vld [vmem:[#allocation2 + $0x50] sm:$0xf]
  %v4161 = vld [vmem:[#allocation2 + $0x54] sm:$0xf]
  %v4162 = vld [vmem:[#allocation2 + $0x58] sm:$0xf]
  %v4163 = vld [vmem:[#allocation2 + $0x5c] sm:$0xf]
  %v4164 = vld [vmem:[#allocation2 + $0x60] sm:$0xf]
  %v4165 = vld [vmem:[#allocation2 + $0x64] sm:$0xf]
  %v4166 = vld [vmem:[#allocation2 + $0x68] sm:$0xf]
  %v4167 = vld [vmem:[#allocation2 + $0x6c] sm:$0xf]
  %v4168 = vld [vmem:[#allocation2 + $0x70] sm:$0xf]
  %v4169 = vld [vmem:[#allocation2 + $0x74] sm:$0xf]
  %v4170 = vld [vmem:[#allocation2 + $0x78] sm:$0xf]
  %v4171 = vld [vmem:[#allocation2 + $0x7c] sm:$0xf]
  %v4172 = vld [vmem:[#allocation2 + $0x80] sm:$0xf]
  %v4173 = vld [vmem:[#allocation2 + $0x84] sm:$0xf]
  %v4174 = vld [vmem:[#allocation2 + $0x88] sm:$0xf]
  %v4175 = vld [vmem:[#allocation2 + $0x8c] sm:$0xf]
  %v4176 = vld [vmem:[#allocation2 + $0x90] sm:$0xf]
  %v4177 = vld [vmem:[#allocation2 + $0x94] sm:$0xf]
  %v4178 = vld [vmem:[#allocation2 + $0x98] sm:$0xf]
  %v4179 = vld [vmem:[#allocation2 + $0x9c] sm:$0xf]
  %v4180 = vld [vmem:[#allocation2 + $0xa0] sm:$0xf]
  %v4181 = vld [vmem:[#allocation2 + $0xa4] sm:$0xf]
  %v4182 = vld [vmem:[#allocation2 + $0xa8] sm:$0xf]
  %v4183 = vld [vmem:[#allocation2 + $0xac] sm:$0xf]
  %v4184 = vld [vmem:[#allocation2 + $0xb0] sm:$0xf]
  %v4185 = vld [vmem:[#allocation2 + $0xb4] sm:$0xf]
  %v4186 = vld [vmem:[#allocation2 + $0xb8] sm:$0xf]
  %v4187 = vld [vmem:[#allocation2 + $0xbc] sm:$0xf]
  %v4188 = vld [vmem:[#allocation2 + $0xc0] sm:$0xf]
  %v4189 = vld [vmem:[#allocation2 + $0xc4] sm:$0xf]
  %v4190 = vld [vmem:[#allocation2 + $0xc8] sm:$0xf]
  %v4191 = vld [vmem:[#allocation2 + $0xcc] sm:$0xf]
  %v4192 = vld [vmem:[#allocation2 + $0xd0] sm:$0xf]
  %v4193 = vld [vmem:[#allocation2 + $0xd4] sm:$0xf]
  %v4194 = vld [vmem:[#allocation2 + $0xd8] sm:$0xf]
  %v4195 = vld [vmem:[#allocation2 + $0xdc] sm:$0xf]
  %v4196 = vld [vmem:[#allocation2 + $0xe0] sm:$0xf]
  %v4197 = vld [vmem:[#allocation2 + $0xe4] sm:$0xf]
  %v4198 = vld [vmem:[#allocation2 + $0xe8] sm:$0xf]
  %v4199 = vld [vmem:[#allocation2 + $0xec] sm:$0xf]
  %v4200 = vld [vmem:[#allocation2 + $0xf0] sm:$0xf]
  %v4201 = vld [vmem:[#allocation2 + $0xf4] sm:$0xf]
  %v4202 = vld [vmem:[#allocation2 + $0xf8] sm:$0xf]
  %v4203 = vld [vmem:[#allocation2 + $0xfc] sm:$0xf]
  %v4204 = vld [vmem:[#allocation2 + $0x100] sm:$0xf]
  %v4205 = vld [vmem:[#allocation2 + $0x104] sm:$0xf]
  %v4206 = vld [vmem:[#allocation2 + $0x108] sm:$0xf]
  %v4207 = vld [vmem:[#allocation2 + $0x10c] sm:$0xf]
  %v4208 = vld [vmem:[#allocation2 + $0x110] sm:$0xf]
  %v4209 = vld [vmem:[#allocation2 + $0x114] sm:$0xf]
  %v4210 = vld [vmem:[#allocation2 + $0x118] sm:$0xf]
  %v4211 = vld [vmem:[#allocation2 + $0x11c] sm:$0xf]
  %v4212 = vld [vmem:[#allocation2 + $0x120] sm:$0xf]
  %v4213 = vld [vmem:[#allocation2 + $0x124] sm:$0xf]
  %v4214 = vld [vmem:[#allocation2 + $0x128] sm:$0xf]
  %v4215 = vld [vmem:[#allocation2 + $0x12c] sm:$0xf]
  %v4216 = vld [vmem:[#allocation2 + $0x130] sm:$0xf]
  %v4217 = vld [vmem:[#allocation2 + $0x134] sm:$0xf]
  %v4218 = vld [vmem:[#allocation2 + $0x138] sm:$0xf]
  %v4219 = vld [vmem:[#allocation2 + $0x13c] sm:$0xf]
  %v4220 = vld [vmem:[#allocation2 + $0x140] sm:$0xf]
  %v4221 = vld [vmem:[#allocation2 + $0x144] sm:$0xf]
  %v4222 = vld [vmem:[#allocation2 + $0x148] sm:$0xf]
  %v4223 = vld [vmem:[#allocation2 + $0x14c] sm:$0xf]
  %v4224 = vld [vmem:[#allocation2 + $0x150] sm:$0xf]
  %v4225 = vld [vmem:[#allocation2 + $0x154] sm:$0xf]
  %v4226 = vld [vmem:[#allocation2 + $0x158] sm:$0xf]
  %v4227 = vld [vmem:[#allocation2 + $0x15c] sm:$0xf]
  %v4228 = vld [vmem:[#allocation2 + $0x160] sm:$0xf]
  %v4229 = vld [vmem:[#allocation2 + $0x164] sm:$0xf]
  %v4230 = vld [vmem:[#allocation2 + $0x168] sm:$0xf]
  %v4231 = vld [vmem:[#allocation2 + $0x16c] sm:$0xf]
  %v4232 = vld [vmem:[#allocation2 + $0x170] sm:$0xf]
  %v4233 = vld [vmem:[#allocation2 + $0x174] sm:$0xf]
  %v4234 = vld [vmem:[#allocation2 + $0x178] sm:$0xf]
  %v4235 = vld [vmem:[#allocation2 + $0x17c] sm:$0xf]
  %v4236 = vld [vmem:[#allocation2 + $0x180] sm:$0xf]
  %v4237 = vld [vmem:[#allocation2 + $0x184] sm:$0xf]
  %v4238 = vld [vmem:[#allocation2 + $0x188] sm:$0xf]
  %v4239 = vld [vmem:[#allocation2 + $0x18c] sm:$0xf]
  %v4240 = vld [vmem:[#allocation2 + $0x190] sm:$0xf]
  %v4241 = vld [vmem:[#allocation2 + $0x194] sm:$0xf]
  %v4242 = vld [vmem:[#allocation2 + $0x198] sm:$0xf]
  %v4243 = vld [vmem:[#allocation2 + $0x19c] sm:$0xf]
  %v4244 = vld [vmem:[#allocation2 + $0x1a0] sm:$0xf]
  %v4245 = vld [vmem:[#allocation2 + $0x1a4] sm:$0xf]
  %v4246 = vld [vmem:[#allocation2 + $0x1a8] sm:$0xf]
  %v4247 = vld [vmem:[#allocation2 + $0x1ac] sm:$0xf]
  %v4248 = vld [vmem:[#allocation2 + $0x1b0] sm:$0xf]
  %v4249 = vld [vmem:[#allocation2 + $0x1b4] sm:$0xf]
  %v4250 = vld [vmem:[#allocation2 + $0x1b8] sm:$0xf]
  %v4251 = vld [vmem:[#allocation2 + $0x1bc] sm:$0xf]
  %v4252 = vld [vmem:[#allocation2 + $0x1c0] sm:$0xf]
  %v4253 = vld [vmem:[#allocation2 + $0x1c4] sm:$0xf]
  %v4254 = vld [vmem:[#allocation2 + $0x1c8] sm:$0xf]
  %v4255 = vld [vmem:[#allocation2 + $0x1cc] sm:$0xf]
  %v4256 = vld [vmem:[#allocation2 + $0x1d0] sm:$0xf]
  %v4257 = vld [vmem:[#allocation2 + $0x1d4] sm:$0xf]
  %v4258 = vld [vmem:[#allocation2 + $0x1d8] sm:$0xf]
  %v4259 = vld [vmem:[#allocation2 + $0x1dc] sm:$0xf]
  %v4260 = vld [vmem:[#allocation2 + $0x1e0] sm:$0xf]
  %v4261 = vld [vmem:[#allocation2 + $0x1e4] sm:$0xf]
  %v4262 = vld [vmem:[#allocation2 + $0x1e8] sm:$0xf]
  %v4263 = vld [vmem:[#allocation2 + $0x1ec] sm:$0xf]
  %v4264 = vld [vmem:[#allocation2 + $0x1f0] sm:$0xf]
  %v4265 = vld [vmem:[#allocation2 + $0x1f4] sm:$0xf]
  %v4266 = vld [vmem:[#allocation2 + $0x1f8] sm:$0xf]
  %v4267 = vld [vmem:[#allocation2 + $0x1fc] sm:$0xf]
  %v4268 = vld [vmem:[%s6] sm:$0xff]
  %v4269 = vld [vmem:[%s6 + $0x8] sm:$0xff]
  %v4270 = vld [vmem:[%s6 + $0x10] sm:$0xff]
  %v4271 = vld [vmem:[%s6 + $0x18] sm:$0xff]
  %4273 = vset.pattern.permute.xlu0 0
  %4274 = vperm.xlu0 %4273, %v4268
  %v4275 = vpop.permute.xlu0 %4274
  %4278 = vset.pattern.permute.xlu0 0
  %4279 = vperm.xlu0 %4278, %v4269
  %v4280 = vpop.permute.xlu0 %4279
  %4283 = vset.pattern.permute.xlu0 0
  %4284 = vperm.xlu0 %4283, %v4270
  %v4285 = vpop.permute.xlu0 %4284
  %4288 = vset.pattern.permute.xlu0 0
  %4289 = vperm.xlu0 %4288, %v4271
  %v4290 = vpop.permute.xlu0 %4289
  %v4308 = vunpack.c.l.b16 %v4124
  %v4309 = vunpack.c.h.b16 %v4124
  %v4310 = vunpack.c.l.b16 %v4125
  %v4311 = vunpack.c.h.b16 %v4125
  %v4312 = vunpack.c.l.b16 %v4126
  %v4313 = vunpack.c.h.b16 %v4126
  %v4314 = vunpack.c.l.b16 %v4127
  %v4315 = vunpack.c.h.b16 %v4127
  %v4316 = vunpack.c.l.b16 %v4128
  %v4317 = vunpack.c.h.b16 %v4128
  %v4318 = vunpack.c.l.b16 %v4129
  %v4319 = vunpack.c.h.b16 %v4129
  %v4320 = vunpack.c.l.b16 %v4130
  %v4321 = vunpack.c.h.b16 %v4130
  %v4322 = vunpack.c.l.b16 %v4131
  %v4323 = vunpack.c.h.b16 %v4131
  %v4324 = vunpack.c.l.b16 %v4132
  %v4325 = vunpack.c.h.b16 %v4132
  %v4326 = vunpack.c.l.b16 %v4133
  %v4327 = vunpack.c.h.b16 %v4133
  %v4328 = vunpack.c.l.b16 %v4134
  %v4329 = vunpack.c.h.b16 %v4134
  %v4330 = vunpack.c.l.b16 %v4135
  %v4331 = vunpack.c.h.b16 %v4135
  %v4332 = vunpack.c.l.b16 %v4136
  %v4333 = vunpack.c.h.b16 %v4136
  %v4334 = vunpack.c.l.b16 %v4137
  %v4335 = vunpack.c.h.b16 %v4137
  %v4336 = vunpack.c.l.b16 %v4138
  %v4337 = vunpack.c.h.b16 %v4138
  %v4338 = vunpack.c.l.b16 %v4139
  %v4339 = vunpack.c.h.b16 %v4139
  %v4340 = vpack.c.b16 %v4316, %v4308
  %v4341 = vpack.c.b16 %v4317, %v4309
  %v4342 = vpack.c.b16 %v4318, %v4310
  %v4343 = vpack.c.b16 %v4319, %v4311
  %v4344 = vpack.c.b16 %v4320, %v4312
  %v4345 = vpack.c.b16 %v4321, %v4313
  %v4346 = vpack.c.b16 %v4322, %v4314
  %v4347 = vpack.c.b16 %v4323, %v4315
  %v4348 = vpack.c.b16 %v4332, %v4324
  %v4349 = vpack.c.b16 %v4333, %v4325
  %v4350 = vpack.c.b16 %v4334, %v4326
  %v4351 = vpack.c.b16 %v4335, %v4327
  %v4352 = vpack.c.b16 %v4336, %v4328
  %v4353 = vpack.c.b16 %v4337, %v4329
  %v4354 = vpack.c.b16 %v4338, %v4330
  %v4355 = vpack.c.b16 %v4339, %v4331
  %v4500 = vunpack.c.l.b16 %v4140
  %v4501 = vunpack.c.l.b16 %v4141
  %v4502 = vunpack.c.l.b16 %v4142
  %v4503 = vunpack.c.l.b16 %v4143
  %v4504 = vunpack.c.l.b16 %v4144
  %v4505 = vunpack.c.l.b16 %v4145
  %v4506 = vunpack.c.l.b16 %v4146
  %v4507 = vunpack.c.l.b16 %v4147
  %v4508 = vunpack.c.l.b16 %v4148
  %v4509 = vunpack.c.l.b16 %v4149
  %v4510 = vunpack.c.l.b16 %v4150
  %v4511 = vunpack.c.l.b16 %v4151
  %v4512 = vunpack.c.l.b16 %v4152
  %v4513 = vunpack.c.l.b16 %v4153
  %v4514 = vunpack.c.l.b16 %v4154
  %v4515 = vunpack.c.l.b16 %v4155
  %v4516 = vunpack.c.l.b16 %v4156
  %v4517 = vunpack.c.l.b16 %v4157
  %v4518 = vunpack.c.l.b16 %v4158
  %v4519 = vunpack.c.l.b16 %v4159
  %v4520 = vunpack.c.l.b16 %v4160
  %v4521 = vunpack.c.l.b16 %v4161
  %v4522 = vunpack.c.l.b16 %v4162
  %v4523 = vunpack.c.l.b16 %v4163
  %v4524 = vunpack.c.l.b16 %v4164
  %v4525 = vunpack.c.l.b16 %v4165
  %v4526 = vunpack.c.l.b16 %v4166
  %v4527 = vunpack.c.l.b16 %v4167
  %v4528 = vunpack.c.l.b16 %v4168
  %v4529 = vunpack.c.l.b16 %v4169
  %v4530 = vunpack.c.l.b16 %v4170
  %v4531 = vunpack.c.l.b16 %v4171
  %v4532 = vunpack.c.l.b16 %v4172
  %v4533 = vunpack.c.l.b16 %v4173
  %v4534 = vunpack.c.l.b16 %v4174
  %v4535 = vunpack.c.l.b16 %v4175
  %v4536 = vunpack.c.l.b16 %v4176
  %v4537 = vunpack.c.l.b16 %v4177
  %v4538 = vunpack.c.l.b16 %v4178
  %v4539 = vunpack.c.l.b16 %v4179
  %v4540 = vunpack.c.l.b16 %v4180
  %v4541 = vunpack.c.l.b16 %v4181
  %v4542 = vunpack.c.l.b16 %v4182
  %v4543 = vunpack.c.l.b16 %v4183
  %v4544 = vunpack.c.l.b16 %v4184
  %v4545 = vunpack.c.l.b16 %v4185
  %v4546 = vunpack.c.l.b16 %v4186
  %v4547 = vunpack.c.l.b16 %v4187
  %v4548 = vunpack.c.l.b16 %v4188
  %v4549 = vunpack.c.l.b16 %v4189
  %v4550 = vunpack.c.l.b16 %v4190
  %v4551 = vunpack.c.l.b16 %v4191
  %v4552 = vunpack.c.l.b16 %v4192
  %v4553 = vunpack.c.l.b16 %v4193
  %v4554 = vunpack.c.l.b16 %v4194
  %v4555 = vunpack.c.l.b16 %v4195
  %v4556 = vunpack.c.l.b16 %v4196
  %v4557 = vunpack.c.l.b16 %v4197
  %v4558 = vunpack.c.l.b16 %v4198
  %v4559 = vunpack.c.l.b16 %v4199
  %v4560 = vunpack.c.l.b16 %v4200
  %v4561 = vunpack.c.l.b16 %v4201
  %v4562 = vunpack.c.l.b16 %v4202
  %v4563 = vunpack.c.l.b16 %v4203
  %v4564 = vunpack.c.l.b16 %v4204
  %v4565 = vunpack.c.l.b16 %v4205
  %v4566 = vunpack.c.l.b16 %v4206
  %v4567 = vunpack.c.l.b16 %v4207
  %v4568 = vunpack.c.l.b16 %v4208
  %v4569 = vunpack.c.l.b16 %v4209
  %v4570 = vunpack.c.l.b16 %v4210
  %v4571 = vunpack.c.l.b16 %v4211
  %v4572 = vunpack.c.l.b16 %v4212
  %v4573 = vunpack.c.l.b16 %v4213
  %v4574 = vunpack.c.l.b16 %v4214
  %v4575 = vunpack.c.l.b16 %v4215
  %v4576 = vunpack.c.l.b16 %v4216
  %v4577 = vunpack.c.l.b16 %v4217
  %v4578 = vunpack.c.l.b16 %v4218
  %v4579 = vunpack.c.l.b16 %v4219
  %v4580 = vunpack.c.l.b16 %v4220
  %v4581 = vunpack.c.l.b16 %v4221
  %v4582 = vunpack.c.l.b16 %v4222
  %v4583 = vunpack.c.l.b16 %v4223
  %v4584 = vunpack.c.l.b16 %v4224
  %v4585 = vunpack.c.l.b16 %v4225
  %v4586 = vunpack.c.l.b16 %v4226
  %v4587 = vunpack.c.l.b16 %v4227
  %v4588 = vunpack.c.l.b16 %v4228
  %v4589 = vunpack.c.l.b16 %v4229
  %v4590 = vunpack.c.l.b16 %v4230
  %v4591 = vunpack.c.l.b16 %v4231
  %v4592 = vunpack.c.l.b16 %v4232
  %v4593 = vunpack.c.l.b16 %v4233
  %v4594 = vunpack.c.l.b16 %v4234
  %v4595 = vunpack.c.l.b16 %v4235
  %v4596 = vunpack.c.l.b16 %v4236
  %v4597 = vunpack.c.l.b16 %v4237
  %v4598 = vunpack.c.l.b16 %v4238
  %v4599 = vunpack.c.l.b16 %v4239
  %v4600 = vunpack.c.l.b16 %v4240
  %v4601 = vunpack.c.l.b16 %v4241
  %v4602 = vunpack.c.l.b16 %v4242
  %v4603 = vunpack.c.l.b16 %v4243
  %v4604 = vunpack.c.l.b16 %v4244
  %v4605 = vunpack.c.l.b16 %v4245
  %v4606 = vunpack.c.l.b16 %v4246
  %v4607 = vunpack.c.l.b16 %v4247
  %v4608 = vunpack.c.l.b16 %v4248
  %v4609 = vunpack.c.l.b16 %v4249
  %v4610 = vunpack.c.l.b16 %v4250
  %v4611 = vunpack.c.l.b16 %v4251
  %v4612 = vunpack.c.l.b16 %v4252
  %v4613 = vunpack.c.l.b16 %v4253
  %v4614 = vunpack.c.l.b16 %v4254
  %v4615 = vunpack.c.l.b16 %v4255
  %v4616 = vunpack.c.l.b16 %v4256
  %v4617 = vunpack.c.l.b16 %v4257
  %v4618 = vunpack.c.l.b16 %v4258
  %v4619 = vunpack.c.l.b16 %v4259
  %v4620 = vunpack.c.l.b16 %v4260
  %v4621 = vunpack.c.l.b16 %v4261
  %v4622 = vunpack.c.l.b16 %v4262
  %v4623 = vunpack.c.l.b16 %v4263
  %v4624 = vunpack.c.l.b16 %v4264
  %v4625 = vunpack.c.l.b16 %v4265
  %v4626 = vunpack.c.l.b16 %v4266
  %v4627 = vunpack.c.l.b16 %v4267
  %v4628 = vpack.c.b16 %v4501, %v4500
  %v4629 = vpack.c.b16 %v4503, %v4502
  %v4630 = vpack.c.b16 %v4505, %v4504
  %v4631 = vpack.c.b16 %v4507, %v4506
  %v4632 = vpack.c.b16 %v4509, %v4508
  %v4633 = vpack.c.b16 %v4511, %v4510
  %v4634 = vpack.c.b16 %v4513, %v4512
  %v4635 = vpack.c.b16 %v4515, %v4514
  %v4636 = vpack.c.b16 %v4517, %v4516
  %v4637 = vpack.c.b16 %v4519, %v4518
  %v4638 = vpack.c.b16 %v4521, %v4520
  %v4639 = vpack.c.b16 %v4523, %v4522
  %v4640 = vpack.c.b16 %v4525, %v4524
  %v4641 = vpack.c.b16 %v4527, %v4526
  %v4642 = vpack.c.b16 %v4529, %v4528
  %v4643 = vpack.c.b16 %v4531, %v4530
  %v4644 = vpack.c.b16 %v4533, %v4532
  %v4645 = vpack.c.b16 %v4535, %v4534
  %v4646 = vpack.c.b16 %v4537, %v4536
  %v4647 = vpack.c.b16 %v4539, %v4538
  %v4648 = vpack.c.b16 %v4541, %v4540
  %v4649 = vpack.c.b16 %v4543, %v4542
  %v4650 = vpack.c.b16 %v4545, %v4544
  %v4651 = vpack.c.b16 %v4547, %v4546
  %v4652 = vpack.c.b16 %v4549, %v4548
  %v4653 = vpack.c.b16 %v4551, %v4550
  %v4654 = vpack.c.b16 %v4553, %v4552
  %v4655 = vpack.c.b16 %v4555, %v4554
  %v4656 = vpack.c.b16 %v4557, %v4556
  %v4657 = vpack.c.b16 %v4559, %v4558
  %v4658 = vpack.c.b16 %v4561, %v4560
  %v4659 = vpack.c.b16 %v4563, %v4562
  %v4660 = vpack.c.b16 %v4565, %v4564
  %v4661 = vpack.c.b16 %v4567, %v4566
  %v4662 = vpack.c.b16 %v4569, %v4568
  %v4663 = vpack.c.b16 %v4571, %v4570
  %v4664 = vpack.c.b16 %v4573, %v4572
  %v4665 = vpack.c.b16 %v4575, %v4574
  %v4666 = vpack.c.b16 %v4577, %v4576
  %v4667 = vpack.c.b16 %v4579, %v4578
  %v4668 = vpack.c.b16 %v4581, %v4580
  %v4669 = vpack.c.b16 %v4583, %v4582
  %v4670 = vpack.c.b16 %v4585, %v4584
  %v4671 = vpack.c.b16 %v4587, %v4586
  %v4672 = vpack.c.b16 %v4589, %v4588
  %v4673 = vpack.c.b16 %v4591, %v4590
  %v4674 = vpack.c.b16 %v4593, %v4592
  %v4675 = vpack.c.b16 %v4595, %v4594
  %v4676 = vpack.c.b16 %v4597, %v4596
  %v4677 = vpack.c.b16 %v4599, %v4598
  %v4678 = vpack.c.b16 %v4601, %v4600
  %v4679 = vpack.c.b16 %v4603, %v4602
  %v4680 = vpack.c.b16 %v4605, %v4604
  %v4681 = vpack.c.b16 %v4607, %v4606
  %v4682 = vpack.c.b16 %v4609, %v4608
  %v4683 = vpack.c.b16 %v4611, %v4610
  %v4684 = vpack.c.b16 %v4613, %v4612
  %v4685 = vpack.c.b16 %v4615, %v4614
  %v4686 = vpack.c.b16 %v4617, %v4616
  %v4687 = vpack.c.b16 %v4619, %v4618
  %v4688 = vpack.c.b16 %v4621, %v4620
  %v4689 = vpack.c.b16 %v4623, %v4622
  %v4690 = vpack.c.b16 %v4625, %v4624
  %v4691 = vpack.c.b16 %v4627, %v4626
  %4756 = vmatpush.bf16.msra.mxu0 %v4635
  %4757 = vmatpush.bf16.msra.mxu0 %v4634
  %4758 = vmatpush.bf16.msra.mxu0 %v4633
  %4759 = vmatpush.bf16.msra.mxu0 %v4632
  %4760 = vmatpush.bf16.msra.mxu0 %v4631
  %4761 = vmatpush.bf16.msra.mxu0 %v4630
  %4762 = vmatpush.bf16.msra.mxu0 %v4629
  %4763 = vmatpush.bf16.msra.mxu0 %v4628
  %4764 = vmatmul.bf16.gmra.mxu0 %v4340
  %v4765 = vpop.f32.mrf.mxu0
  %v4766 = vadd.f32 %v4275, %v4765
  %v4767 = vpop.f32.mrf.mxu0
  %v4768 = vadd.f32 %v4280, %v4767
  %4769 = vmatmul.bf16.gmra.mxu0 %v4348
  %v4770 = vpop.f32.mrf.mxu0
  %v4771 = vadd.f32 %v4285, %v4770
  %v4772 = vpop.f32.mrf.mxu0
  %v4773 = vadd.f32 %v4290, %v4772
  %4774 = vdwg.mxu0
  %4775 = vmatpush.bf16.msra.mxu0 %v4643
  %4776 = vmatpush.bf16.msra.mxu0 %v4642
  %4777 = vmatpush.bf16.msra.mxu0 %v4641
  %4778 = vmatpush.bf16.msra.mxu0 %v4640
  %4779 = vmatpush.bf16.msra.mxu0 %v4639
  %4780 = vmatpush.bf16.msra.mxu0 %v4638
  %4781 = vmatpush.bf16.msra.mxu0 %v4637
  %4782 = vmatpush.bf16.msra.mxu0 %v4636
  %4783 = vmatmul.bf16.gmra.mxu0 %v4341
  %v4784 = vpop.f32.mrf.mxu0
  %v4785 = vadd.f32 %v4766, %v4784
  %v4786 = vpop.f32.mrf.mxu0
  %v4787 = vadd.f32 %v4768, %v4786
  %4788 = vmatmul.bf16.gmra.mxu0 %v4349
  %v4789 = vpop.f32.mrf.mxu0
  %v4790 = vadd.f32 %v4771, %v4789
  %v4791 = vpop.f32.mrf.mxu0
  %v4792 = vadd.f32 %v4773, %v4791
  %4793 = vdwg.mxu0
  %4794 = vmatpush.bf16.msra.mxu0 %v4651
  %4795 = vmatpush.bf16.msra.mxu0 %v4650
  %4796 = vmatpush.bf16.msra.mxu0 %v4649
  %4797 = vmatpush.bf16.msra.mxu0 %v4648
  %4798 = vmatpush.bf16.msra.mxu0 %v4647
  %4799 = vmatpush.bf16.msra.mxu0 %v4646
  %4800 = vmatpush.bf16.msra.mxu0 %v4645
  %4801 = vmatpush.bf16.msra.mxu0 %v4644
  %4802 = vmatmul.bf16.gmra.mxu0 %v4342
  %v4803 = vpop.f32.mrf.mxu0
  %v4804 = vadd.f32 %v4785, %v4803
  %v4805 = vpop.f32.mrf.mxu0
  %v4806 = vadd.f32 %v4787, %v4805
  %4807 = vmatmul.bf16.gmra.mxu0 %v4350
  %v4808 = vpop.f32.mrf.mxu0
  %v4809 = vadd.f32 %v4790, %v4808
  %v4810 = vpop.f32.mrf.mxu0
  %v4811 = vadd.f32 %v4792, %v4810
  %4812 = vdwg.mxu0
  %4813 = vmatpush.bf16.msra.mxu0 %v4659
  %4814 = vmatpush.bf16.msra.mxu0 %v4658
  %4815 = vmatpush.bf16.msra.mxu0 %v4657
  %4816 = vmatpush.bf16.msra.mxu0 %v4656
  %4817 = vmatpush.bf16.msra.mxu0 %v4655
  %4818 = vmatpush.bf16.msra.mxu0 %v4654
  %4819 = vmatpush.bf16.msra.mxu0 %v4653
  %4820 = vmatpush.bf16.msra.mxu0 %v4652
  %4821 = vmatmul.bf16.gmra.mxu0 %v4343
  %v4822 = vpop.f32.mrf.mxu0
  %v4823 = vadd.f32 %v4804, %v4822
  %v4824 = vpop.f32.mrf.mxu0
  %v4825 = vadd.f32 %v4806, %v4824
  %4826 = vmatmul.bf16.gmra.mxu0 %v4351
  %v4827 = vpop.f32.mrf.mxu0
  %v4828 = vadd.f32 %v4809, %v4827
  %v4829 = vpop.f32.mrf.mxu0
  %v4830 = vadd.f32 %v4811, %v4829
  %4831 = vdwg.mxu0
  %4832 = vmatpush.bf16.msra.mxu0 %v4667
  %4833 = vmatpush.bf16.msra.mxu0 %v4666
  %4834 = vmatpush.bf16.msra.mxu0 %v4665
  %4835 = vmatpush.bf16.msra.mxu0 %v4664
  %4836 = vmatpush.bf16.msra.mxu0 %v4663
  %4837 = vmatpush.bf16.msra.mxu0 %v4662
  %4838 = vmatpush.bf16.msra.mxu0 %v4661
  %4839 = vmatpush.bf16.msra.mxu0 %v4660
  %4840 = vmatmul.bf16.gmra.mxu0 %v4344
  %v4841 = vpop.f32.mrf.mxu0
  %v4842 = vadd.f32 %v4823, %v4841
  %v4843 = vpop.f32.mrf.mxu0
  %v4844 = vadd.f32 %v4825, %v4843
  %4845 = vmatmul.bf16.gmra.mxu0 %v4352
  %v4846 = vpop.f32.mrf.mxu0
  %v4847 = vadd.f32 %v4828, %v4846
  %v4848 = vpop.f32.mrf.mxu0
  %v4849 = vadd.f32 %v4830, %v4848
  %4850 = vdwg.mxu0
  %4851 = vmatpush.bf16.msra.mxu0 %v4675
  %4852 = vmatpush.bf16.msra.mxu0 %v4674
  %4853 = vmatpush.bf16.msra.mxu0 %v4673
  %4854 = vmatpush.bf16.msra.mxu0 %v4672
  %4855 = vmatpush.bf16.msra.mxu0 %v4671
  %4856 = vmatpush.bf16.msra.mxu0 %v4670
  %4857 = vmatpush.bf16.msra.mxu0 %v4669
  %4858 = vmatpush.bf16.msra.mxu0 %v4668
  %4859 = vmatmul.bf16.gmra.mxu0 %v4345
  %v4860 = vpop.f32.mrf.mxu0
  %v4861 = vadd.f32 %v4842, %v4860
  %v4862 = vpop.f32.mrf.mxu0
  %v4863 = vadd.f32 %v4844, %v4862
  %4864 = vmatmul.bf16.gmra.mxu0 %v4353
  %v4865 = vpop.f32.mrf.mxu0
  %v4866 = vadd.f32 %v4847, %v4865
  %v4867 = vpop.f32.mrf.mxu0
  %v4868 = vadd.f32 %v4849, %v4867
  %4869 = vdwg.mxu0
  %4870 = vmatpush.bf16.msra.mxu0 %v4683
  %4871 = vmatpush.bf16.msra.mxu0 %v4682
  %4872 = vmatpush.bf16.msra.mxu0 %v4681
  %4873 = vmatpush.bf16.msra.mxu0 %v4680
  %4874 = vmatpush.bf16.msra.mxu0 %v4679
  %4875 = vmatpush.bf16.msra.mxu0 %v4678
  %4876 = vmatpush.bf16.msra.mxu0 %v4677
  %4877 = vmatpush.bf16.msra.mxu0 %v4676
  %4878 = vmatmul.bf16.gmra.mxu0 %v4346
  %v4879 = vpop.f32.mrf.mxu0
  %v4880 = vadd.f32 %v4861, %v4879
  %v4881 = vpop.f32.mrf.mxu0
  %v4882 = vadd.f32 %v4863, %v4881
  %4883 = vmatmul.bf16.gmra.mxu0 %v4354
  %v4884 = vpop.f32.mrf.mxu0
  %v4885 = vadd.f32 %v4866, %v4884
  %v4886 = vpop.f32.mrf.mxu0
  %v4887 = vadd.f32 %v4868, %v4886
  %4888 = vdwg.mxu0
  %4889 = vmatpush.bf16.msra.mxu0 %v4691
  %4890 = vmatpush.bf16.msra.mxu0 %v4690
  %4891 = vmatpush.bf16.msra.mxu0 %v4689
  %4892 = vmatpush.bf16.msra.mxu0 %v4688
  %4893 = vmatpush.bf16.msra.mxu0 %v4687
  %4894 = vmatpush.bf16.msra.mxu0 %v4686
  %4895 = vmatpush.bf16.msra.mxu0 %v4685
  %4896 = vmatpush.bf16.msra.mxu0 %v4684
  %4897 = vmatmul.bf16.gmra.mxu0 %v4347
  %v4898 = vpop.f32.mrf.mxu0
  %v4899 = vadd.f32 %v4880, %v4898
  %v4900 = vpop.f32.mrf.mxu0
  %v4901 = vadd.f32 %v4882, %v4900
  %4902 = vmatmul.bf16.gmra.mxu0 %v4355
  %v4903 = vpop.f32.mrf.mxu0
  %v4904 = vadd.f32 %v4885, %v4903
  %v4905 = vpop.f32.mrf.mxu0
  %v4906 = vadd.f32 %v4887, %v4905
  %4907 = vdwg.mxu0
  %vm4908 = vcmask 64512
  %4909 = vst.msk [vmem:[%s7] sm:$0xff] %vm4908, %v4899
  %4910 = vst.msk [vmem:[%s7 + $0x8] sm:$0xff] %vm4908, %v4901
  %4911 = vst.msk [vmem:[%s7 + $0x10] sm:$0xff] %vm4908, %v4904
  %4912 = vst.msk [vmem:[%s7 + $0x18] sm:$0xff] %vm4908, %v4906
  // Predicated region
  $region30: #{tpu_custom_call.1} parent=0 // pred_check
    _
  $region31: #{tpu_custom_call.1} parent=0 // pred_check_branch
    %4914 = sbr.rel (0) target = $region33
  $region32: #{tpu_custom_call.1} parent=0 // pred_region
    _
  $region33: #{tpu_custom_call.1} parent=0 // pred_fallthru
    _
  // Predicated region
  $region34: #{tpu_custom_call.1} parent=0 // pred_check
    _
  $region35: #{tpu_custom_call.1} parent=0 // pred_check_branch
    %4916 = sbr.rel (0) target = $region37
  $region36: #{tpu_custom_call.1} parent=0 // pred_region
    _
  $region37: #{tpu_custom_call.1} parent=0 // pred_fallthru
    _

</llo_original>
